<compile_context>
chip_gen: v5e
topology: v5e:2x2
jax: 0.10.0
libtpu: 0.0.40
codegen_flags: <defaults>
</compile_context>

<pallas_src>
import jax
import jax.numpy as jnp
from jax.experimental import pallas as pl
from jax.experimental.pallas import tpu as pltpu

# ---- module hyper-parameters (fixed by the PyTorch module) -----------------
CHANNELS = 1
IMG_SIZE = 28
IMG_SHAPE = (CHANNELS, IMG_SIZE, IMG_SIZE)
IMG_FLAT = CHANNELS * IMG_SIZE * IMG_SIZE           # 784
IMG_FLAT_PAD = 896                                  # 7 * 128  (lane-dense head)
LATENT_DIM = 100
N_CLASSES = 10
IN_FEAT = LATENT_DIM + N_CLASSES                    # 110
IN_FEAT_PAD = 128                                   # zero-padded K for layer 1
BN_EPS = 0.8                                        # nn.BatchNorm1d(out_feat, 0.8)
LEAKY_SLOPE = 0.2


def _leaky_relu(h):
    return jnp.where(h > 0, h, LEAKY_SLOPE * h)


def _bn_leaky(h, gamma, beta):
    """Training-mode BatchNorm1d (biased batch stats) with fused affine,
    followed by LeakyReLU(0.2). All math in f32; rsqrt goes to the EUP slot."""
    mu = jnp.mean(h, axis=0, keepdims=True)
    var = jnp.maximum(jnp.mean(h * h, axis=0, keepdims=True) - mu * mu, 0.0)
    scale = gamma * jax.lax.rsqrt(var + BN_EPS)        # (1, F)
    shift = beta - mu * scale                          # (1, F)
    return _leaky_relu(h * scale + shift)              # 2 VPU ops/elem + select


def generator_kernel(x_ref,
                     w1_ref, b1_ref,
                     w2_ref, g2_ref, be2_ref,
                     w3_ref, g3_ref, be3_ref,
                     w4_ref, g4_ref, be4_ref,
                     w5_ref, b5_ref,
                     out_ref):
    # Inputs feeding the MXU are bf16; accumulation + elementwise are f32.
    x = x_ref[...]                                                     # (B, 128) bf16

    # block 1: Linear(110 -> 128) (K zero-padded to 128), bias, LeakyReLU (no BN)
    h1 = jnp.dot(x, w1_ref[...], preferred_element_type=jnp.float32) + b1_ref[...]
    h1 = _leaky_relu(h1)

    # block 2: Linear(128 -> 256), BN(eps=0.8), LeakyReLU   (bias dropped: BN cancels it)
    h2 = jnp.dot(h1.astype(jnp.bfloat16), w2_ref[...],
                 preferred_element_type=jnp.float32)
    h2 = _bn_leaky(h2, g2_ref[...], be2_ref[...])

    # block 3: Linear(256 -> 512), BN, LeakyReLU
    h3 = jnp.dot(h2.astype(jnp.bfloat16), w3_ref[...],
                 preferred_element_type=jnp.float32)
    h3 = _bn_leaky(h3, g3_ref[...], be3_ref[...])

    # block 4: Linear(512 -> 1024), BN, LeakyReLU
    h4 = jnp.dot(h3.astype(jnp.bfloat16), w4_ref[...],
                 preferred_element_type=jnp.float32)
    h4 = _bn_leaky(h4, g4_ref[...], be4_ref[...])

    # head: Linear(1024 -> 784), padded to 896 output lanes, bias, Tanh
    out = jnp.dot(h4.astype(jnp.bfloat16), w5_ref[...],
                  preferred_element_type=jnp.float32)
    out_ref[...] = jnp.tanh(out + b5_ref[...])


def init_params(key):
    """Deterministic synthetic parameters (shapes match the PyTorch module).

    Linear weights are stored (in_feat, out_feat) so the kernel computes x @ W.
    """
    dims = [IN_FEAT, 128, 256, 512, 1024, IMG_FLAT]
    keys = jax.random.split(key, 16)
    p = {}
    p["emb"] = jax.random.normal(keys[0], (N_CLASSES, N_CLASSES), jnp.float32)
    ki = 1
    for li in range(5):
        fin, fout = dims[li], dims[li + 1]
        p[f"w{li+1}"] = (jax.random.normal(keys[ki], (fin, fout), jnp.float32)
                         * (1.0 / jnp.sqrt(jnp.float32(fin))))
        p[f"b{li+1}"] = (jax.random.normal(keys[ki + 1], (1, fout), jnp.float32)
                         * 0.01)
        ki += 2
    # BatchNorm affine params for blocks 2..4 (not all-ones so the scale/shift
    # path is exercised).
    for li, fout in ((2, 256), (3, 512), (4, 1024)):
        p[f"g{li}"] = 1.0 + 0.1 * jax.random.normal(keys[ki], (1, fout), jnp.float32)
        p[f"be{li}"] = 0.05 * jax.random.normal(keys[ki], (1, fout), jnp.float32)
        ki += 1
    return p


def prepare_kernel_params(p):
    """One-time weight prep: zero-pad ragged dims to lane multiples and cast
    the matmul weights to bf16 (accumulation stays f32 inside the kernel).
    b2..b4 are intentionally not passed: bias-before-training-BN is a no-op."""
    w1 = jnp.zeros((IN_FEAT_PAD, 128), jnp.float32).at[:IN_FEAT, :].set(p["w1"])
    w5 = jnp.zeros((1024, IMG_FLAT_PAD), jnp.float32).at[:, :IMG_FLAT].set(p["w5"])
    b5 = jnp.zeros((1, IMG_FLAT_PAD), jnp.float32).at[:, :IMG_FLAT].set(p["b5"])
    return (
        w1.astype(jnp.bfloat16), p["b1"],
        p["w2"].astype(jnp.bfloat16), p["g2"], p["be2"],
        p["w3"].astype(jnp.bfloat16), p["g3"], p["be3"],
        p["w4"].astype(jnp.bfloat16), p["g4"], p["be4"],
        w5.astype(jnp.bfloat16), b5,
    )


def generator_forward(noise, labels, params):
    """noise: (B, 100) f32, labels: (B,) int32 -> (B, 1, 28, 28) f32."""
    B = noise.shape[0]
    kernel_params = prepare_kernel_params(params)

    # glue: embedding lookup + concat (torch.cat((emb(labels), noise), -1)),
    # zero-padded K 110 -> 128, cast to bf16 for the MXU.
    gen_input = jnp.concatenate(
        [jnp.take(params["emb"], labels, axis=0),
         noise,
         jnp.zeros((B, IN_FEAT_PAD - IN_FEAT), jnp.float32)],
        axis=-1).astype(jnp.bfloat16)                                  # (B, 128)

    vmem = pl.BlockSpec(memory_space=pltpu.MemorySpace.VMEM)
    n_in = 1 + len(kernel_params)
    img_pad = pl.pallas_call(
        generator_kernel,
        out_shape=jax.ShapeDtypeStruct((B, IMG_FLAT_PAD), jnp.float32),
        in_specs=[vmem] * n_in,
        out_specs=vmem,
        compiler_params=pltpu.CompilerParams(vmem_limit_bytes=32 << 20),
    )(gen_input, *kernel_params)

    # slice away the lane padding and reshape to NCHW like img.view(B, *img_shape)
    return img_pad[:, :IMG_FLAT].reshape(B, *IMG_SHAPE)


if __name__ == "__main__":
    key = jax.random.PRNGKey(0)
    k_param, k_noise, k_label = jax.random.split(key, 3)

    B = 8  # small batch (>1 so training-mode BatchNorm statistics are well defined)
    params = init_params(k_param)
    noise = jax.random.normal(k_noise, (B, LATENT_DIM), jnp.float32)
    labels = jax.random.randint(k_label, (B,), 0, N_CLASSES, jnp.int32)

    img = generator_forward(noise, labels, params)
    jax.block_until_ready(img)

    assert img.shape == (B, CHANNELS, IMG_SIZE, IMG_SIZE)
    assert img.dtype == jnp.float32
    assert bool(jnp.all(jnp.isfinite(img)))
    assert bool(jnp.all(jnp.abs(img) <= 1.0))  # tanh output range
    print("KERNEL_OK")
</pallas_src>

<mosaic_0001>
module attributes {stable_mosaic.version = 11 : i64} {
  func.func @generator_kernel(%arg0: memref<8x128xbf16, #tpu.memory_space<vmem>>, %arg1: memref<128x128xbf16, #tpu.memory_space<vmem>>, %arg2: memref<1x128xf32, #tpu.memory_space<vmem>>, %arg3: memref<128x256xbf16, #tpu.memory_space<vmem>>, %arg4: memref<1x256xf32, #tpu.memory_space<vmem>>, %arg5: memref<1x256xf32, #tpu.memory_space<vmem>>, %arg6: memref<256x512xbf16, #tpu.memory_space<vmem>>, %arg7: memref<1x512xf32, #tpu.memory_space<vmem>>, %arg8: memref<1x512xf32, #tpu.memory_space<vmem>>, %arg9: memref<512x1024xbf16, #tpu.memory_space<vmem>>, %arg10: memref<1x1024xf32, #tpu.memory_space<vmem>>, %arg11: memref<1x1024xf32, #tpu.memory_space<vmem>>, %arg12: memref<1024x896xbf16, #tpu.memory_space<vmem>>, %arg13: memref<1x896xf32, #tpu.memory_space<vmem>>, %arg14: memref<8x896xf32, #tpu.memory_space<vmem>>) attributes {dimension_semantics = [], scalar_prefetch = 0 : i64, scratch_operands = 0 : i64, tpu.core_type = #tpu.core_type<tc>} {
    %c0 = arith.constant 0 : index
    %c0_0 = arith.constant 0 : index
    %0 = vector.load %arg0[%c0, %c0_0] : memref<8x128xbf16, #tpu.memory_space<vmem>>, vector<8x128xbf16>
    %c0_1 = arith.constant 0 : index
    %c0_2 = arith.constant 0 : index
    %1 = vector.load %arg1[%c0_1, %c0_2] : memref<128x128xbf16, #tpu.memory_space<vmem>>, vector<128x128xbf16>
    %cst = arith.constant dense<0.000000e+00> : vector<8x128xf32>
    %2 = tpu.matmul %0, %1, %cst {dimension_numbers = #tpu.dot_dimension_numbers<[1], [0], [0], [1], [0, 0, 1, 1], [], []>} : vector<8x128xbf16>, vector<128x128xbf16>, vector<8x128xf32> -> vector<8x128xf32>
    %c0_3 = arith.constant 0 : index
    %c0_4 = arith.constant 0 : index
    %3 = vector.load %arg2[%c0_3, %c0_4] : memref<1x128xf32, #tpu.memory_space<vmem>>, vector<1x128xf32>
    %4 = vector.broadcast %3 : vector<1x128xf32> to vector<8x128xf32>
    %5 = arith.addf %2, %4 : vector<8x128xf32>
    %cst_5 = arith.constant 0.000000e+00 : f32
    %6 = vector.broadcast %cst_5 : f32 to vector<8x128xf32>
    %7 = arith.cmpf ogt, %5, %6 : vector<8x128xf32>
    %cst_6 = arith.constant 2.000000e-01 : f32
    %8 = vector.broadcast %cst_6 : f32 to vector<8x128xf32>
    %9 = arith.mulf %8, %5 : vector<8x128xf32>
    %10 = arith.select %7, %5, %9 : vector<8x128xi1>, vector<8x128xf32>
    %11 = arith.truncf %10 : vector<8x128xf32> to vector<8x128xbf16>
    %c0_7 = arith.constant 0 : index
    %c0_8 = arith.constant 0 : index
    %12 = vector.load %arg3[%c0_7, %c0_8] : memref<128x256xbf16, #tpu.memory_space<vmem>>, vector<128x256xbf16>
    %cst_9 = arith.constant dense<0.000000e+00> : vector<8x256xf32>
    %13 = tpu.matmul %11, %12, %cst_9 {dimension_numbers = #tpu.dot_dimension_numbers<[1], [0], [0], [1], [0, 0, 1, 1], [], []>} : vector<8x128xbf16>, vector<128x256xbf16>, vector<8x256xf32> -> vector<8x256xf32>
    %c0_10 = arith.constant 0 : index
    %c0_11 = arith.constant 0 : index
    %14 = vector.load %arg4[%c0_10, %c0_11] : memref<1x256xf32, #tpu.memory_space<vmem>>, vector<1x256xf32>
    %c0_12 = arith.constant 0 : index
    %c0_13 = arith.constant 0 : index
    %15 = vector.load %arg5[%c0_12, %c0_13] : memref<1x256xf32, #tpu.memory_space<vmem>>, vector<1x256xf32>
    %cst_14 = arith.constant dense<0.000000e+00> : vector<256xf32>
    %16 = vector.multi_reduction <add>, %13, %cst_14 [0] : vector<8x256xf32> to vector<256xf32>
    %17 = vector.shape_cast %16 : vector<256xf32> to vector<1x256xf32>
    %cst_15 = arith.constant 8.000000e+00 : f32
    %18 = vector.broadcast %cst_15 : f32 to vector<1x256xf32>
    %19 = arith.divf %17, %18 : vector<1x256xf32>
    %20 = arith.mulf %13, %13 : vector<8x256xf32>
    %cst_16 = arith.constant dense<0.000000e+00> : vector<256xf32>
    %21 = vector.multi_reduction <add>, %20, %cst_16 [0] : vector<8x256xf32> to vector<256xf32>
    %22 = vector.shape_cast %21 : vector<256xf32> to vector<1x256xf32>
    %cst_17 = arith.constant 8.000000e+00 : f32
    %23 = vector.broadcast %cst_17 : f32 to vector<1x256xf32>
    %24 = arith.divf %22, %23 : vector<1x256xf32>
    %25 = arith.mulf %19, %19 : vector<1x256xf32>
    %26 = arith.subf %24, %25 : vector<1x256xf32>
    %cst_18 = arith.constant 0.000000e+00 : f32
    %27 = vector.broadcast %cst_18 : f32 to vector<1x256xf32>
    %28 = arith.maximumf %26, %27 : vector<1x256xf32>
    %cst_19 = arith.constant 8.000000e-01 : f32
    %29 = vector.broadcast %cst_19 : f32 to vector<1x256xf32>
    %30 = arith.addf %28, %29 : vector<1x256xf32>
    %31 = math.rsqrt %30 : vector<1x256xf32>
    %32 = arith.mulf %14, %31 : vector<1x256xf32>
    %33 = arith.mulf %19, %32 : vector<1x256xf32>
    %34 = arith.subf %15, %33 : vector<1x256xf32>
    %35 = vector.broadcast %32 : vector<1x256xf32> to vector<8x256xf32>
    %36 = arith.mulf %13, %35 : vector<8x256xf32>
    %37 = vector.broadcast %34 : vector<1x256xf32> to vector<8x256xf32>
    %38 = arith.addf %36, %37 : vector<8x256xf32>
    %cst_20 = arith.constant 0.000000e+00 : f32
    %39 = vector.broadcast %cst_20 : f32 to vector<8x256xf32>
    %40 = arith.cmpf ogt, %38, %39 : vector<8x256xf32>
    %cst_21 = arith.constant 2.000000e-01 : f32
    %41 = vector.broadcast %cst_21 : f32 to vector<8x256xf32>
    %42 = arith.mulf %41, %38 : vector<8x256xf32>
    %43 = arith.select %40, %38, %42 : vector<8x256xi1>, vector<8x256xf32>
    %44 = arith.truncf %43 : vector<8x256xf32> to vector<8x256xbf16>
    %c0_22 = arith.constant 0 : index
    %c0_23 = arith.constant 0 : index
    %45 = vector.load %arg6[%c0_22, %c0_23] : memref<256x512xbf16, #tpu.memory_space<vmem>>, vector<256x512xbf16>
    %cst_24 = arith.constant dense<0.000000e+00> : vector<8x512xf32>
    %46 = tpu.matmul %44, %45, %cst_24 {dimension_numbers = #tpu.dot_dimension_numbers<[1], [0], [0], [1], [0, 0, 1, 1], [], []>} : vector<8x256xbf16>, vector<256x512xbf16>, vector<8x512xf32> -> vector<8x512xf32>
    %c0_25 = arith.constant 0 : index
    %c0_26 = arith.constant 0 : index
    %47 = vector.load %arg7[%c0_25, %c0_26] : memref<1x512xf32, #tpu.memory_space<vmem>>, vector<1x512xf32>
    %c0_27 = arith.constant 0 : index
    %c0_28 = arith.constant 0 : index
    %48 = vector.load %arg8[%c0_27, %c0_28] : memref<1x512xf32, #tpu.memory_space<vmem>>, vector<1x512xf32>
    %cst_29 = arith.constant dense<0.000000e+00> : vector<512xf32>
    %49 = vector.multi_reduction <add>, %46, %cst_29 [0] : vector<8x512xf32> to vector<512xf32>
    %50 = vector.shape_cast %49 : vector<512xf32> to vector<1x512xf32>
    %cst_30 = arith.constant 8.000000e+00 : f32
    %51 = vector.broadcast %cst_30 : f32 to vector<1x512xf32>
    %52 = arith.divf %50, %51 : vector<1x512xf32>
    %53 = arith.mulf %46, %46 : vector<8x512xf32>
    %cst_31 = arith.constant dense<0.000000e+00> : vector<512xf32>
    %54 = vector.multi_reduction <add>, %53, %cst_31 [0] : vector<8x512xf32> to vector<512xf32>
    %55 = vector.shape_cast %54 : vector<512xf32> to vector<1x512xf32>
    %cst_32 = arith.constant 8.000000e+00 : f32
    %56 = vector.broadcast %cst_32 : f32 to vector<1x512xf32>
    %57 = arith.divf %55, %56 : vector<1x512xf32>
    %58 = arith.mulf %52, %52 : vector<1x512xf32>
    %59 = arith.subf %57, %58 : vector<1x512xf32>
    %cst_33 = arith.constant 0.000000e+00 : f32
    %60 = vector.broadcast %cst_33 : f32 to vector<1x512xf32>
    %61 = arith.maximumf %59, %60 : vector<1x512xf32>
    %cst_34 = arith.constant 8.000000e-01 : f32
    %62 = vector.broadcast %cst_34 : f32 to vector<1x512xf32>
    %63 = arith.addf %61, %62 : vector<1x512xf32>
    %64 = math.rsqrt %63 : vector<1x512xf32>
    %65 = arith.mulf %47, %64 : vector<1x512xf32>
    %66 = arith.mulf %52, %65 : vector<1x512xf32>
    %67 = arith.subf %48, %66 : vector<1x512xf32>
    %68 = vector.broadcast %65 : vector<1x512xf32> to vector<8x512xf32>
    %69 = arith.mulf %46, %68 : vector<8x512xf32>
    %70 = vector.broadcast %67 : vector<1x512xf32> to vector<8x512xf32>
    %71 = arith.addf %69, %70 : vector<8x512xf32>
    %cst_35 = arith.constant 0.000000e+00 : f32
    %72 = vector.broadcast %cst_35 : f32 to vector<8x512xf32>
    %73 = arith.cmpf ogt, %71, %72 : vector<8x512xf32>
    %cst_36 = arith.constant 2.000000e-01 : f32
    %74 = vector.broadcast %cst_36 : f32 to vector<8x512xf32>
    %75 = arith.mulf %74, %71 : vector<8x512xf32>
    %76 = arith.select %73, %71, %75 : vector<8x512xi1>, vector<8x512xf32>
    %77 = arith.truncf %76 : vector<8x512xf32> to vector<8x512xbf16>
    %c0_37 = arith.constant 0 : index
    %c0_38 = arith.constant 0 : index
    %78 = vector.load %arg9[%c0_37, %c0_38] : memref<512x1024xbf16, #tpu.memory_space<vmem>>, vector<512x1024xbf16>
    %cst_39 = arith.constant dense<0.000000e+00> : vector<8x1024xf32>
    %79 = tpu.matmul %77, %78, %cst_39 {dimension_numbers = #tpu.dot_dimension_numbers<[1], [0], [0], [1], [0, 0, 1, 1], [], []>} : vector<8x512xbf16>, vector<512x1024xbf16>, vector<8x1024xf32> -> vector<8x1024xf32>
    %c0_40 = arith.constant 0 : index
    %c0_41 = arith.constant 0 : index
    %80 = vector.load %arg10[%c0_40, %c0_41] : memref<1x1024xf32, #tpu.memory_space<vmem>>, vector<1x1024xf32>
    %c0_42 = arith.constant 0 : index
    %c0_43 = arith.constant 0 : index
    %81 = vector.load %arg11[%c0_42, %c0_43] : memref<1x1024xf32, #tpu.memory_space<vmem>>, vector<1x1024xf32>
    %cst_44 = arith.constant dense<0.000000e+00> : vector<1024xf32>
    %82 = vector.multi_reduction <add>, %79, %cst_44 [0] : vector<8x1024xf32> to vector<1024xf32>
    %83 = vector.shape_cast %82 : vector<1024xf32> to vector<1x1024xf32>
    %cst_45 = arith.constant 8.000000e+00 : f32
    %84 = vector.broadcast %cst_45 : f32 to vector<1x1024xf32>
    %85 = arith.divf %83, %84 : vector<1x1024xf32>
    %86 = arith.mulf %79, %79 : vector<8x1024xf32>
    %cst_46 = arith.constant dense<0.000000e+00> : vector<1024xf32>
    %87 = vector.multi_reduction <add>, %86, %cst_46 [0] : vector<8x1024xf32> to vector<1024xf32>
    %88 = vector.shape_cast %87 : vector<1024xf32> to vector<1x1024xf32>
    %cst_47 = arith.constant 8.000000e+00 : f32
    %89 = vector.broadcast %cst_47 : f32 to vector<1x1024xf32>
    %90 = arith.divf %88, %89 : vector<1x1024xf32>
    %91 = arith.mulf %85, %85 : vector<1x1024xf32>
    %92 = arith.subf %90, %91 : vector<1x1024xf32>
    %cst_48 = arith.constant 0.000000e+00 : f32
    %93 = vector.broadcast %cst_48 : f32 to vector<1x1024xf32>
    %94 = arith.maximumf %92, %93 : vector<1x1024xf32>
    %cst_49 = arith.constant 8.000000e-01 : f32
    %95 = vector.broadcast %cst_49 : f32 to vector<1x1024xf32>
    %96 = arith.addf %94, %95 : vector<1x1024xf32>
    %97 = math.rsqrt %96 : vector<1x1024xf32>
    %98 = arith.mulf %80, %97 : vector<1x1024xf32>
    %99 = arith.mulf %85, %98 : vector<1x1024xf32>
    %100 = arith.subf %81, %99 : vector<1x1024xf32>
    %101 = vector.broadcast %98 : vector<1x1024xf32> to vector<8x1024xf32>
    %102 = arith.mulf %79, %101 : vector<8x1024xf32>
    %103 = vector.broadcast %100 : vector<1x1024xf32> to vector<8x1024xf32>
    %104 = arith.addf %102, %103 : vector<8x1024xf32>
    %cst_50 = arith.constant 0.000000e+00 : f32
    %105 = vector.broadcast %cst_50 : f32 to vector<8x1024xf32>
    %106 = arith.cmpf ogt, %104, %105 : vector<8x1024xf32>
    %cst_51 = arith.constant 2.000000e-01 : f32
    %107 = vector.broadcast %cst_51 : f32 to vector<8x1024xf32>
    %108 = arith.mulf %107, %104 : vector<8x1024xf32>
    %109 = arith.select %106, %104, %108 : vector<8x1024xi1>, vector<8x1024xf32>
    %110 = arith.truncf %109 : vector<8x1024xf32> to vector<8x1024xbf16>
    %c0_52 = arith.constant 0 : index
    %c0_53 = arith.constant 0 : index
    %111 = vector.load %arg12[%c0_52, %c0_53] : memref<1024x896xbf16, #tpu.memory_space<vmem>>, vector<1024x896xbf16>
    %cst_54 = arith.constant dense<0.000000e+00> : vector<8x896xf32>
    %112 = tpu.matmul %110, %111, %cst_54 {dimension_numbers = #tpu.dot_dimension_numbers<[1], [0], [0], [1], [0, 0, 1, 1], [], []>} : vector<8x1024xbf16>, vector<1024x896xbf16>, vector<8x896xf32> -> vector<8x896xf32>
    %c0_55 = arith.constant 0 : index
    %c0_56 = arith.constant 0 : index
    %113 = vector.load %arg13[%c0_55, %c0_56] : memref<1x896xf32, #tpu.memory_space<vmem>>, vector<1x896xf32>
    %114 = vector.broadcast %113 : vector<1x896xf32> to vector<8x896xf32>
    %115 = arith.addf %112, %114 : vector<8x896xf32>
    %116 = math.tanh %115 : vector<8x896xf32>
    %c0_57 = arith.constant 0 : index
    %c0_58 = arith.constant 0 : index
    %117 = vector.load %arg14[%c0_57, %c0_58] : memref<8x896xf32, #tpu.memory_space<vmem>>, vector<8x896xf32>
    tpu.vector_store %arg14[%c0_57, %c0_58], %116 {strides = array<i32>} : memref<8x896xf32, #tpu.memory_space<vmem>>, vector<8x896xf32>,
    return
  }
}

</mosaic_0001>

<llo_original>
// kernel: tpu_custom_call.1
$region0: #{tpu_custom_call.1}
  #allocation0 [shape = 'u32[]', space=smem, size = 0x4, offset = 0x4, fixed_abs, tag = 'smem constant byte address 0x4 - core index']
  #allocation1 [shape = 'u32[72,128]{1,0:T(1,128)}', space=vmem, size = 0x9000, scoped, tag = 'internal scratch']
  %s0 = inlined_call_operand.hbm [shape: bf16[8,128], index: 0, kind: input, shape index: {}]
  %s1 = inlined_call_operand.hbm [shape: bf16[128,128], index: 1, kind: input, shape index: {}]
  %s2 = inlined_call_operand.hbm [shape: f32[1,128], index: 2, kind: input, shape index: {}]
  %s3 = inlined_call_operand.hbm [shape: bf16[128,256], index: 3, kind: input, shape index: {}]
  %s4 = inlined_call_operand.hbm [shape: f32[1,256], index: 4, kind: input, shape index: {}]
  %s5 = inlined_call_operand.hbm [shape: f32[1,256], index: 5, kind: input, shape index: {}]
  %s6 = inlined_call_operand.hbm [shape: bf16[256,512], index: 6, kind: input, shape index: {}]
  %s7 = inlined_call_operand.hbm [shape: f32[1,512], index: 7, kind: input, shape index: {}]
  %s8 = inlined_call_operand.hbm [shape: f32[1,512], index: 8, kind: input, shape index: {}]
  %s9 = inlined_call_operand.hbm [shape: bf16[512,1024], index: 9, kind: input, shape index: {}]
  %s10 = inlined_call_operand.hbm [shape: f32[1,1024], index: 10, kind: input, shape index: {}]
  %s11 = inlined_call_operand.hbm [shape: f32[1,1024], index: 11, kind: input, shape index: {}]
  %s12 = inlined_call_operand.hbm [shape: bf16[1024,896], index: 12, kind: input, shape index: {}]
  %s13 = inlined_call_operand.hbm [shape: f32[1,896], index: 13, kind: input, shape index: {}]
  %s14 = inlined_call_operand.hbm [shape: f32[8,896], index: 14, kind: output, shape index: {}]
  %s15 = sld [smem:[#allocation0]]
  $region122: #{tpu_custom_call.1} parent=0
    _
  %s17 = ssub.s32 1, %s15
  %s18 = scalar_select 0, %s17, %s15
  $region1: #{tpu_custom_call.1} parent=0
    #allocation2 [shape = 'u8[2048]{0}', space=vmem, size = 0x800, scoped, tag = 'input window, operand 0, single buffered']
    #allocation3 [shape = 's32[1]{0}', space=sflag, size = 0x4, scoped, tag = 'scoped memory for tpu_custom_call.1']
    #allocation4 [shape = 's32[1]{0}', space=sflag, size = 0x4, scoped, tag = 'scoped memory for tpu_custom_call.1']
    #allocation5 [shape = 'u8[32768]{0}', space=vmem, size = 0x8000, scoped, tag = 'input window, operand 1, single buffered']
    #allocation6 [shape = 's32[1]{0}', space=sflag, size = 0x4, scoped, tag = 'scoped memory for tpu_custom_call.1']
    #allocation7 [shape = 'u8[512]{0}', space=vmem, size = 0x400, scoped, tag = 'input window, operand 2, single buffered']
    #allocation8 [shape = 'u8[65536]{0}', space=vmem, size = 0x10000, scoped, tag = 'input window, operand 3, single buffered']
    #allocation9 [shape = 's32[1]{0}', space=sflag, size = 0x4, scoped, tag = 'scoped memory for tpu_custom_call.1']
    #allocation10 [shape = 'u8[1024]{0}', space=vmem, size = 0x400, scoped, tag = 'input window, operand 4, single buffered']
    #allocation11 [shape = 'u8[1024]{0}', space=vmem, size = 0x400, scoped, tag = 'input window, operand 5, single buffered']
    #allocation12 [shape = 's32[1]{0}', space=sflag, size = 0x4, scoped, tag = 'scoped memory for tpu_custom_call.1']
    #allocation13 [shape = 'u8[262144]{0}', space=vmem, size = 0x40000, scoped, tag = 'input window, operand 6, single buffered']
    #allocation14 [shape = 'u8[2048]{0}', space=vmem, size = 0x800, scoped, tag = 'input window, operand 7, single buffered']
    #allocation15 [shape = 's32[1]{0}', space=sflag, size = 0x4, scoped, tag = 'scoped memory for tpu_custom_call.1']
    #allocation16 [shape = 'u8[2048]{0}', space=vmem, size = 0x800, scoped, tag = 'input window, operand 8, single buffered']
    #allocation17 [shape = 'u8[1048576]{0}', space=vmem, size = 0x100000, scoped, tag = 'input window, operand 9, single buffered']
    #allocation18 [shape = 's32[1]{0}', space=sflag, size = 0x4, scoped, tag = 'scoped memory for tpu_custom_call.1']
    #allocation19 [shape = 'u8[4096]{0}', space=vmem, size = 0x1000, scoped, tag = 'input window, operand 10, single buffered']
    #allocation20 [shape = 'u8[4096]{0}', space=vmem, size = 0x1000, scoped, tag = 'input window, operand 11, single buffered']
    #allocation21 [shape = 's32[1]{0}', space=sflag, size = 0x4, scoped, tag = 'scoped memory for tpu_custom_call.1']
    #allocation22 [shape = 'u8[1835008]{0}', space=vmem, size = 0x1c0000, scoped, tag = 'input window, operand 12, single buffered']
    #allocation23 [shape = 'u8[3584]{0}', space=vmem, size = 0x1000, scoped, tag = 'input window, operand 13, single buffered']
    #allocation24 [shape = 's32[1]{0}', space=sflag, size = 0x4, scoped, tag = 'scoped memory for tpu_custom_call.1']
    #allocation25 [shape = 'u8[28672]{0}', space=vmem, size = 0x7000, scoped, tag = 'output window, operand 0, single buffered']
    %19 = vsyncpa [#allocation3], 0
    %20 = vsyncpa [#allocation6], 0
    %21 = vsyncpa [#allocation9], 0
    %22 = vsyncpa [#allocation12], 0
    %23 = vsyncpa [#allocation15], 0
    %24 = vsyncpa [#allocation18], 0
    %25 = vsyncpa [#allocation21], 0
    %26 = vsyncpa [#allocation24], 0
    %27 = vsyncpa [#allocation4], 0
    // Predicated region
    $region2: #{tpu_custom_call.1} parent=1 // pred_check
      _
    $region3: #{tpu_custom_call.1} parent=1 // pred_check_branch
      %29 = sbr.rel (0) target = $region5
    $region4: #{tpu_custom_call.1} parent=1 // pred_region
      %31 = vsyncadd [#allocation3], 0
      %s33 = sshll.u32 %s0, 4
      %s34 = int_to_ptr.hbm [resolvable:$true] %s33
      %s35 = sshll.u32 [#allocation2], 4
      %s36 = int_to_ptr.vmem [resolvable:$true] %s35
      %38 = dma.hbm_to_vmem [thread:$0]  %s34, 64, %s36, [#allocation3]
    $region5: #{tpu_custom_call.1} parent=1 // pred_fallthru
      _
    // Predicated region
    $region6: #{tpu_custom_call.1} parent=1 // pred_check
      _
    $region7: #{tpu_custom_call.1} parent=1 // pred_check_branch
      %40 = sbr.rel (0) target = $region9
    $region8: #{tpu_custom_call.1} parent=1 // pred_region
      %42 = vsyncadd [#allocation6], 0
      %s43 = sshll.u32 %s1, 4
      %s44 = int_to_ptr.hbm [resolvable:$true] %s43
      %s45 = sshll.u32 [#allocation5], 4
      %s46 = int_to_ptr.vmem [resolvable:$true] %s45
      %51 = dma.hbm_to_vmem [thread:$0]  %s44, 1024, %s46, [#allocation6], 64, 64, 4
    $region9: #{tpu_custom_call.1} parent=1 // pred_fallthru
      _
    // Predicated region
    $region10: #{tpu_custom_call.1} parent=1 // pred_check
      _
    $region11: #{tpu_custom_call.1} parent=1 // pred_check_branch
      %53 = sbr.rel (0) target = $region13
    $region12: #{tpu_custom_call.1} parent=1 // pred_region
      %55 = vsyncadd [#allocation6], 0
      %s57 = sshll.u32 %s2, 4
      %s58 = int_to_ptr.hbm [resolvable:$true] %s57
      %s59 = sshll.u32 [#allocation7], 4
      %s60 = int_to_ptr.vmem [resolvable:$true] %s59
      %62 = dma.hbm_to_vmem [thread:$0]  %s58, 16, %s60, [#allocation6]
    $region13: #{tpu_custom_call.1} parent=1 // pred_fallthru
      _
    // Predicated region
    $region14: #{tpu_custom_call.1} parent=1 // pred_check
      _
    $region15: #{tpu_custom_call.1} parent=1 // pred_check_branch
      %64 = sbr.rel (0) target = $region17
    $region16: #{tpu_custom_call.1} parent=1 // pred_region
      %66 = vsyncadd [#allocation9], 0
      %s67 = sshll.u32 %s3, 4
      %s68 = int_to_ptr.hbm [resolvable:$true] %s67
      %s69 = sshll.u32 [#allocation8], 4
      %s70 = int_to_ptr.vmem [resolvable:$true] %s69
      %75 = dma.hbm_to_vmem [thread:$0]  %s68, 2048, %s70, [#allocation9], 128, 128, 8
    $region17: #{tpu_custom_call.1} parent=1 // pred_fallthru
      _
    // Predicated region
    $region18: #{tpu_custom_call.1} parent=1 // pred_check
      _
    $region19: #{tpu_custom_call.1} parent=1 // pred_check_branch
      %77 = sbr.rel (0) target = $region21
    $region20: #{tpu_custom_call.1} parent=1 // pred_region
      %79 = vsyncadd [#allocation9], 0
      %s81 = sshll.u32 %s4, 4
      %s82 = int_to_ptr.hbm [resolvable:$true] %s81
      %s83 = sshll.u32 [#allocation10], 4
      %s84 = int_to_ptr.vmem [resolvable:$true] %s83
      %86 = dma.hbm_to_vmem [thread:$0]  %s82, 32, %s84, [#allocation9]
    $region21: #{tpu_custom_call.1} parent=1 // pred_fallthru
      _
    // Predicated region
    $region22: #{tpu_custom_call.1} parent=1 // pred_check
      _
    $region23: #{tpu_custom_call.1} parent=1 // pred_check_branch
      %88 = sbr.rel (0) target = $region25
    $region24: #{tpu_custom_call.1} parent=1 // pred_region
      %90 = vsyncadd [#allocation12], 0
      %s92 = sshll.u32 %s5, 4
      %s93 = int_to_ptr.hbm [resolvable:$true] %s92
      %s94 = sshll.u32 [#allocation11], 4
      %s95 = int_to_ptr.vmem [resolvable:$true] %s94
      %97 = dma.hbm_to_vmem [thread:$0]  %s93, 32, %s95, [#allocation12]
    $region25: #{tpu_custom_call.1} parent=1 // pred_fallthru
      _
    // Predicated region
    $region26: #{tpu_custom_call.1} parent=1 // pred_check
      _
    $region27: #{tpu_custom_call.1} parent=1 // pred_check_branch
      %99 = sbr.rel (0) target = $region29
    $region28: #{tpu_custom_call.1} parent=1 // pred_region
      %101 = vsyncadd [#allocation12], 0
      %s102 = sshll.u32 %s6, 4
      %s103 = int_to_ptr.hbm [resolvable:$true] %s102
      %s104 = sshll.u32 [#allocation13], 4
      %s105 = int_to_ptr.vmem [resolvable:$true] %s104
      %110 = dma.hbm_to_vmem [thread:$0]  %s103, 8192, %s105, [#allocation12], 256, 256, 16
    $region29: #{tpu_custom_call.1} parent=1 // pred_fallthru
      _
    // Predicated region
    $region30: #{tpu_custom_call.1} parent=1 // pred_check
      _
    $region31: #{tpu_custom_call.1} parent=1 // pred_check_branch
      %112 = sbr.rel (0) target = $region33
    $region32: #{tpu_custom_call.1} parent=1 // pred_region
      %114 = vsyncadd [#allocation15], 0
      %s116 = sshll.u32 %s7, 4
      %s117 = int_to_ptr.hbm [resolvable:$true] %s116
      %s118 = sshll.u32 [#allocation14], 4
      %s119 = int_to_ptr.vmem [resolvable:$true] %s118
      %121 = dma.hbm_to_vmem [thread:$0]  %s117, 64, %s119, [#allocation15]
    $region33: #{tpu_custom_call.1} parent=1 // pred_fallthru
      _
    // Predicated region
    $region34: #{tpu_custom_call.1} parent=1 // pred_check
      _
    $region35: #{tpu_custom_call.1} parent=1 // pred_check_branch
      %123 = sbr.rel (0) target = $region37
    $region36: #{tpu_custom_call.1} parent=1 // pred_region
      %125 = vsyncadd [#allocation15], 0
      %s127 = sshll.u32 %s8, 4
      %s128 = int_to_ptr.hbm [resolvable:$true] %s127
      %s129 = sshll.u32 [#allocation16], 4
      %s130 = int_to_ptr.vmem [resolvable:$true] %s129
      %132 = dma.hbm_to_vmem [thread:$0]  %s128, 64, %s130, [#allocation15]
    $region37: #{tpu_custom_call.1} parent=1 // pred_fallthru
      _
    // Predicated region
    $region38: #{tpu_custom_call.1} parent=1 // pred_check
      _
    $region39: #{tpu_custom_call.1} parent=1 // pred_check_branch
      %134 = sbr.rel (0) target = $region41
    $region40: #{tpu_custom_call.1} parent=1 // pred_region
      %136 = vsyncadd [#allocation18], 0
      %s137 = sshll.u32 %s9, 4
      %s138 = int_to_ptr.hbm [resolvable:$true] %s137
      %s139 = sshll.u32 [#allocation17], 4
      %s140 = int_to_ptr.vmem [resolvable:$true] %s139
      %145 = dma.hbm_to_vmem [thread:$0]  %s138, 32768, %s140, [#allocation18], 512, 512, 32
    $region41: #{tpu_custom_call.1} parent=1 // pred_fallthru
      _
    // Predicated region
    $region42: #{tpu_custom_call.1} parent=1 // pred_check
      _
    $region43: #{tpu_custom_call.1} parent=1 // pred_check_branch
      %147 = sbr.rel (0) target = $region45
    $region44: #{tpu_custom_call.1} parent=1 // pred_region
      %149 = vsyncadd [#allocation18], 0
      %s151 = sshll.u32 %s10, 4
      %s152 = int_to_ptr.hbm [resolvable:$true] %s151
      %s153 = sshll.u32 [#allocation19], 4
      %s154 = int_to_ptr.vmem [resolvable:$true] %s153
      %156 = dma.hbm_to_vmem [thread:$0]  %s152, 128, %s154, [#allocation18]
    $region45: #{tpu_custom_call.1} parent=1 // pred_fallthru
      _
    // Predicated region
    $region46: #{tpu_custom_call.1} parent=1 // pred_check
      _
    $region47: #{tpu_custom_call.1} parent=1 // pred_check_branch
      %158 = sbr.rel (0) target = $region49
    $region48: #{tpu_custom_call.1} parent=1 // pred_region
      %160 = vsyncadd [#allocation21], 0
      %s162 = sshll.u32 %s11, 4
      %s163 = int_to_ptr.hbm [resolvable:$true] %s162
      %s164 = sshll.u32 [#allocation20], 4
      %s165 = int_to_ptr.vmem [resolvable:$true] %s164
      %167 = dma.hbm_to_vmem [thread:$0]  %s163, 128, %s165, [#allocation21]
    $region49: #{tpu_custom_call.1} parent=1 // pred_fallthru
      _
    // Predicated region
    $region50: #{tpu_custom_call.1} parent=1 // pred_check
      _
    $region51: #{tpu_custom_call.1} parent=1 // pred_check_branch
      %169 = sbr.rel (0) target = $region53
    $region52: #{tpu_custom_call.1} parent=1 // pred_region
      %171 = vsyncadd [#allocation21], 0
      %s172 = sshll.u32 %s12, 4
      %s173 = int_to_ptr.hbm [resolvable:$true] %s172
      %s174 = sshll.u32 [#allocation22], 4
      %s175 = int_to_ptr.vmem [resolvable:$true] %s174
      %180 = dma.hbm_to_vmem [thread:$0]  %s173, 57344, %s175, [#allocation21], 448, 448, 28
    $region53: #{tpu_custom_call.1} parent=1 // pred_fallthru
      _
    // Predicated region
    $region54: #{tpu_custom_call.1} parent=1 // pred_check
      _
    $region55: #{tpu_custom_call.1} parent=1 // pred_check_branch
      %182 = sbr.rel (0) target = $region57
    $region56: #{tpu_custom_call.1} parent=1 // pred_region
      %184 = vsyncadd [#allocation24], 0
      %s186 = sshll.u32 %s13, 4
      %s187 = int_to_ptr.hbm [resolvable:$true] %s186
      %s188 = sshll.u32 [#allocation23], 4
      %s189 = int_to_ptr.vmem [resolvable:$true] %s188
      %191 = dma.hbm_to_vmem [thread:$0]  %s187, 112, %s189, [#allocation24]
    $region57: #{tpu_custom_call.1} parent=1 // pred_fallthru
      _
    // Predicated region
    $region58: #{tpu_custom_call.1} parent=1 // pred_check
      _
    $region59: #{tpu_custom_call.1} parent=1 // pred_check_branch
      %193 = sbr.rel (0) target = $region61
    $region60: #{tpu_custom_call.1} parent=1 // pred_region
      %195 = dma.done [#allocation3], 64
    $region61: #{tpu_custom_call.1} parent=1 // pred_fallthru
      _
    // Predicated region
    $region62: #{tpu_custom_call.1} parent=1 // pred_check
      _
    $region63: #{tpu_custom_call.1} parent=1 // pred_check_branch
      %197 = sbr.rel (0) target = $region65
    $region64: #{tpu_custom_call.1} parent=1 // pred_region
      %199 = dma.done [#allocation6], 1024
    $region65: #{tpu_custom_call.1} parent=1 // pred_fallthru
      _
    // Predicated region
    $region66: #{tpu_custom_call.1} parent=1 // pred_check
      _
    $region67: #{tpu_custom_call.1} parent=1 // pred_check_branch
      %201 = sbr.rel (0) target = $region69
    $region68: #{tpu_custom_call.1} parent=1 // pred_region
      %203 = dma.done [#allocation6], 16
    $region69: #{tpu_custom_call.1} parent=1 // pred_fallthru
      _
    // Predicated region
    $region70: #{tpu_custom_call.1} parent=1 // pred_check
      _
    $region71: #{tpu_custom_call.1} parent=1 // pred_check_branch
      %205 = sbr.rel (0) target = $region73
    $region72: #{tpu_custom_call.1} parent=1 // pred_region
      %207 = dma.done [#allocation9], 2048
    $region73: #{tpu_custom_call.1} parent=1 // pred_fallthru
      _
    // Predicated region
    $region74: #{tpu_custom_call.1} parent=1 // pred_check
      _
    $region75: #{tpu_custom_call.1} parent=1 // pred_check_branch
      %209 = sbr.rel (0) target = $region77
    $region76: #{tpu_custom_call.1} parent=1 // pred_region
      %211 = dma.done [#allocation9], 32
    $region77: #{tpu_custom_call.1} parent=1 // pred_fallthru
      _
    // Predicated region
    $region78: #{tpu_custom_call.1} parent=1 // pred_check
      _
    $region79: #{tpu_custom_call.1} parent=1 // pred_check_branch
      %213 = sbr.rel (0) target = $region81
    $region80: #{tpu_custom_call.1} parent=1 // pred_region
      %215 = dma.done [#allocation12], 32
    $region81: #{tpu_custom_call.1} parent=1 // pred_fallthru
      _
    // Predicated region
    $region82: #{tpu_custom_call.1} parent=1 // pred_check
      _
    $region83: #{tpu_custom_call.1} parent=1 // pred_check_branch
      %217 = sbr.rel (0) target = $region85
    $region84: #{tpu_custom_call.1} parent=1 // pred_region
      %219 = dma.done [#allocation12], 8192
    $region85: #{tpu_custom_call.1} parent=1 // pred_fallthru
      _
    // Predicated region
    $region86: #{tpu_custom_call.1} parent=1 // pred_check
      _
    $region87: #{tpu_custom_call.1} parent=1 // pred_check_branch
      %221 = sbr.rel (0) target = $region89
    $region88: #{tpu_custom_call.1} parent=1 // pred_region
      %223 = dma.done [#allocation15], 64
    $region89: #{tpu_custom_call.1} parent=1 // pred_fallthru
      _
    // Predicated region
    $region90: #{tpu_custom_call.1} parent=1 // pred_check
      _
    $region91: #{tpu_custom_call.1} parent=1 // pred_check_branch
      %225 = sbr.rel (0) target = $region93
    $region92: #{tpu_custom_call.1} parent=1 // pred_region
      %227 = dma.done [#allocation15], 64
    $region93: #{tpu_custom_call.1} parent=1 // pred_fallthru
      _
    // Predicated region
    $region94: #{tpu_custom_call.1} parent=1 // pred_check
      _
    $region95: #{tpu_custom_call.1} parent=1 // pred_check_branch
      %229 = sbr.rel (0) target = $region97
    $region96: #{tpu_custom_call.1} parent=1 // pred_region
      %231 = dma.done [#allocation18], 32768
    $region97: #{tpu_custom_call.1} parent=1 // pred_fallthru
      _
    // Predicated region
    $region98: #{tpu_custom_call.1} parent=1 // pred_check
      _
    $region99: #{tpu_custom_call.1} parent=1 // pred_check_branch
      %233 = sbr.rel (0) target = $region101
    $region100: #{tpu_custom_call.1} parent=1 // pred_region
      %235 = dma.done [#allocation18], 128
    $region101: #{tpu_custom_call.1} parent=1 // pred_fallthru
      _
    // Predicated region
    $region102: #{tpu_custom_call.1} parent=1 // pred_check
      _
    $region103: #{tpu_custom_call.1} parent=1 // pred_check_branch
      %237 = sbr.rel (0) target = $region105
    $region104: #{tpu_custom_call.1} parent=1 // pred_region
      %239 = dma.done [#allocation21], 128
    $region105: #{tpu_custom_call.1} parent=1 // pred_fallthru
      _
    // Predicated region
    $region106: #{tpu_custom_call.1} parent=1 // pred_check
      _
    $region107: #{tpu_custom_call.1} parent=1 // pred_check_branch
      %241 = sbr.rel (0) target = $region109
    $region108: #{tpu_custom_call.1} parent=1 // pred_region
      %243 = dma.done [#allocation21], 57344
    $region109: #{tpu_custom_call.1} parent=1 // pred_fallthru
      _
    // Predicated region
    $region110: #{tpu_custom_call.1} parent=1 // pred_check
      _
    $region111: #{tpu_custom_call.1} parent=1 // pred_check_branch
      %245 = sbr.rel (0) target = $region113
    $region112: #{tpu_custom_call.1} parent=1 // pred_region
      %247 = dma.done [#allocation24], 112
    $region113: #{tpu_custom_call.1} parent=1 // pred_fallthru
      _
    %v248 = vld [vmem:[#allocation2] sm:$0xf]
    %v249 = vld [vmem:[#allocation5] sm:$0xf]
    %v250 = vld [vmem:[#allocation5 + $0x4] sm:$0xf]
    %v251 = vld [vmem:[#allocation5 + $0x8] sm:$0xf]
    %v252 = vld [vmem:[#allocation5 + $0xc] sm:$0xf]
    %v253 = vld [vmem:[#allocation5 + $0x10] sm:$0xf]
    %v254 = vld [vmem:[#allocation5 + $0x14] sm:$0xf]
    %v255 = vld [vmem:[#allocation5 + $0x18] sm:$0xf]
    %v256 = vld [vmem:[#allocation5 + $0x1c] sm:$0xf]
    %v257 = vld [vmem:[#allocation5 + $0x20] sm:$0xf]
    %v258 = vld [vmem:[#allocation5 + $0x24] sm:$0xf]
    %v259 = vld [vmem:[#allocation5 + $0x28] sm:$0xf]
    %v260 = vld [vmem:[#allocation5 + $0x2c] sm:$0xf]
    %v261 = vld [vmem:[#allocation5 + $0x30] sm:$0xf]
    %v262 = vld [vmem:[#allocation5 + $0x34] sm:$0xf]
    %v263 = vld [vmem:[#allocation5 + $0x38] sm:$0xf]
    %v264 = vld [vmem:[#allocation5 + $0x3c] sm:$0xf]
    %v265 = vld [vmem:[#allocation7] sm:$0x1]
    %v267 = vperm.slane %v265, 0
    %v285 = vunpack.c.l.b16 %v249
    %v286 = vunpack.c.l.b16 %v250
    %v287 = vunpack.c.l.b16 %v251
    %v288 = vunpack.c.l.b16 %v252
    %v289 = vunpack.c.l.b16 %v253
    %v290 = vunpack.c.l.b16 %v254
    %v291 = vunpack.c.l.b16 %v255
    %v292 = vunpack.c.l.b16 %v256
    %v293 = vunpack.c.l.b16 %v257
    %v294 = vunpack.c.l.b16 %v258
    %v295 = vunpack.c.l.b16 %v259
    %v296 = vunpack.c.l.b16 %v260
    %v297 = vunpack.c.l.b16 %v261
    %v298 = vunpack.c.l.b16 %v262
    %v299 = vunpack.c.l.b16 %v263
    %v300 = vunpack.c.l.b16 %v264
    %v301 = vpack.c.b16 %v286, %v285
    %v302 = vpack.c.b16 %v288, %v287
    %v303 = vpack.c.b16 %v290, %v289
    %v304 = vpack.c.b16 %v292, %v291
    %v305 = vpack.c.b16 %v294, %v293
    %v306 = vpack.c.b16 %v296, %v295
    %v307 = vpack.c.b16 %v298, %v297
    %v308 = vpack.c.b16 %v300, %v299
    %317 = vmatpush.bf16.msra.mxu0 %v308
    %318 = vmatpush.bf16.msra.mxu0 %v307
    %319 = vmatpush.bf16.msra.mxu0 %v306
    %320 = vmatpush.bf16.msra.mxu0 %v305
    %321 = vmatpush.bf16.msra.mxu0 %v304
    %322 = vmatpush.bf16.msra.mxu0 %v303
    %323 = vmatpush.bf16.msra.mxu0 %v302
    %324 = vmatpush.bf16.msra.mxu0 %v301
    %325 = vmatmul.bf16.gmra.mxu0 %v248
    %v326 = vpop.f32.mrf.mxu0
    %v327 = vadd.f32 %v267, %v326
    %v328 = vpop.f32.mrf.mxu0
    %329 = vdwg.mxu0
    %vm330 = vcmp.gt.f32.partialorder %v327, 0.0
    %v331 = vmul.f32 %v327, 0.2
    %v332 = vsel %vm330, %v327, %v331
    %v333 = vpack.c.bf16 %v332, %v332
    %v334 = vld [vmem:[#allocation8] sm:$0xff]
    %v335 = vld [vmem:[#allocation8 + $0x8] sm:$0xff]
    %v336 = vld [vmem:[#allocation8 + $0x10] sm:$0xff]
    %v337 = vld [vmem:[#allocation8 + $0x18] sm:$0xff]
    %v338 = vld [vmem:[#allocation8 + $0x20] sm:$0xff]
    %v339 = vld [vmem:[#allocation8 + $0x28] sm:$0xff]
    %v340 = vld [vmem:[#allocation8 + $0x30] sm:$0xff]
    %v341 = vld [vmem:[#allocation8 + $0x38] sm:$0xff]
    %v342 = vld [vmem:[#allocation8 + $0x40] sm:$0xff]
    %v343 = vld [vmem:[#allocation8 + $0x48] sm:$0xff]
    %v344 = vld [vmem:[#allocation8 + $0x50] sm:$0xff]
    %v345 = vld [vmem:[#allocation8 + $0x58] sm:$0xff]
    %v346 = vld [vmem:[#allocation8 + $0x60] sm:$0xff]
    %v347 = vld [vmem:[#allocation8 + $0x68] sm:$0xff]
    %v348 = vld [vmem:[#allocation8 + $0x70] sm:$0xff]
    %v349 = vld [vmem:[#allocation8 + $0x78] sm:$0xff]
    %v366 = vunpack.c.l.b16 %v334
    %v367 = vunpack.c.h.b16 %v334
    %v368 = vunpack.c.l.b16 %v335
    %v369 = vunpack.c.h.b16 %v335
    %v370 = vunpack.c.l.b16 %v336
    %v371 = vunpack.c.h.b16 %v336
    %v372 = vunpack.c.l.b16 %v337
    %v373 = vunpack.c.h.b16 %v337
    %v374 = vunpack.c.l.b16 %v338
    %v375 = vunpack.c.h.b16 %v338
    %v376 = vunpack.c.l.b16 %v339
    %v377 = vunpack.c.h.b16 %v339
    %v378 = vunpack.c.l.b16 %v340
    %v379 = vunpack.c.h.b16 %v340
    %v380 = vunpack.c.l.b16 %v341
    %v381 = vunpack.c.h.b16 %v341
    %v382 = vunpack.c.l.b16 %v342
    %v383 = vunpack.c.h.b16 %v342
    %v384 = vunpack.c.l.b16 %v343
    %v385 = vunpack.c.h.b16 %v343
    %v386 = vunpack.c.l.b16 %v344
    %v387 = vunpack.c.h.b16 %v344
    %v388 = vunpack.c.l.b16 %v345
    %v389 = vunpack.c.h.b16 %v345
    %v390 = vunpack.c.l.b16 %v346
    %v391 = vunpack.c.h.b16 %v346
    %v392 = vunpack.c.l.b16 %v347
    %v393 = vunpack.c.h.b16 %v347
    %v394 = vunpack.c.l.b16 %v348
    %v395 = vunpack.c.h.b16 %v348
    %v396 = vunpack.c.l.b16 %v349
    %v397 = vunpack.c.h.b16 %v349
    %v398 = vpack.c.b16 %v368, %v366
    %v399 = vpack.c.b16 %v369, %v367
    %v400 = vpack.c.b16 %v372, %v370
    %v401 = vpack.c.b16 %v373, %v371
    %v402 = vpack.c.b16 %v376, %v374
    %v403 = vpack.c.b16 %v377, %v375
    %v404 = vpack.c.b16 %v380, %v378
    %v405 = vpack.c.b16 %v381, %v379
    %v406 = vpack.c.b16 %v384, %v382
    %v407 = vpack.c.b16 %v385, %v383
    %v408 = vpack.c.b16 %v388, %v386
    %v409 = vpack.c.b16 %v389, %v387
    %v410 = vpack.c.b16 %v392, %v390
    %v411 = vpack.c.b16 %v393, %v391
    %v412 = vpack.c.b16 %v396, %v394
    %v413 = vpack.c.b16 %v397, %v395
    %430 = vmatpush.bf16.msra.mxu0 %v412
    %431 = vmatpush.bf16.msra.mxu0 %v410
    %432 = vmatpush.bf16.msra.mxu0 %v408
    %433 = vmatpush.bf16.msra.mxu0 %v406
    %434 = vmatpush.bf16.msra.mxu0 %v404
    %435 = vmatpush.bf16.msra.mxu0 %v402
    %436 = vmatpush.bf16.msra.mxu0 %v400
    %437 = vmatpush.bf16.msra.mxu0 %v398
    %438 = vmatmul.bf16.gmra.mxu0 %v333
    %v439 = vpop.f32.mrf.mxu0
    %v440 = vadd.f32 0.0, %v439
    %v441 = vpop.f32.mrf.mxu0
    %442 = vdwg.mxu0
    %443 = vmatpush.bf16.msra.mxu0 %v413
    %444 = vmatpush.bf16.msra.mxu0 %v411
    %445 = vmatpush.bf16.msra.mxu0 %v409
    %446 = vmatpush.bf16.msra.mxu0 %v407
    %447 = vmatpush.bf16.msra.mxu0 %v405
    %448 = vmatpush.bf16.msra.mxu0 %v403
    %449 = vmatpush.bf16.msra.mxu0 %v401
    %450 = vmatpush.bf16.msra.mxu0 %v399
    %451 = vmatmul.bf16.gmra.mxu0 %v333
    %v452 = vpop.f32.mrf.mxu0
    %v453 = vadd.f32 0.0, %v452
    %v454 = vpop.f32.mrf.mxu0
    %455 = vdwg.mxu0
    %v456 = vld [vmem:[#allocation10] sm:$0x3]
    %v457 = vld [vmem:[#allocation11] sm:$0x3]
    %v458 = vrot.slane %v440, 4
    %v459 = vadd.f32 %v440, %v458
    %v460 = vrot.slane %v459, 2
    %v461 = vadd.f32 %v459, %v460
    %v462 = vrot.slane %v461, 1
    %v463 = vadd.f32 %v461, %v462
    %v464 = vrot.slane %v453, 4
    %v465 = vadd.f32 %v453, %v464
    %v466 = vrot.slane %v465, 2
    %v467 = vadd.f32 %v465, %v466
    %v468 = vrot.slane %v467, 1
    %v469 = vadd.f32 %v467, %v468
    %v470 = vrcp.pop 8.0
    %v471 = vmul.f32 8.0, %v470
    %v472 = vsub.f32 1.0, %v471
    %v473 = vmul.f32 %v470, %v472
    %v474 = vadd.f32 %v470, %v473
    %vm475 = vweird.f32 %v470
    %v476 = vsel %vm475, %v470, %v474
    %v477 = vmul.f32 %v463, %v476
    %v478 = vmul.f32 %v469, %v476
    %v479 = vmul.f32 %v440, %v440
    %v480 = vmul.f32 %v453, %v453
    %v481 = vrot.slane %v479, 4
    %v482 = vadd.f32 %v479, %v481
    %v483 = vrot.slane %v482, 2
    %v484 = vadd.f32 %v482, %v483
    %v485 = vrot.slane %v484, 1
    %v486 = vadd.f32 %v484, %v485
    %v487 = vrot.slane %v480, 4
    %v488 = vadd.f32 %v480, %v487
    %v489 = vrot.slane %v488, 2
    %v490 = vadd.f32 %v488, %v489
    %v491 = vrot.slane %v490, 1
    %v492 = vadd.f32 %v490, %v491
    %v493 = vmul.f32 %v486, %v476
    %v494 = vmul.f32 %v492, %v476
    %v495 = vmul.f32 %v477, %v477
    %v496 = vmul.f32 %v478, %v478
    %v497 = vsub.f32 %v493, %v495
    %v498 = vsub.f32 %v494, %v496
    %v499 = vmax.f32 %v497, 0.0
    %v500 = vmax.f32 %v498, 0.0
    %v501 = vadd.f32 %v499, 0.8
    %v502 = vadd.f32 %v500, 0.8
    %v503 = vrsqrt.pop %v501
    %v504 = vmul.f32 %v503, %v501
    %v505 = vmul.f32 %v504, %v503
    %v506 = vmul.f32 0.5, %v505
    %v507 = vsub.f32 1.5, %v506
    %v508 = vmul.f32 %v503, %v507
    %vm509 = vweird.f32 %v501
    %vm510 = vweird.f32 %v503
    %vm511 = vmor %vm509, %vm510
    %v512 = vsel %vm511, %v503, %v508
    %v513 = vrsqrt.pop %v502
    %v514 = vmul.f32 %v513, %v502
    %v515 = vmul.f32 %v514, %v513
    %v516 = vmul.f32 0.5, %v515
    %v517 = vsub.f32 1.5, %v516
    %v518 = vmul.f32 %v513, %v517
    %vm519 = vweird.f32 %v502
    %vm520 = vweird.f32 %v513
    %vm521 = vmor %vm519, %vm520
    %v522 = vsel %vm521, %v513, %v518
    %v525 = vrot.slane %v522, 7
    %vm526 = vcmask 1040384
    %v527 = vsel %vm526, %v512, %v525
    %v529 = vmul.f32 %v456, %v527
    %v531 = vperm.slane %v529, 0
    %v532 = vperm.slane %v529, 1
    %v535 = vmul.f32 %v477, %v531
    %v536 = vmul.f32 %v478, %v532
    %v539 = vrot.slane %v536, 7
    %v540 = vsel %vm526, %v535, %v539
    %v542 = vsub.f32 %v457, %v540
    %v543 = vmul.f32 %v440, %v531
    %v544 = vmul.f32 %v453, %v532
    %v546 = vperm.slane %v542, 0
    %v547 = vperm.slane %v542, 1
    %v550 = vadd.f32 %v543, %v546
    %v551 = vadd.f32 %v544, %v547
    %vm552 = vcmp.gt.f32.partialorder %v550, 0.0
    %vm553 = vcmp.gt.f32.partialorder %v551, 0.0
    %v554 = vmul.f32 %v550, 0.2
    %v555 = vmul.f32 %v551, 0.2
    %v556 = vsel %vm552, %v550, %v554
    %v557 = vsel %vm553, %v551, %v555
    %v558 = vpack.c.bf16 %v556, %v556
    %v559 = vpack.c.bf16 %v557, %v557
    %v560 = vld [vmem:[#allocation13] sm:$0xff]
    %v561 = vld [vmem:[#allocation13 + $0x8] sm:$0xff]
    %v562 = vld [vmem:[#allocation13 + $0x10] sm:$0xff]
    %v563 = vld [vmem:[#allocation13 + $0x18] sm:$0xff]
    %v564 = vld [vmem:[#allocation13 + $0x20] sm:$0xff]
    %v565 = vld [vmem:[#allocation13 + $0x28] sm:$0xff]
    %v566 = vld [vmem:[#allocation13 + $0x30] sm:$0xff]
    %v567 = vld [vmem:[#allocation13 + $0x38] sm:$0xff]
    %v568 = vld [vmem:[#allocation13 + $0x40] sm:$0xff]
    %v569 = vld [vmem:[#allocation13 + $0x48] sm:$0xff]
    %v570 = vld [vmem:[#allocation13 + $0x50] sm:$0xff]
    %v571 = vld [vmem:[#allocation13 + $0x58] sm:$0xff]
    %v572 = vld [vmem:[#allocation13 + $0x60] sm:$0xff]
    %v573 = vld [vmem:[#allocation13 + $0x68] sm:$0xff]
    %v574 = vld [vmem:[#allocation13 + $0x70] sm:$0xff]
    %v575 = vld [vmem:[#allocation13 + $0x78] sm:$0xff]
    %v576 = vld [vmem:[#allocation13 + $0x80] sm:$0xff]
    %v577 = vld [vmem:[#allocation13 + $0x88] sm:$0xff]
    %v578 = vld [vmem:[#allocation13 + $0x90] sm:$0xff]
    %v579 = vld [vmem:[#allocation13 + $0x98] sm:$0xff]
    %v580 = vld [vmem:[#allocation13 + $0xa0] sm:$0xff]
    %v581 = vld [vmem:[#allocation13 + $0xa8] sm:$0xff]
    %v582 = vld [vmem:[#allocation13 + $0xb0] sm:$0xff]
    %v583 = vld [vmem:[#allocation13 + $0xb8] sm:$0xff]
    %v584 = vld [vmem:[#allocation13 + $0xc0] sm:$0xff]
    %v585 = vld [vmem:[#allocation13 + $0xc8] sm:$0xff]
    %v586 = vld [vmem:[#allocation13 + $0xd0] sm:$0xff]
    %v587 = vld [vmem:[#allocation13 + $0xd8] sm:$0xff]
    %v588 = vld [vmem:[#allocation13 + $0xe0] sm:$0xff]
    %v589 = vld [vmem:[#allocation13 + $0xe8] sm:$0xff]
    %v590 = vld [vmem:[#allocation13 + $0xf0] sm:$0xff]
    %v591 = vld [vmem:[#allocation13 + $0xf8] sm:$0xff]
    %v592 = vld [vmem:[#allocation13 + $0x100] sm:$0xff]
    %v593 = vld [vmem:[#allocation13 + $0x108] sm:$0xff]
    %v594 = vld [vmem:[#allocation13 + $0x110] sm:$0xff]
    %v595 = vld [vmem:[#allocation13 + $0x118] sm:$0xff]
    %v596 = vld [vmem:[#allocation13 + $0x120] sm:$0xff]
    %v597 = vld [vmem:[#allocation13 + $0x128] sm:$0xff]
    %v598 = vld [vmem:[#allocation13 + $0x130] sm:$0xff]
    %v599 = vld [vmem:[#allocation13 + $0x138] sm:$0xff]
    %v600 = vld [vmem:[#allocation13 + $0x140] sm:$0xff]
    %v601 = vld [vmem:[#allocation13 + $0x148] sm:$0xff]
    %v602 = vld [vmem:[#allocation13 + $0x150] sm:$0xff]
    %v603 = vld [vmem:[#allocation13 + $0x158] sm:$0xff]
    %v604 = vld [vmem:[#allocation13 + $0x160] sm:$0xff]
    %v605 = vld [vmem:[#allocation13 + $0x168] sm:$0xff]
    %v606 = vld [vmem:[#allocation13 + $0x170] sm:$0xff]
    %v607 = vld [vmem:[#allocation13 + $0x178] sm:$0xff]
    %v608 = vld [vmem:[#allocation13 + $0x180] sm:$0xff]
    %v609 = vld [vmem:[#allocation13 + $0x188] sm:$0xff]
    %v610 = vld [vmem:[#allocation13 + $0x190] sm:$0xff]
    %v611 = vld [vmem:[#allocation13 + $0x198] sm:$0xff]
    %v612 = vld [vmem:[#allocation13 + $0x1a0] sm:$0xff]
    %v613 = vld [vmem:[#allocation13 + $0x1a8] sm:$0xff]
    %v614 = vld [vmem:[#allocation13 + $0x1b0] sm:$0xff]
    %v615 = vld [vmem:[#allocation13 + $0x1b8] sm:$0xff]
    %v616 = vld [vmem:[#allocation13 + $0x1c0] sm:$0xff]
    %v617 = vld [vmem:[#allocation13 + $0x1c8] sm:$0xff]
    %v618 = vld [vmem:[#allocation13 + $0x1d0] sm:$0xff]
    %v619 = vld [vmem:[#allocation13 + $0x1d8] sm:$0xff]
    %v620 = vld [vmem:[#allocation13 + $0x1e0] sm:$0xff]
    %v621 = vld [vmem:[#allocation13 + $0x1e8] sm:$0xff]
    %v622 = vld [vmem:[#allocation13 + $0x1f0] sm:$0xff]
    %v623 = vld [vmem:[#allocation13 + $0x1f8] sm:$0xff]
    %v688 = vunpack.c.l.b16 %v560
    %v689 = vunpack.c.h.b16 %v560
    %v690 = vunpack.c.l.b16 %v561
    %v691 = vunpack.c.h.b16 %v561
    %v692 = vunpack.c.l.b16 %v562
    %v693 = vunpack.c.h.b16 %v562
    %v694 = vunpack.c.l.b16 %v563
    %v695 = vunpack.c.h.b16 %v563
    %v696 = vunpack.c.l.b16 %v564
    %v697 = vunpack.c.h.b16 %v564
    %v698 = vunpack.c.l.b16 %v565
    %v699 = vunpack.c.h.b16 %v565
    %v700 = vunpack.c.l.b16 %v566
    %v701 = vunpack.c.h.b16 %v566
    %v702 = vunpack.c.l.b16 %v567
    %v703 = vunpack.c.h.b16 %v567
    %v704 = vunpack.c.l.b16 %v568
    %v705 = vunpack.c.h.b16 %v568
    %v706 = vunpack.c.l.b16 %v569
    %v707 = vunpack.c.h.b16 %v569
    %v708 = vunpack.c.l.b16 %v570
    %v709 = vunpack.c.h.b16 %v570
    %v710 = vunpack.c.l.b16 %v571
    %v711 = vunpack.c.h.b16 %v571
    %v712 = vunpack.c.l.b16 %v572
    %v713 = vunpack.c.h.b16 %v572
    %v714 = vunpack.c.l.b16 %v573
    %v715 = vunpack.c.h.b16 %v573
    %v716 = vunpack.c.l.b16 %v574
    %v717 = vunpack.c.h.b16 %v574
    %v718 = vunpack.c.l.b16 %v575
    %v719 = vunpack.c.h.b16 %v575
    %v720 = vunpack.c.l.b16 %v576
    %v721 = vunpack.c.h.b16 %v576
    %v722 = vunpack.c.l.b16 %v577
    %v723 = vunpack.c.h.b16 %v577
    %v724 = vunpack.c.l.b16 %v578
    %v725 = vunpack.c.h.b16 %v578
    %v726 = vunpack.c.l.b16 %v579
    %v727 = vunpack.c.h.b16 %v579
    %v728 = vunpack.c.l.b16 %v580
    %v729 = vunpack.c.h.b16 %v580
    %v730 = vunpack.c.l.b16 %v581
    %v731 = vunpack.c.h.b16 %v581
    %v732 = vunpack.c.l.b16 %v582
    %v733 = vunpack.c.h.b16 %v582
    %v734 = vunpack.c.l.b16 %v583
    %v735 = vunpack.c.h.b16 %v583
    %v736 = vunpack.c.l.b16 %v584
    %v737 = vunpack.c.h.b16 %v584
    %v738 = vunpack.c.l.b16 %v585
    %v739 = vunpack.c.h.b16 %v585
    %v740 = vunpack.c.l.b16 %v586
    %v741 = vunpack.c.h.b16 %v586
    %v742 = vunpack.c.l.b16 %v587
    %v743 = vunpack.c.h.b16 %v587
    %v744 = vunpack.c.l.b16 %v588
    %v745 = vunpack.c.h.b16 %v588
    %v746 = vunpack.c.l.b16 %v589
    %v747 = vunpack.c.h.b16 %v589
    %v748 = vunpack.c.l.b16 %v590
    %v749 = vunpack.c.h.b16 %v590
    %v750 = vunpack.c.l.b16 %v591
    %v751 = vunpack.c.h.b16 %v591
    %v752 = vunpack.c.l.b16 %v592
    %v753 = vunpack.c.h.b16 %v592
    %v754 = vunpack.c.l.b16 %v593
    %v755 = vunpack.c.h.b16 %v593
    %v756 = vunpack.c.l.b16 %v594
    %v757 = vunpack.c.h.b16 %v594
    %v758 = vunpack.c.l.b16 %v595
    %v759 = vunpack.c.h.b16 %v595
    %v760 = vunpack.c.l.b16 %v596
    %v761 = vunpack.c.h.b16 %v596
    %v762 = vunpack.c.l.b16 %v597
    %v763 = vunpack.c.h.b16 %v597
    %v764 = vunpack.c.l.b16 %v598
    %v765 = vunpack.c.h.b16 %v598
    %v766 = vunpack.c.l.b16 %v599
    %v767 = vunpack.c.h.b16 %v599
    %v768 = vunpack.c.l.b16 %v600
    %v769 = vunpack.c.h.b16 %v600
    %v770 = vunpack.c.l.b16 %v601
    %v771 = vunpack.c.h.b16 %v601
    %v772 = vunpack.c.l.b16 %v602
    %v773 = vunpack.c.h.b16 %v602
    %v774 = vunpack.c.l.b16 %v603
    %v775 = vunpack.c.h.b16 %v603
    %v776 = vunpack.c.l.b16 %v604
    %v777 = vunpack.c.h.b16 %v604
    %v778 = vunpack.c.l.b16 %v605
    %v779 = vunpack.c.h.b16 %v605
    %v780 = vunpack.c.l.b16 %v606
    %v781 = vunpack.c.h.b16 %v606
    %v782 = vunpack.c.l.b16 %v607
    %v783 = vunpack.c.h.b16 %v607
    %v784 = vunpack.c.l.b16 %v608
    %v785 = vunpack.c.h.b16 %v608
    %v786 = vunpack.c.l.b16 %v609
    %v787 = vunpack.c.h.b16 %v609
    %v788 = vunpack.c.l.b16 %v610
    %v789 = vunpack.c.h.b16 %v610
    %v790 = vunpack.c.l.b16 %v611
    %v791 = vunpack.c.h.b16 %v611
    %v792 = vunpack.c.l.b16 %v612
    %v793 = vunpack.c.h.b16 %v612
    %v794 = vunpack.c.l.b16 %v613
    %v795 = vunpack.c.h.b16 %v613
    %v796 = vunpack.c.l.b16 %v614
    %v797 = vunpack.c.h.b16 %v614
    %v798 = vunpack.c.l.b16 %v615
    %v799 = vunpack.c.h.b16 %v615
    %v800 = vunpack.c.l.b16 %v616
    %v801 = vunpack.c.h.b16 %v616
    %v802 = vunpack.c.l.b16 %v617
    %v803 = vunpack.c.h.b16 %v617
    %v804 = vunpack.c.l.b16 %v618
    %v805 = vunpack.c.h.b16 %v618
    %v806 = vunpack.c.l.b16 %v619
    %v807 = vunpack.c.h.b16 %v619
    %v808 = vunpack.c.l.b16 %v620
    %v809 = vunpack.c.h.b16 %v620
    %v810 = vunpack.c.l.b16 %v621
    %v811 = vunpack.c.h.b16 %v621
    %v812 = vunpack.c.l.b16 %v622
    %v813 = vunpack.c.h.b16 %v622
    %v814 = vunpack.c.l.b16 %v623
    %v815 = vunpack.c.h.b16 %v623
    %v816 = vpack.c.b16 %v692, %v688
    %v817 = vpack.c.b16 %v693, %v689
    %v818 = vpack.c.b16 %v694, %v690
    %v819 = vpack.c.b16 %v695, %v691
    %v820 = vpack.c.b16 %v700, %v696
    %v821 = vpack.c.b16 %v701, %v697
    %v822 = vpack.c.b16 %v702, %v698
    %v823 = vpack.c.b16 %v703, %v699
    %v824 = vpack.c.b16 %v708, %v704
    %v825 = vpack.c.b16 %v709, %v705
    %v826 = vpack.c.b16 %v710, %v706
    %v827 = vpack.c.b16 %v711, %v707
    %v828 = vpack.c.b16 %v716, %v712
    %v829 = vpack.c.b16 %v717, %v713
    %v830 = vpack.c.b16 %v718, %v714
    %v831 = vpack.c.b16 %v719, %v715
    %v832 = vpack.c.b16 %v724, %v720
    %v833 = vpack.c.b16 %v725, %v721
    %v834 = vpack.c.b16 %v726, %v722
    %v835 = vpack.c.b16 %v727, %v723
    %v836 = vpack.c.b16 %v732, %v728
    %v837 = vpack.c.b16 %v733, %v729
    %v838 = vpack.c.b16 %v734, %v730
    %v839 = vpack.c.b16 %v735, %v731
    %v840 = vpack.c.b16 %v740, %v736
    %v841 = vpack.c.b16 %v741, %v737
    %v842 = vpack.c.b16 %v742, %v738
    %v843 = vpack.c.b16 %v743, %v739
    %v844 = vpack.c.b16 %v748, %v744
    %v845 = vpack.c.b16 %v749, %v745
    %v846 = vpack.c.b16 %v750, %v746
    %v847 = vpack.c.b16 %v751, %v747
    %v848 = vpack.c.b16 %v756, %v752
    %v849 = vpack.c.b16 %v757, %v753
    %v850 = vpack.c.b16 %v758, %v754
    %v851 = vpack.c.b16 %v759, %v755
    %v852 = vpack.c.b16 %v764, %v760
    %v853 = vpack.c.b16 %v765, %v761
    %v854 = vpack.c.b16 %v766, %v762
    %v855 = vpack.c.b16 %v767, %v763
    %v856 = vpack.c.b16 %v772, %v768
    %v857 = vpack.c.b16 %v773, %v769
    %v858 = vpack.c.b16 %v774, %v770
    %v859 = vpack.c.b16 %v775, %v771
    %v860 = vpack.c.b16 %v780, %v776
    %v861 = vpack.c.b16 %v781, %v777
    %v862 = vpack.c.b16 %v782, %v778
    %v863 = vpack.c.b16 %v783, %v779
    %v864 = vpack.c.b16 %v788, %v784
    %v865 = vpack.c.b16 %v789, %v785
    %v866 = vpack.c.b16 %v790, %v786
    %v867 = vpack.c.b16 %v791, %v787
    %v868 = vpack.c.b16 %v796, %v792
    %v869 = vpack.c.b16 %v797, %v793
    %v870 = vpack.c.b16 %v798, %v794
    %v871 = vpack.c.b16 %v799, %v795
    %v872 = vpack.c.b16 %v804, %v800
    %v873 = vpack.c.b16 %v805, %v801
    %v874 = vpack.c.b16 %v806, %v802
    %v875 = vpack.c.b16 %v807, %v803
    %v876 = vpack.c.b16 %v812, %v808
    %v877 = vpack.c.b16 %v813, %v809
    %v878 = vpack.c.b16 %v814, %v810
    %v879 = vpack.c.b16 %v815, %v811
    %944 = vmatpush.bf16.msra.mxu0 %v844
    %945 = vmatpush.bf16.msra.mxu0 %v840
    %946 = vmatpush.bf16.msra.mxu0 %v836
    %947 = vmatpush.bf16.msra.mxu0 %v832
    %948 = vmatpush.bf16.msra.mxu0 %v828
    %949 = vmatpush.bf16.msra.mxu0 %v824
    %950 = vmatpush.bf16.msra.mxu0 %v820
    %951 = vmatpush.bf16.msra.mxu0 %v816
    %952 = vmatmul.bf16.gmra.mxu0 %v558
    %v953 = vpop.f32.mrf.mxu0
    %v954 = vadd.f32 0.0, %v953
    %v955 = vpop.f32.mrf.mxu0
    %956 = vdwg.mxu0
    %957 = vmatpush.bf16.msra.mxu0 %v876
    %958 = vmatpush.bf16.msra.mxu0 %v872
    %959 = vmatpush.bf16.msra.mxu0 %v868
    %960 = vmatpush.bf16.msra.mxu0 %v864
    %961 = vmatpush.bf16.msra.mxu0 %v860
    %962 = vmatpush.bf16.msra.mxu0 %v856
    %963 = vmatpush.bf16.msra.mxu0 %v852
    %964 = vmatpush.bf16.msra.mxu0 %v848
    %965 = vmatmul.bf16.gmra.mxu0 %v559
    %v966 = vpop.f32.mrf.mxu0
    %v967 = vadd.f32 %v954, %v966
    %v968 = vpop.f32.mrf.mxu0
    %969 = vdwg.mxu0
    %970 = vmatpush.bf16.msra.mxu0 %v845
    %971 = vmatpush.bf16.msra.mxu0 %v841
    %972 = vmatpush.bf16.msra.mxu0 %v837
    %973 = vmatpush.bf16.msra.mxu0 %v833
    %974 = vmatpush.bf16.msra.mxu0 %v829
    %975 = vmatpush.bf16.msra.mxu0 %v825
    %976 = vmatpush.bf16.msra.mxu0 %v821
    %977 = vmatpush.bf16.msra.mxu0 %v817
    %978 = vmatmul.bf16.gmra.mxu0 %v558
    %v979 = vpop.f32.mrf.mxu0
    %v980 = vadd.f32 0.0, %v979
    %v981 = vpop.f32.mrf.mxu0
    %982 = vdwg.mxu0
    %983 = vmatpush.bf16.msra.mxu0 %v877
    %984 = vmatpush.bf16.msra.mxu0 %v873
    %985 = vmatpush.bf16.msra.mxu0 %v869
    %986 = vmatpush.bf16.msra.mxu0 %v865
    %987 = vmatpush.bf16.msra.mxu0 %v861
    %988 = vmatpush.bf16.msra.mxu0 %v857
    %989 = vmatpush.bf16.msra.mxu0 %v853
    %990 = vmatpush.bf16.msra.mxu0 %v849
    %991 = vmatmul.bf16.gmra.mxu0 %v559
    %v992 = vpop.f32.mrf.mxu0
    %v993 = vadd.f32 %v980, %v992
    %v994 = vpop.f32.mrf.mxu0
    %995 = vdwg.mxu0
    %996 = vmatpush.bf16.msra.mxu0 %v846
    %997 = vmatpush.bf16.msra.mxu0 %v842
    %998 = vmatpush.bf16.msra.mxu0 %v838
    %999 = vmatpush.bf16.msra.mxu0 %v834
    %1000 = vmatpush.bf16.msra.mxu0 %v830
    %1001 = vmatpush.bf16.msra.mxu0 %v826
    %1002 = vmatpush.bf16.msra.mxu0 %v822
    %1003 = vmatpush.bf16.msra.mxu0 %v818
    %1004 = vmatmul.bf16.gmra.mxu0 %v558
    %v1005 = vpop.f32.mrf.mxu0
    %v1006 = vadd.f32 0.0, %v1005
    %v1007 = vpop.f32.mrf.mxu0
    %1008 = vdwg.mxu0
    %1009 = vmatpush.bf16.msra.mxu0 %v878
    %1010 = vmatpush.bf16.msra.mxu0 %v874
    %1011 = vmatpush.bf16.msra.mxu0 %v870
    %1012 = vmatpush.bf16.msra.mxu0 %v866
    %1013 = vmatpush.bf16.msra.mxu0 %v862
    %1014 = vmatpush.bf16.msra.mxu0 %v858
    %1015 = vmatpush.bf16.msra.mxu0 %v854
    %1016 = vmatpush.bf16.msra.mxu0 %v850
    %1017 = vmatmul.bf16.gmra.mxu0 %v559
    %v1018 = vpop.f32.mrf.mxu0
    %v1019 = vadd.f32 %v1006, %v1018
    %v1020 = vpop.f32.mrf.mxu0
    %1021 = vdwg.mxu0
    %1022 = vmatpush.bf16.msra.mxu0 %v847
    %1023 = vmatpush.bf16.msra.mxu0 %v843
    %1024 = vmatpush.bf16.msra.mxu0 %v839
    %1025 = vmatpush.bf16.msra.mxu0 %v835
    %1026 = vmatpush.bf16.msra.mxu0 %v831
    %1027 = vmatpush.bf16.msra.mxu0 %v827
    %1028 = vmatpush.bf16.msra.mxu0 %v823
    %1029 = vmatpush.bf16.msra.mxu0 %v819
    %1030 = vmatmul.bf16.gmra.mxu0 %v558
    %v1031 = vpop.f32.mrf.mxu0
    %v1032 = vadd.f32 0.0, %v1031
    %v1033 = vpop.f32.mrf.mxu0
    %1034 = vdwg.mxu0
    %1035 = vmatpush.bf16.msra.mxu0 %v879
    %1036 = vmatpush.bf16.msra.mxu0 %v875
    %1037 = vmatpush.bf16.msra.mxu0 %v871
    %1038 = vmatpush.bf16.msra.mxu0 %v867
    %1039 = vmatpush.bf16.msra.mxu0 %v863
    %1040 = vmatpush.bf16.msra.mxu0 %v859
    %1041 = vmatpush.bf16.msra.mxu0 %v855
    %1042 = vmatpush.bf16.msra.mxu0 %v851
    %1043 = vmatmul.bf16.gmra.mxu0 %v559
    %v1044 = vpop.f32.mrf.mxu0
    %v1045 = vadd.f32 %v1032, %v1044
    %v1046 = vpop.f32.mrf.mxu0
    %1047 = vdwg.mxu0
    %v1048 = vld [vmem:[#allocation14] sm:$0xf]
    %v1049 = vld [vmem:[#allocation16] sm:$0xf]
    %v1050 = vrot.slane %v967, 4
    %v1051 = vadd.f32 %v967, %v1050
    %v1052 = vrot.slane %v1051, 2
    %v1053 = vadd.f32 %v1051, %v1052
    %v1054 = vrot.slane %v1053, 1
    %v1055 = vadd.f32 %v1053, %v1054
    %v1056 = vrot.slane %v993, 4
    %v1057 = vadd.f32 %v993, %v1056
    %v1058 = vrot.slane %v1057, 2
    %v1059 = vadd.f32 %v1057, %v1058
    %v1060 = vrot.slane %v1059, 1
    %v1061 = vadd.f32 %v1059, %v1060
    %v1062 = vrot.slane %v1019, 4
    %v1063 = vadd.f32 %v1019, %v1062
    %v1064 = vrot.slane %v1063, 2
    %v1065 = vadd.f32 %v1063, %v1064
    %v1066 = vrot.slane %v1065, 1
    %v1067 = vadd.f32 %v1065, %v1066
    %v1068 = vrot.slane %v1045, 4
    %v1069 = vadd.f32 %v1045, %v1068
    %v1070 = vrot.slane %v1069, 2
    %v1071 = vadd.f32 %v1069, %v1070
    %v1072 = vrot.slane %v1071, 1
    %v1073 = vadd.f32 %v1071, %v1072
    %v1074 = vmul.f32 %v1055, %v476
    %v1075 = vmul.f32 %v1061, %v476
    %v1076 = vmul.f32 %v1067, %v476
    %v1077 = vmul.f32 %v1073, %v476
    %v1078 = vmul.f32 %v967, %v967
    %v1079 = vmul.f32 %v993, %v993
    %v1080 = vmul.f32 %v1019, %v1019
    %v1081 = vmul.f32 %v1045, %v1045
    %v1082 = vrot.slane %v1078, 4
    %v1083 = vadd.f32 %v1078, %v1082
    %v1084 = vrot.slane %v1083, 2
    %v1085 = vadd.f32 %v1083, %v1084
    %v1086 = vrot.slane %v1085, 1
    %v1087 = vadd.f32 %v1085, %v1086
    %v1088 = vrot.slane %v1079, 4
    %v1089 = vadd.f32 %v1079, %v1088
    %v1090 = vrot.slane %v1089, 2
    %v1091 = vadd.f32 %v1089, %v1090
    %v1092 = vrot.slane %v1091, 1
    %v1093 = vadd.f32 %v1091, %v1092
    %v1094 = vrot.slane %v1080, 4
    %v1095 = vadd.f32 %v1080, %v1094
    %v1096 = vrot.slane %v1095, 2
    %v1097 = vadd.f32 %v1095, %v1096
    %v1098 = vrot.slane %v1097, 1
    %v1099 = vadd.f32 %v1097, %v1098
    %v1100 = vrot.slane %v1081, 4
    %v1101 = vadd.f32 %v1081, %v1100
    %v1102 = vrot.slane %v1101, 2
    %v1103 = vadd.f32 %v1101, %v1102
    %v1104 = vrot.slane %v1103, 1
    %v1105 = vadd.f32 %v1103, %v1104
    %v1106 = vmul.f32 %v1087, %v476
    %v1107 = vmul.f32 %v1093, %v476
    %v1108 = vmul.f32 %v1099, %v476
    %v1109 = vmul.f32 %v1105, %v476
    %v1110 = vmul.f32 %v1074, %v1074
    %v1111 = vmul.f32 %v1075, %v1075
    %v1112 = vmul.f32 %v1076, %v1076
    %v1113 = vmul.f32 %v1077, %v1077
    %v1114 = vsub.f32 %v1106, %v1110
    %v1115 = vsub.f32 %v1107, %v1111
    %v1116 = vsub.f32 %v1108, %v1112
    %v1117 = vsub.f32 %v1109, %v1113
    %v1118 = vmax.f32 %v1114, 0.0
    %v1119 = vmax.f32 %v1115, 0.0
    %v1120 = vmax.f32 %v1116, 0.0
    %v1121 = vmax.f32 %v1117, 0.0
    %v1122 = vadd.f32 %v1118, 0.8
    %v1123 = vadd.f32 %v1119, 0.8
    %v1124 = vadd.f32 %v1120, 0.8
    %v1125 = vadd.f32 %v1121, 0.8
    %v1126 = vrsqrt.pop %v1122
    %v1127 = vmul.f32 %v1126, %v1122
    %v1128 = vmul.f32 %v1127, %v1126
    %v1129 = vmul.f32 0.5, %v1128
    %v1130 = vsub.f32 1.5, %v1129
    %v1131 = vmul.f32 %v1126, %v1130
    %vm1132 = vweird.f32 %v1122
    %vm1133 = vweird.f32 %v1126
    %vm1134 = vmor %vm1132, %vm1133
    %v1135 = vsel %vm1134, %v1126, %v1131
    %v1136 = vrsqrt.pop %v1123
    %v1137 = vmul.f32 %v1136, %v1123
    %v1138 = vmul.f32 %v1137, %v1136
    %v1139 = vmul.f32 0.5, %v1138
    %v1140 = vsub.f32 1.5, %v1139
    %v1141 = vmul.f32 %v1136, %v1140
    %vm1142 = vweird.f32 %v1123
    %vm1143 = vweird.f32 %v1136
    %vm1144 = vmor %vm1142, %vm1143
    %v1145 = vsel %vm1144, %v1136, %v1141
    %v1146 = vrsqrt.pop %v1124
    %v1147 = vmul.f32 %v1146, %v1124
    %v1148 = vmul.f32 %v1147, %v1146
    %v1149 = vmul.f32 0.5, %v1148
    %v1150 = vsub.f32 1.5, %v1149
    %v1151 = vmul.f32 %v1146, %v1150
    %vm1152 = vweird.f32 %v1124
    %vm1153 = vweird.f32 %v1146
    %vm1154 = vmor %vm1152, %vm1153
    %v1155 = vsel %vm1154, %v1146, %v1151
    %v1156 = vrsqrt.pop %v1125
    %v1157 = vmul.f32 %v1156, %v1125
    %v1158 = vmul.f32 %v1157, %v1156
    %v1159 = vmul.f32 0.5, %v1158
    %v1160 = vsub.f32 1.5, %v1159
    %v1161 = vmul.f32 %v1156, %v1160
    %vm1162 = vweird.f32 %v1125
    %vm1163 = vweird.f32 %v1156
    %vm1164 = vmor %vm1162, %vm1163
    %v1165 = vsel %vm1164, %v1156, %v1161
    %v1170 = vrot.slane %v1145, 7
    %v1171 = vrot.slane %v1155, 6
    %v1172 = vrot.slane %v1165, 5
    %v1173 = vsel %vm526, %v1135, %v1170
    %vm1174 = vcmask 1042434
    %v1175 = vsel %vm1174, %v1171, %v1172
    %vm1176 = vcmask 1041408
    %v1177 = vsel %vm1176, %v1173, %v1175
    %v1179 = vmul.f32 %v1048, %v1177
    %v1181 = vperm.slane %v1179, 0
    %v1182 = vperm.slane %v1179, 1
    %v1183 = vperm.slane %v1179, 2
    %v1184 = vperm.slane %v1179, 3
    %v1189 = vmul.f32 %v1074, %v1181
    %v1190 = vmul.f32 %v1075, %v1182
    %v1191 = vmul.f32 %v1076, %v1183
    %v1192 = vmul.f32 %v1077, %v1184
    %v1197 = vrot.slane %v1190, 7
    %v1198 = vrot.slane %v1191, 6
    %v1199 = vrot.slane %v1192, 5
    %v1200 = vsel %vm526, %v1189, %v1197
    %v1201 = vsel %vm1174, %v1198, %v1199
    %v1202 = vsel %vm1176, %v1200, %v1201
    %v1204 = vsub.f32 %v1049, %v1202
    %v1205 = vmul.f32 %v967, %v1181
    %v1206 = vmul.f32 %v993, %v1182
    %v1207 = vmul.f32 %v1019, %v1183
    %v1208 = vmul.f32 %v1045, %v1184
    %v1210 = vperm.slane %v1204, 0
    %v1211 = vperm.slane %v1204, 1
    %v1212 = vperm.slane %v1204, 2
    %v1213 = vperm.slane %v1204, 3
    %v1218 = vadd.f32 %v1205, %v1210
    %v1219 = vadd.f32 %v1206, %v1211
    %v1220 = vadd.f32 %v1207, %v1212
    %v1221 = vadd.f32 %v1208, %v1213
    %vm1222 = vcmp.gt.f32.partialorder %v1218, 0.0
    %vm1223 = vcmp.gt.f32.partialorder %v1219, 0.0
    %vm1224 = vcmp.gt.f32.partialorder %v1220, 0.0
    %vm1225 = vcmp.gt.f32.partialorder %v1221, 0.0
    %v1226 = vmul.f32 %v1218, 0.2
    %v1227 = vmul.f32 %v1219, 0.2
    %v1228 = vmul.f32 %v1220, 0.2
    %v1229 = vmul.f32 %v1221, 0.2
    %v1230 = vsel %vm1222, %v1218, %v1226
    %v1231 = vsel %vm1223, %v1219, %v1227
    %v1232 = vsel %vm1224, %v1220, %v1228
    %v1233 = vsel %vm1225, %v1221, %v1229
    %v1234 = vpack.c.bf16 %v1230, %v1230
    %v1235 = vpack.c.bf16 %v1231, %v1231
    %v1236 = vpack.c.bf16 %v1232, %v1232
    %v1237 = vpack.c.bf16 %v1233, %v1233
    %v1238 = vld [vmem:[#allocation17] sm:$0xff]
    %v1239 = vld [vmem:[#allocation17 + $0x8] sm:$0xff]
    %v1240 = vld [vmem:[#allocation17 + $0x10] sm:$0xff]
    %v1241 = vld [vmem:[#allocation17 + $0x18] sm:$0xff]
    %v1242 = vld [vmem:[#allocation17 + $0x20] sm:$0xff]
    %v1243 = vld [vmem:[#allocation17 + $0x28] sm:$0xff]
    %v1244 = vld [vmem:[#allocation17 + $0x30] sm:$0xff]
    %v1245 = vld [vmem:[#allocation17 + $0x38] sm:$0xff]
    %v1246 = vld [vmem:[#allocation17 + $0x40] sm:$0xff]
    %v1247 = vld [vmem:[#allocation17 + $0x48] sm:$0xff]
    %v1248 = vld [vmem:[#allocation17 + $0x50] sm:$0xff]
    %v1249 = vld [vmem:[#allocation17 + $0x58] sm:$0xff]
    %v1250 = vld [vmem:[#allocation17 + $0x60] sm:$0xff]
    %v1251 = vld [vmem:[#allocation17 + $0x68] sm:$0xff]
    %v1252 = vld [vmem:[#allocation17 + $0x70] sm:$0xff]
    %v1253 = vld [vmem:[#allocation17 + $0x78] sm:$0xff]
    %v1254 = vld [vmem:[#allocation17 + $0x80] sm:$0xff]
    %v1255 = vld [vmem:[#allocation17 + $0x88] sm:$0xff]
    %v1256 = vld [vmem:[#allocation17 + $0x90] sm:$0xff]
    %v1257 = vld [vmem:[#allocation17 + $0x98] sm:$0xff]
    %v1258 = vld [vmem:[#allocation17 + $0xa0] sm:$0xff]
    %v1259 = vld [vmem:[#allocation17 + $0xa8] sm:$0xff]
    %v1260 = vld [vmem:[#allocation17 + $0xb0] sm:$0xff]
    %v1261 = vld [vmem:[#allocation17 + $0xb8] sm:$0xff]
    %v1262 = vld [vmem:[#allocation17 + $0xc0] sm:$0xff]
    %v1263 = vld [vmem:[#allocation17 + $0xc8] sm:$0xff]
    %v1264 = vld [vmem:[#allocation17 + $0xd0] sm:$0xff]
    %v1265 = vld [vmem:[#allocation17 + $0xd8] sm:$0xff]
    %v1266 = vld [vmem:[#allocation17 + $0xe0] sm:$0xff]
    %v1267 = vld [vmem:[#allocation17 + $0xe8] sm:$0xff]
    %v1268 = vld [vmem:[#allocation17 + $0xf0] sm:$0xff]
    %v1269 = vld [vmem:[#allocation17 + $0xf8] sm:$0xff]
    %v1270 = vld [vmem:[#allocation17 + $0x100] sm:$0xff]
    %v1271 = vld [vmem:[#allocation17 + $0x108] sm:$0xff]
    %v1272 = vld [vmem:[#allocation17 + $0x110] sm:$0xff]
    %v1273 = vld [vmem:[#allocation17 + $0x118] sm:$0xff]
    %v1274 = vld [vmem:[#allocation17 + $0x120] sm:$0xff]
    %v1275 = vld [vmem:[#allocation17 + $0x128] sm:$0xff]
    %v1276 = vld [vmem:[#allocation17 + $0x130] sm:$0xff]
    %v1277 = vld [vmem:[#allocation17 + $0x138] sm:$0xff]
    %v1278 = vld [vmem:[#allocation17 + $0x140] sm:$0xff]
    %v1279 = vld [vmem:[#allocation17 + $0x148] sm:$0xff]
    %v1280 = vld [vmem:[#allocation17 + $0x150] sm:$0xff]
    %v1281 = vld [vmem:[#allocation17 + $0x158] sm:$0xff]
    %v1282 = vld [vmem:[#allocation17 + $0x160] sm:$0xff]
    %v1283 = vld [vmem:[#allocation17 + $0x168] sm:$0xff]
    %v1284 = vld [vmem:[#allocation17 + $0x170] sm:$0xff]
    %v1285 = vld [vmem:[#allocation17 + $0x178] sm:$0xff]
    %v1286 = vld [vmem:[#allocation17 + $0x180] sm:$0xff]
    %v1287 = vld [vmem:[#allocation17 + $0x188] sm:$0xff]
    %v1288 = vld [vmem:[#allocation17 + $0x190] sm:$0xff]
    %v1289 = vld [vmem:[#allocation17 + $0x198] sm:$0xff]
    %v1290 = vld [vmem:[#allocation17 + $0x1a0] sm:$0xff]
    %v1291 = vld [vmem:[#allocation17 + $0x1a8] sm:$0xff]
    %v1292 = vld [vmem:[#allocation17 + $0x1b0] sm:$0xff]
    %v1293 = vld [vmem:[#allocation17 + $0x1b8] sm:$0xff]
    %v1294 = vld [vmem:[#allocation17 + $0x1c0] sm:$0xff]
    %v1295 = vld [vmem:[#allocation17 + $0x1c8] sm:$0xff]
    %v1296 = vld [vmem:[#allocation17 + $0x1d0] sm:$0xff]
    %v1297 = vld [vmem:[#allocation17 + $0x1d8] sm:$0xff]
    %v1298 = vld [vmem:[#allocation17 + $0x1e0] sm:$0xff]
    %v1299 = vld [vmem:[#allocation17 + $0x1e8] sm:$0xff]
    %v1300 = vld [vmem:[#allocation17 + $0x1f0] sm:$0xff]
    %v1301 = vld [vmem:[#allocation17 + $0x1f8] sm:$0xff]
    %v1302 = vld [vmem:[#allocation17 + $0x200] sm:$0xff]
    %v1303 = vld [vmem:[#allocation17 + $0x208] sm:$0xff]
    %v1304 = vld [vmem:[#allocation17 + $0x210] sm:$0xff]
    %v1305 = vld [vmem:[#allocation17 + $0x218] sm:$0xff]
    %v1306 = vld [vmem:[#allocation17 + $0x220] sm:$0xff]
    %v1307 = vld [vmem:[#allocation17 + $0x228] sm:$0xff]
    %v1308 = vld [vmem:[#allocation17 + $0x230] sm:$0xff]
    %v1309 = vld [vmem:[#allocation17 + $0x238] sm:$0xff]
    %v1310 = vld [vmem:[#allocation17 + $0x240] sm:$0xff]
    %v1311 = vld [vmem:[#allocation17 + $0x248] sm:$0xff]
    %v1312 = vld [vmem:[#allocation17 + $0x250] sm:$0xff]
    %v1313 = vld [vmem:[#allocation17 + $0x258] sm:$0xff]
    %v1314 = vld [vmem:[#allocation17 + $0x260] sm:$0xff]
    %v1315 = vld [vmem:[#allocation17 + $0x268] sm:$0xff]
    %v1316 = vld [vmem:[#allocation17 + $0x270] sm:$0xff]
    %v1317 = vld [vmem:[#allocation17 + $0x278] sm:$0xff]
    %v1318 = vld [vmem:[#allocation17 + $0x280] sm:$0xff]
    %v1319 = vld [vmem:[#allocation17 + $0x288] sm:$0xff]
    %v1320 = vld [vmem:[#allocation17 + $0x290] sm:$0xff]
    %v1321 = vld [vmem:[#allocation17 + $0x298] sm:$0xff]
    %v1322 = vld [vmem:[#allocation17 + $0x2a0] sm:$0xff]
    %v1323 = vld [vmem:[#allocation17 + $0x2a8] sm:$0xff]
    %v1324 = vld [vmem:[#allocation17 + $0x2b0] sm:$0xff]
    %v1325 = vld [vmem:[#allocation17 + $0x2b8] sm:$0xff]
    %v1326 = vld [vmem:[#allocation17 + $0x2c0] sm:$0xff]
    %v1327 = vld [vmem:[#allocation17 + $0x2c8] sm:$0xff]
    %v1328 = vld [vmem:[#allocation17 + $0x2d0] sm:$0xff]
    %v1329 = vld [vmem:[#allocation17 + $0x2d8] sm:$0xff]
    %v1330 = vld [vmem:[#allocation17 + $0x2e0] sm:$0xff]
    %v1331 = vld [vmem:[#allocation17 + $0x2e8] sm:$0xff]
    %v1332 = vld [vmem:[#allocation17 + $0x2f0] sm:$0xff]
    %v1333 = vld [vmem:[#allocation17 + $0x2f8] sm:$0xff]
    %v1334 = vld [vmem:[#allocation17 + $0x300] sm:$0xff]
    %v1335 = vld [vmem:[#allocation17 + $0x308] sm:$0xff]
    %v1336 = vld [vmem:[#allocation17 + $0x310] sm:$0xff]
    %v1337 = vld [vmem:[#allocation17 + $0x318] sm:$0xff]
    %v1338 = vld [vmem:[#allocation17 + $0x320] sm:$0xff]
    %v1339 = vld [vmem:[#allocation17 + $0x328] sm:$0xff]
    %v1340 = vld [vmem:[#allocation17 + $0x330] sm:$0xff]
    %v1341 = vld [vmem:[#allocation17 + $0x338] sm:$0xff]
    %v1342 = vld [vmem:[#allocation17 + $0x340] sm:$0xff]
    %v1343 = vld [vmem:[#allocation17 + $0x348] sm:$0xff]
    %v1344 = vld [vmem:[#allocation17 + $0x350] sm:$0xff]
    %v1345 = vld [vmem:[#allocation17 + $0x358] sm:$0xff]
    %v1346 = vld [vmem:[#allocation17 + $0x360] sm:$0xff]
    %v1347 = vld [vmem:[#allocation17 + $0x368] sm:$0xff]
    %v1348 = vld [vmem:[#allocation17 + $0x370] sm:$0xff]
    %v1349 = vld [vmem:[#allocation17 + $0x378] sm:$0xff]
    %v1350 = vld [vmem:[#allocation17 + $0x380] sm:$0xff]
    %v1351 = vld [vmem:[#allocation17 + $0x388] sm:$0xff]
    %v1352 = vld [vmem:[#allocation17 + $0x390] sm:$0xff]
    %v1353 = vld [vmem:[#allocation17 + $0x398] sm:$0xff]
    %v1354 = vld [vmem:[#allocation17 + $0x3a0] sm:$0xff]
    %v1355 = vld [vmem:[#allocation17 + $0x3a8] sm:$0xff]
    %v1356 = vld [vmem:[#allocation17 + $0x3b0] sm:$0xff]
    %v1357 = vld [vmem:[#allocation17 + $0x3b8] sm:$0xff]
    %v1358 = vld [vmem:[#allocation17 + $0x3c0] sm:$0xff]
    %v1359 = vld [vmem:[#allocation17 + $0x3c8] sm:$0xff]
    %v1360 = vld [vmem:[#allocation17 + $0x3d0] sm:$0xff]
    %v1361 = vld [vmem:[#allocation17 + $0x3d8] sm:$0xff]
    %v1362 = vld [vmem:[#allocation17 + $0x3e0] sm:$0xff]
    %v1363 = vld [vmem:[#allocation17 + $0x3e8] sm:$0xff]
    %v1364 = vld [vmem:[#allocation17 + $0x3f0] sm:$0xff]
    %v1365 = vld [vmem:[#allocation17 + $0x3f8] sm:$0xff]
    %v1366 = vld [vmem:[#allocation17 + $0x400] sm:$0xff]
    %v1367 = vld [vmem:[#allocation17 + $0x408] sm:$0xff]
    %v1368 = vld [vmem:[#allocation17 + $0x410] sm:$0xff]
    %v1369 = vld [vmem:[#allocation17 + $0x418] sm:$0xff]
    %v1370 = vld [vmem:[#allocation17 + $0x420] sm:$0xff]
    %v1371 = vld [vmem:[#allocation17 + $0x428] sm:$0xff]
    %v1372 = vld [vmem:[#allocation17 + $0x430] sm:$0xff]
    %v1373 = vld [vmem:[#allocation17 + $0x438] sm:$0xff]
    %v1374 = vld [vmem:[#allocation17 + $0x440] sm:$0xff]
    %v1375 = vld [vmem:[#allocation17 + $0x448] sm:$0xff]
    %v1376 = vld [vmem:[#allocation17 + $0x450] sm:$0xff]
    %v1377 = vld [vmem:[#allocation17 + $0x458] sm:$0xff]
    %v1378 = vld [vmem:[#allocation17 + $0x460] sm:$0xff]
    %v1379 = vld [vmem:[#allocation17 + $0x468] sm:$0xff]
    %v1380 = vld [vmem:[#allocation17 + $0x470] sm:$0xff]
    %v1381 = vld [vmem:[#allocation17 + $0x478] sm:$0xff]
    %v1382 = vld [vmem:[#allocation17 + $0x480] sm:$0xff]
    %v1383 = vld [vmem:[#allocation17 + $0x488] sm:$0xff]
    %v1384 = vld [vmem:[#allocation17 + $0x490] sm:$0xff]
    %v1385 = vld [vmem:[#allocation17 + $0x498] sm:$0xff]
    %v1386 = vld [vmem:[#allocation17 + $0x4a0] sm:$0xff]
    %v1387 = vld [vmem:[#allocation17 + $0x4a8] sm:$0xff]
    %v1388 = vld [vmem:[#allocation17 + $0x4b0] sm:$0xff]
    %v1389 = vld [vmem:[#allocation17 + $0x4b8] sm:$0xff]
    %v1390 = vld [vmem:[#allocation17 + $0x4c0] sm:$0xff]
    %v1391 = vld [vmem:[#allocation17 + $0x4c8] sm:$0xff]
    %v1392 = vld [vmem:[#allocation17 + $0x4d0] sm:$0xff]
    %v1393 = vld [vmem:[#allocation17 + $0x4d8] sm:$0xff]
    %v1394 = vld [vmem:[#allocation17 + $0x4e0] sm:$0xff]
    %v1395 = vld [vmem:[#allocation17 + $0x4e8] sm:$0xff]
    %v1396 = vld [vmem:[#allocation17 + $0x4f0] sm:$0xff]
    %v1397 = vld [vmem:[#allocation17 + $0x4f8] sm:$0xff]
    %v1398 = vld [vmem:[#allocation17 + $0x500] sm:$0xff]
    %v1399 = vld [vmem:[#allocation17 + $0x508] sm:$0xff]
    %v1400 = vld [vmem:[#allocation17 + $0x510] sm:$0xff]
    %v1401 = vld [vmem:[#allocation17 + $0x518] sm:$0xff]
    %v1402 = vld [vmem:[#allocation17 + $0x520] sm:$0xff]
    %v1403 = vld [vmem:[#allocation17 + $0x528] sm:$0xff]
    %v1404 = vld [vmem:[#allocation17 + $0x530] sm:$0xff]
    %v1405 = vld [vmem:[#allocation17 + $0x538] sm:$0xff]
    %v1406 = vld [vmem:[#allocation17 + $0x540] sm:$0xff]
    %v1407 = vld [vmem:[#allocation17 + $0x548] sm:$0xff]
    %v1408 = vld [vmem:[#allocation17 + $0x550] sm:$0xff]
    %v1409 = vld [vmem:[#allocation17 + $0x558] sm:$0xff]
    %v1410 = vld [vmem:[#allocation17 + $0x560] sm:$0xff]
    %v1411 = vld [vmem:[#allocation17 + $0x568] sm:$0xff]
    %v1412 = vld [vmem:[#allocation17 + $0x570] sm:$0xff]
    %v1413 = vld [vmem:[#allocation17 + $0x578] sm:$0xff]
    %v1414 = vld [vmem:[#allocation17 + $0x580] sm:$0xff]
    %v1415 = vld [vmem:[#allocation17 + $0x588] sm:$0xff]
    %v1416 = vld [vmem:[#allocation17 + $0x590] sm:$0xff]
    %v1417 = vld [vmem:[#allocation17 + $0x598] sm:$0xff]
    %v1418 = vld [vmem:[#allocation17 + $0x5a0] sm:$0xff]
    %v1419 = vld [vmem:[#allocation17 + $0x5a8] sm:$0xff]
    %v1420 = vld [vmem:[#allocation17 + $0x5b0] sm:$0xff]
    %v1421 = vld [vmem:[#allocation17 + $0x5b8] sm:$0xff]
    %v1422 = vld [vmem:[#allocation17 + $0x5c0] sm:$0xff]
    %v1423 = vld [vmem:[#allocation17 + $0x5c8] sm:$0xff]
    %v1424 = vld [vmem:[#allocation17 + $0x5d0] sm:$0xff]
    %v1425 = vld [vmem:[#allocation17 + $0x5d8] sm:$0xff]
    %v1426 = vld [vmem:[#allocation17 + $0x5e0] sm:$0xff]
    %v1427 = vld [vmem:[#allocation17 + $0x5e8] sm:$0xff]
    %v1428 = vld [vmem:[#allocation17 + $0x5f0] sm:$0xff]
    %v1429 = vld [vmem:[#allocation17 + $0x5f8] sm:$0xff]
    %v1430 = vld [vmem:[#allocation17 + $0x600] sm:$0xff]
    %v1431 = vld [vmem:[#allocation17 + $0x608] sm:$0xff]
    %v1432 = vld [vmem:[#allocation17 + $0x610] sm:$0xff]
    %v1433 = vld [vmem:[#allocation17 + $0x618] sm:$0xff]
    %v1434 = vld [vmem:[#allocation17 + $0x620] sm:$0xff]
    %v1435 = vld [vmem:[#allocation17 + $0x628] sm:$0xff]
    %v1436 = vld [vmem:[#allocation17 + $0x630] sm:$0xff]
    %v1437 = vld [vmem:[#allocation17 + $0x638] sm:$0xff]
    %v1438 = vld [vmem:[#allocation17 + $0x640] sm:$0xff]
    %v1439 = vld [vmem:[#allocation17 + $0x648] sm:$0xff]
    %v1440 = vld [vmem:[#allocation17 + $0x650] sm:$0xff]
    %v1441 = vld [vmem:[#allocation17 + $0x658] sm:$0xff]
    %v1442 = vld [vmem:[#allocation17 + $0x660] sm:$0xff]
    %v1443 = vld [vmem:[#allocation17 + $0x668] sm:$0xff]
    %v1444 = vld [vmem:[#allocation17 + $0x670] sm:$0xff]
    %v1445 = vld [vmem:[#allocation17 + $0x678] sm:$0xff]
    %v1446 = vld [vmem:[#allocation17 + $0x680] sm:$0xff]
    %v1447 = vld [vmem:[#allocation17 + $0x688] sm:$0xff]
    %v1448 = vld [vmem:[#allocation17 + $0x690] sm:$0xff]
    %v1449 = vld [vmem:[#allocation17 + $0x698] sm:$0xff]
    %v1450 = vld [vmem:[#allocation17 + $0x6a0] sm:$0xff]
    %v1451 = vld [vmem:[#allocation17 + $0x6a8] sm:$0xff]
    %v1452 = vld [vmem:[#allocation17 + $0x6b0] sm:$0xff]
    %v1453 = vld [vmem:[#allocation17 + $0x6b8] sm:$0xff]
    %v1454 = vld [vmem:[#allocation17 + $0x6c0] sm:$0xff]
    %v1455 = vld [vmem:[#allocation17 + $0x6c8] sm:$0xff]
    %v1456 = vld [vmem:[#allocation17 + $0x6d0] sm:$0xff]
    %v1457 = vld [vmem:[#allocation17 + $0x6d8] sm:$0xff]
    %v1458 = vld [vmem:[#allocation17 + $0x6e0] sm:$0xff]
    %v1459 = vld [vmem:[#allocation17 + $0x6e8] sm:$0xff]
    %v1460 = vld [vmem:[#allocation17 + $0x6f0] sm:$0xff]
    %v1461 = vld [vmem:[#allocation17 + $0x6f8] sm:$0xff]
    %v1462 = vld [vmem:[#allocation17 + $0x700] sm:$0xff]
    %v1463 = vld [vmem:[#allocation17 + $0x708] sm:$0xff]
    %v1464 = vld [vmem:[#allocation17 + $0x710] sm:$0xff]
    %v1465 = vld [vmem:[#allocation17 + $0x718] sm:$0xff]
    %v1466 = vld [vmem:[#allocation17 + $0x720] sm:$0xff]
    %v1467 = vld [vmem:[#allocation17 + $0x728] sm:$0xff]
    %v1468 = vld [vmem:[#allocation17 + $0x730] sm:$0xff]
    %v1469 = vld [vmem:[#allocation17 + $0x738] sm:$0xff]
    %v1470 = vld [vmem:[#allocation17 + $0x740] sm:$0xff]
    %v1471 = vld [vmem:[#allocation17 + $0x748] sm:$0xff]
    %v1472 = vld [vmem:[#allocation17 + $0x750] sm:$0xff]
    %v1473 = vld [vmem:[#allocation17 + $0x758] sm:$0xff]
    %v1474 = vld [vmem:[#allocation17 + $0x760] sm:$0xff]
    %v1475 = vld [vmem:[#allocation17 + $0x768] sm:$0xff]
    %v1476 = vld [vmem:[#allocation17 + $0x770] sm:$0xff]
    %v1477 = vld [vmem:[#allocation17 + $0x778] sm:$0xff]
    %v1478 = vld [vmem:[#allocation17 + $0x780] sm:$0xff]
    %v1479 = vld [vmem:[#allocation17 + $0x788] sm:$0xff]
    %v1480 = vld [vmem:[#allocation17 + $0x790] sm:$0xff]
    %v1481 = vld [vmem:[#allocation17 + $0x798] sm:$0xff]
    %v1482 = vld [vmem:[#allocation17 + $0x7a0] sm:$0xff]
    %v1483 = vld [vmem:[#allocation17 + $0x7a8] sm:$0xff]
    %v1484 = vld [vmem:[#allocation17 + $0x7b0] sm:$0xff]
    %v1485 = vld [vmem:[#allocation17 + $0x7b8] sm:$0xff]
    %v1486 = vld [vmem:[#allocation17 + $0x7c0] sm:$0xff]
    %v1487 = vld [vmem:[#allocation17 + $0x7c8] sm:$0xff]
    %v1488 = vld [vmem:[#allocation17 + $0x7d0] sm:$0xff]
    %v1489 = vld [vmem:[#allocation17 + $0x7d8] sm:$0xff]
    %v1490 = vld [vmem:[#allocation17 + $0x7e0] sm:$0xff]
    %v1491 = vld [vmem:[#allocation17 + $0x7e8] sm:$0xff]
    %v1492 = vld [vmem:[#allocation17 + $0x7f0] sm:$0xff]
    %v1493 = vld [vmem:[#allocation17 + $0x7f8] sm:$0xff]
    %v1750 = vunpack.c.l.b16 %v1238
    %v1751 = vunpack.c.h.b16 %v1238
    %v1752 = vunpack.c.l.b16 %v1239
    %v1753 = vunpack.c.h.b16 %v1239
    %v1754 = vunpack.c.l.b16 %v1240
    %v1755 = vunpack.c.h.b16 %v1240
    %v1756 = vunpack.c.l.b16 %v1241
    %v1757 = vunpack.c.h.b16 %v1241
    %v1758 = vunpack.c.l.b16 %v1242
    %v1759 = vunpack.c.h.b16 %v1242
    %v1760 = vunpack.c.l.b16 %v1243
    %v1761 = vunpack.c.h.b16 %v1243
    %v1762 = vunpack.c.l.b16 %v1244
    %v1763 = vunpack.c.h.b16 %v1244
    %v1764 = vunpack.c.l.b16 %v1245
    %v1765 = vunpack.c.h.b16 %v1245
    %v1766 = vunpack.c.l.b16 %v1246
    %v1767 = vunpack.c.h.b16 %v1246
    %v1768 = vunpack.c.l.b16 %v1247
    %v1769 = vunpack.c.h.b16 %v1247
    %v1770 = vunpack.c.l.b16 %v1248
    %v1771 = vunpack.c.h.b16 %v1248
    %v1772 = vunpack.c.l.b16 %v1249
    %v1773 = vunpack.c.h.b16 %v1249
    %v1774 = vunpack.c.l.b16 %v1250
    %v1775 = vunpack.c.h.b16 %v1250
    %v1776 = vunpack.c.l.b16 %v1251
    %v1777 = vunpack.c.h.b16 %v1251
    %v1778 = vunpack.c.l.b16 %v1252
    %v1779 = vunpack.c.h.b16 %v1252
    %v1780 = vunpack.c.l.b16 %v1253
    %v1781 = vunpack.c.h.b16 %v1253
    %v1782 = vunpack.c.l.b16 %v1254
    %v1783 = vunpack.c.h.b16 %v1254
    %v1784 = vunpack.c.l.b16 %v1255
    %v1785 = vunpack.c.h.b16 %v1255
    %v1786 = vunpack.c.l.b16 %v1256
    %v1787 = vunpack.c.h.b16 %v1256
    %v1788 = vunpack.c.l.b16 %v1257
    %v1789 = vunpack.c.h.b16 %v1257
    %v1790 = vunpack.c.l.b16 %v1258
    %v1791 = vunpack.c.h.b16 %v1258
    %v1792 = vunpack.c.l.b16 %v1259
    %v1793 = vunpack.c.h.b16 %v1259
    %v1794 = vunpack.c.l.b16 %v1260
    %v1795 = vunpack.c.h.b16 %v1260
    %v1796 = vunpack.c.l.b16 %v1261
    %v1797 = vunpack.c.h.b16 %v1261
    %v1798 = vunpack.c.l.b16 %v1262
    %v1799 = vunpack.c.h.b16 %v1262
    %v1800 = vunpack.c.l.b16 %v1263
    %v1801 = vunpack.c.h.b16 %v1263
    %v1802 = vunpack.c.l.b16 %v1264
    %v1803 = vunpack.c.h.b16 %v1264
    %v1804 = vunpack.c.l.b16 %v1265
    %v1805 = vunpack.c.h.b16 %v1265
    %v1806 = vunpack.c.l.b16 %v1266
    %v1807 = vunpack.c.h.b16 %v1266
    %v1808 = vunpack.c.l.b16 %v1267
    %v1809 = vunpack.c.h.b16 %v1267
    %v1810 = vunpack.c.l.b16 %v1268
    %v1811 = vunpack.c.h.b16 %v1268
    %v1812 = vunpack.c.l.b16 %v1269
    %v1813 = vunpack.c.h.b16 %v1269
    %v1814 = vunpack.c.l.b16 %v1270
    %v1815 = vunpack.c.h.b16 %v1270
    %v1816 = vunpack.c.l.b16 %v1271
    %v1817 = vunpack.c.h.b16 %v1271
    %v1818 = vunpack.c.l.b16 %v1272
    %v1819 = vunpack.c.h.b16 %v1272
    %v1820 = vunpack.c.l.b16 %v1273
    %v1821 = vunpack.c.h.b16 %v1273
    %v1822 = vunpack.c.l.b16 %v1274
    %v1823 = vunpack.c.h.b16 %v1274
    %v1824 = vunpack.c.l.b16 %v1275
    %v1825 = vunpack.c.h.b16 %v1275
    %v1826 = vunpack.c.l.b16 %v1276
    %v1827 = vunpack.c.h.b16 %v1276
    %v1828 = vunpack.c.l.b16 %v1277
    %v1829 = vunpack.c.h.b16 %v1277
    %v1830 = vunpack.c.l.b16 %v1278
    %v1831 = vunpack.c.h.b16 %v1278
    %v1832 = vunpack.c.l.b16 %v1279
    %v1833 = vunpack.c.h.b16 %v1279
    %v1834 = vunpack.c.l.b16 %v1280
    %v1835 = vunpack.c.h.b16 %v1280
    %v1836 = vunpack.c.l.b16 %v1281
    %v1837 = vunpack.c.h.b16 %v1281
    %v1838 = vunpack.c.l.b16 %v1282
    %v1839 = vunpack.c.h.b16 %v1282
    %v1840 = vunpack.c.l.b16 %v1283
    %v1841 = vunpack.c.h.b16 %v1283
    %v1842 = vunpack.c.l.b16 %v1284
    %v1843 = vunpack.c.h.b16 %v1284
    %v1844 = vunpack.c.l.b16 %v1285
    %v1845 = vunpack.c.h.b16 %v1285
    %v1846 = vunpack.c.l.b16 %v1286
    %v1847 = vunpack.c.h.b16 %v1286
    %v1848 = vunpack.c.l.b16 %v1287
    %v1849 = vunpack.c.h.b16 %v1287
    %v1850 = vunpack.c.l.b16 %v1288
    %v1851 = vunpack.c.h.b16 %v1288
    %v1852 = vunpack.c.l.b16 %v1289
    %v1853 = vunpack.c.h.b16 %v1289
    %v1854 = vunpack.c.l.b16 %v1290
    %v1855 = vunpack.c.h.b16 %v1290
    %v1856 = vunpack.c.l.b16 %v1291
    %v1857 = vunpack.c.h.b16 %v1291
    %v1858 = vunpack.c.l.b16 %v1292
    %v1859 = vunpack.c.h.b16 %v1292
    %v1860 = vunpack.c.l.b16 %v1293
    %v1861 = vunpack.c.h.b16 %v1293
    %v1862 = vunpack.c.l.b16 %v1294
    %v1863 = vunpack.c.h.b16 %v1294
    %v1864 = vunpack.c.l.b16 %v1295
    %v1865 = vunpack.c.h.b16 %v1295
    %v1866 = vunpack.c.l.b16 %v1296
    %v1867 = vunpack.c.h.b16 %v1296
    %v1868 = vunpack.c.l.b16 %v1297
    %v1869 = vunpack.c.h.b16 %v1297
    %v1870 = vunpack.c.l.b16 %v1298
    %v1871 = vunpack.c.h.b16 %v1298
    %v1872 = vunpack.c.l.b16 %v1299
    %v1873 = vunpack.c.h.b16 %v1299
    %v1874 = vunpack.c.l.b16 %v1300
    %v1875 = vunpack.c.h.b16 %v1300
    %v1876 = vunpack.c.l.b16 %v1301
    %v1877 = vunpack.c.h.b16 %v1301
    %v1878 = vunpack.c.l.b16 %v1302
    %v1879 = vunpack.c.h.b16 %v1302
    %v1880 = vunpack.c.l.b16 %v1303
    %v1881 = vunpack.c.h.b16 %v1303
    %v1882 = vunpack.c.l.b16 %v1304
    %v1883 = vunpack.c.h.b16 %v1304
    %v1884 = vunpack.c.l.b16 %v1305
    %v1885 = vunpack.c.h.b16 %v1305
    %v1886 = vunpack.c.l.b16 %v1306
    %v1887 = vunpack.c.h.b16 %v1306
    %v1888 = vunpack.c.l.b16 %v1307
    %v1889 = vunpack.c.h.b16 %v1307
    %v1890 = vunpack.c.l.b16 %v1308
    %v1891 = vunpack.c.h.b16 %v1308
    %v1892 = vunpack.c.l.b16 %v1309
    %v1893 = vunpack.c.h.b16 %v1309
    %v1894 = vunpack.c.l.b16 %v1310
    %v1895 = vunpack.c.h.b16 %v1310
    %v1896 = vunpack.c.l.b16 %v1311
    %v1897 = vunpack.c.h.b16 %v1311
    %v1898 = vunpack.c.l.b16 %v1312
    %v1899 = vunpack.c.h.b16 %v1312
    %v1900 = vunpack.c.l.b16 %v1313
    %v1901 = vunpack.c.h.b16 %v1313
    %v1902 = vunpack.c.l.b16 %v1314
    %v1903 = vunpack.c.h.b16 %v1314
    %v1904 = vunpack.c.l.b16 %v1315
    %v1905 = vunpack.c.h.b16 %v1315
    %v1906 = vunpack.c.l.b16 %v1316
    %v1907 = vunpack.c.h.b16 %v1316
    %v1908 = vunpack.c.l.b16 %v1317
    %v1909 = vunpack.c.h.b16 %v1317
    %v1910 = vunpack.c.l.b16 %v1318
    %v1911 = vunpack.c.h.b16 %v1318
    %v1912 = vunpack.c.l.b16 %v1319
    %v1913 = vunpack.c.h.b16 %v1319
    %v1914 = vunpack.c.l.b16 %v1320
    %v1915 = vunpack.c.h.b16 %v1320
    %v1916 = vunpack.c.l.b16 %v1321
    %v1917 = vunpack.c.h.b16 %v1321
    %v1918 = vunpack.c.l.b16 %v1322
    %v1919 = vunpack.c.h.b16 %v1322
    %v1920 = vunpack.c.l.b16 %v1323
    %v1921 = vunpack.c.h.b16 %v1323
    %v1922 = vunpack.c.l.b16 %v1324
    %v1923 = vunpack.c.h.b16 %v1324
    %v1924 = vunpack.c.l.b16 %v1325
    %v1925 = vunpack.c.h.b16 %v1325
    %v1926 = vunpack.c.l.b16 %v1326
    %v1927 = vunpack.c.h.b16 %v1326
    %v1928 = vunpack.c.l.b16 %v1327
    %v1929 = vunpack.c.h.b16 %v1327
    %v1930 = vunpack.c.l.b16 %v1328
    %v1931 = vunpack.c.h.b16 %v1328
    %v1932 = vunpack.c.l.b16 %v1329
    %v1933 = vunpack.c.h.b16 %v1329
    %v1934 = vunpack.c.l.b16 %v1330
    %v1935 = vunpack.c.h.b16 %v1330
    %v1936 = vunpack.c.l.b16 %v1331
    %v1937 = vunpack.c.h.b16 %v1331
    %v1938 = vunpack.c.l.b16 %v1332
    %v1939 = vunpack.c.h.b16 %v1332
    %v1940 = vunpack.c.l.b16 %v1333
    %v1941 = vunpack.c.h.b16 %v1333
    %v1942 = vunpack.c.l.b16 %v1334
    %v1943 = vunpack.c.h.b16 %v1334
    %v1944 = vunpack.c.l.b16 %v1335
    %v1945 = vunpack.c.h.b16 %v1335
    %v1946 = vunpack.c.l.b16 %v1336
    %v1947 = vunpack.c.h.b16 %v1336
    %v1948 = vunpack.c.l.b16 %v1337
    %v1949 = vunpack.c.h.b16 %v1337
    %v1950 = vunpack.c.l.b16 %v1338
    %v1951 = vunpack.c.h.b16 %v1338
    %v1952 = vunpack.c.l.b16 %v1339
    %v1953 = vunpack.c.h.b16 %v1339
    %v1954 = vunpack.c.l.b16 %v1340
    %v1955 = vunpack.c.h.b16 %v1340
    %v1956 = vunpack.c.l.b16 %v1341
    %v1957 = vunpack.c.h.b16 %v1341
    %v1958 = vunpack.c.l.b16 %v1342
    %v1959 = vunpack.c.h.b16 %v1342
    %v1960 = vunpack.c.l.b16 %v1343
    %v1961 = vunpack.c.h.b16 %v1343
    %v1962 = vunpack.c.l.b16 %v1344
    %v1963 = vunpack.c.h.b16 %v1344
    %v1964 = vunpack.c.l.b16 %v1345
    %v1965 = vunpack.c.h.b16 %v1345
    %v1966 = vunpack.c.l.b16 %v1346
    %v1967 = vunpack.c.h.b16 %v1346
    %v1968 = vunpack.c.l.b16 %v1347
    %v1969 = vunpack.c.h.b16 %v1347
    %v1970 = vunpack.c.l.b16 %v1348
    %v1971 = vunpack.c.h.b16 %v1348
    %v1972 = vunpack.c.l.b16 %v1349
    %v1973 = vunpack.c.h.b16 %v1349
    %v1974 = vunpack.c.l.b16 %v1350
    %v1975 = vunpack.c.h.b16 %v1350
    %v1976 = vunpack.c.l.b16 %v1351
    %v1977 = vunpack.c.h.b16 %v1351
    %v1978 = vunpack.c.l.b16 %v1352
    %v1979 = vunpack.c.h.b16 %v1352
    %v1980 = vunpack.c.l.b16 %v1353
    %v1981 = vunpack.c.h.b16 %v1353
    %v1982 = vunpack.c.l.b16 %v1354
    %v1983 = vunpack.c.h.b16 %v1354
    %v1984 = vunpack.c.l.b16 %v1355
    %v1985 = vunpack.c.h.b16 %v1355
    %v1986 = vunpack.c.l.b16 %v1356
    %v1987 = vunpack.c.h.b16 %v1356
    %v1988 = vunpack.c.l.b16 %v1357
    %v1989 = vunpack.c.h.b16 %v1357
    %v1990 = vunpack.c.l.b16 %v1358
    %v1991 = vunpack.c.h.b16 %v1358
    %v1992 = vunpack.c.l.b16 %v1359
    %v1993 = vunpack.c.h.b16 %v1359
    %v1994 = vunpack.c.l.b16 %v1360
    %v1995 = vunpack.c.h.b16 %v1360
    %v1996 = vunpack.c.l.b16 %v1361
    %v1997 = vunpack.c.h.b16 %v1361
    %v1998 = vunpack.c.l.b16 %v1362
    %v1999 = vunpack.c.h.b16 %v1362
    %v2000 = vunpack.c.l.b16 %v1363
    %v2001 = vunpack.c.h.b16 %v1363
    %v2002 = vunpack.c.l.b16 %v1364
    %v2003 = vunpack.c.h.b16 %v1364
    %v2004 = vunpack.c.l.b16 %v1365
    %v2005 = vunpack.c.h.b16 %v1365
    %v2006 = vunpack.c.l.b16 %v1366
    %v2007 = vunpack.c.h.b16 %v1366
    %v2008 = vunpack.c.l.b16 %v1367
    %v2009 = vunpack.c.h.b16 %v1367
    %v2010 = vunpack.c.l.b16 %v1368
    %v2011 = vunpack.c.h.b16 %v1368
    %v2012 = vunpack.c.l.b16 %v1369
    %v2013 = vunpack.c.h.b16 %v1369
    %v2014 = vunpack.c.l.b16 %v1370
    %v2015 = vunpack.c.h.b16 %v1370
    %v2016 = vunpack.c.l.b16 %v1371
    %v2017 = vunpack.c.h.b16 %v1371
    %v2018 = vunpack.c.l.b16 %v1372
    %v2019 = vunpack.c.h.b16 %v1372
    %v2020 = vunpack.c.l.b16 %v1373
    %v2021 = vunpack.c.h.b16 %v1373
    %v2022 = vunpack.c.l.b16 %v1374
    %v2023 = vunpack.c.h.b16 %v1374
    %v2024 = vunpack.c.l.b16 %v1375
    %v2025 = vunpack.c.h.b16 %v1375
    %v2026 = vunpack.c.l.b16 %v1376
    %v2027 = vunpack.c.h.b16 %v1376
    %v2028 = vunpack.c.l.b16 %v1377
    %v2029 = vunpack.c.h.b16 %v1377
    %v2030 = vunpack.c.l.b16 %v1378
    %v2031 = vunpack.c.h.b16 %v1378
    %v2032 = vunpack.c.l.b16 %v1379
    %v2033 = vunpack.c.h.b16 %v1379
    %v2034 = vunpack.c.l.b16 %v1380
    %v2035 = vunpack.c.h.b16 %v1380
    %v2036 = vunpack.c.l.b16 %v1381
    %v2037 = vunpack.c.h.b16 %v1381
    %v2038 = vunpack.c.l.b16 %v1382
    %v2039 = vunpack.c.h.b16 %v1382
    %v2040 = vunpack.c.l.b16 %v1383
    %v2041 = vunpack.c.h.b16 %v1383
    %v2042 = vunpack.c.l.b16 %v1384
    %v2043 = vunpack.c.h.b16 %v1384
    %v2044 = vunpack.c.l.b16 %v1385
    %v2045 = vunpack.c.h.b16 %v1385
    %v2046 = vunpack.c.l.b16 %v1386
    %v2047 = vunpack.c.h.b16 %v1386
    %v2048 = vunpack.c.l.b16 %v1387
    %v2049 = vunpack.c.h.b16 %v1387
    %v2050 = vunpack.c.l.b16 %v1388
    %v2051 = vunpack.c.h.b16 %v1388
    %v2052 = vunpack.c.l.b16 %v1389
    %v2053 = vunpack.c.h.b16 %v1389
    %v2054 = vunpack.c.l.b16 %v1390
    %v2055 = vunpack.c.h.b16 %v1390
    %v2056 = vunpack.c.l.b16 %v1391
    %v2057 = vunpack.c.h.b16 %v1391
    %v2058 = vunpack.c.l.b16 %v1392
    %v2059 = vunpack.c.h.b16 %v1392
    %v2060 = vunpack.c.l.b16 %v1393
    %v2061 = vunpack.c.h.b16 %v1393
    %v2062 = vunpack.c.l.b16 %v1394
    %v2063 = vunpack.c.h.b16 %v1394
    %v2064 = vunpack.c.l.b16 %v1395
    %v2065 = vunpack.c.h.b16 %v1395
    %v2066 = vunpack.c.l.b16 %v1396
    %v2067 = vunpack.c.h.b16 %v1396
    %v2068 = vunpack.c.l.b16 %v1397
    %v2069 = vunpack.c.h.b16 %v1397
    %v2070 = vunpack.c.l.b16 %v1398
    %v2071 = vunpack.c.h.b16 %v1398
    %v2072 = vunpack.c.l.b16 %v1399
    %v2073 = vunpack.c.h.b16 %v1399
    %v2074 = vunpack.c.l.b16 %v1400
    %v2075 = vunpack.c.h.b16 %v1400
    %v2076 = vunpack.c.l.b16 %v1401
    %v2077 = vunpack.c.h.b16 %v1401
    %v2078 = vunpack.c.l.b16 %v1402
    %v2079 = vunpack.c.h.b16 %v1402
    %v2080 = vunpack.c.l.b16 %v1403
    %v2081 = vunpack.c.h.b16 %v1403
    %v2082 = vunpack.c.l.b16 %v1404
    %v2083 = vunpack.c.h.b16 %v1404
    %v2084 = vunpack.c.l.b16 %v1405
    %v2085 = vunpack.c.h.b16 %v1405
    %v2086 = vunpack.c.l.b16 %v1406
    %v2087 = vunpack.c.h.b16 %v1406
    %v2088 = vunpack.c.l.b16 %v1407
    %v2089 = vunpack.c.h.b16 %v1407
    %v2090 = vunpack.c.l.b16 %v1408
    %v2091 = vunpack.c.h.b16 %v1408
    %v2092 = vunpack.c.l.b16 %v1409
    %v2093 = vunpack.c.h.b16 %v1409
    %v2094 = vunpack.c.l.b16 %v1410
    %v2095 = vunpack.c.h.b16 %v1410
    %v2096 = vunpack.c.l.b16 %v1411
    %v2097 = vunpack.c.h.b16 %v1411
    %v2098 = vunpack.c.l.b16 %v1412
    %v2099 = vunpack.c.h.b16 %v1412
    %v2100 = vunpack.c.l.b16 %v1413
    %v2101 = vunpack.c.h.b16 %v1413
    %v2102 = vunpack.c.l.b16 %v1414
    %v2103 = vunpack.c.h.b16 %v1414
    %v2104 = vunpack.c.l.b16 %v1415
    %v2105 = vunpack.c.h.b16 %v1415
    %v2106 = vunpack.c.l.b16 %v1416
    %v2107 = vunpack.c.h.b16 %v1416
    %v2108 = vunpack.c.l.b16 %v1417
    %v2109 = vunpack.c.h.b16 %v1417
    %v2110 = vunpack.c.l.b16 %v1418
    %v2111 = vunpack.c.h.b16 %v1418
    %v2112 = vunpack.c.l.b16 %v1419
    %v2113 = vunpack.c.h.b16 %v1419
    %v2114 = vunpack.c.l.b16 %v1420
    %v2115 = vunpack.c.h.b16 %v1420
    %v2116 = vunpack.c.l.b16 %v1421
    %v2117 = vunpack.c.h.b16 %v1421
    %v2118 = vunpack.c.l.b16 %v1422
    %v2119 = vunpack.c.h.b16 %v1422
    %v2120 = vunpack.c.l.b16 %v1423
    %v2121 = vunpack.c.h.b16 %v1423
    %v2122 = vunpack.c.l.b16 %v1424
    %v2123 = vunpack.c.h.b16 %v1424
    %v2124 = vunpack.c.l.b16 %v1425
    %v2125 = vunpack.c.h.b16 %v1425
    %v2126 = vunpack.c.l.b16 %v1426
    %v2127 = vunpack.c.h.b16 %v1426
    %v2128 = vunpack.c.l.b16 %v1427
    %v2129 = vunpack.c.h.b16 %v1427
    %v2130 = vunpack.c.l.b16 %v1428
    %v2131 = vunpack.c.h.b16 %v1428
    %v2132 = vunpack.c.l.b16 %v1429
    %v2133 = vunpack.c.h.b16 %v1429
    %v2134 = vunpack.c.l.b16 %v1430
    %v2135 = vunpack.c.h.b16 %v1430
    %v2136 = vunpack.c.l.b16 %v1431
    %v2137 = vunpack.c.h.b16 %v1431
    %v2138 = vunpack.c.l.b16 %v1432
    %v2139 = vunpack.c.h.b16 %v1432
    %v2140 = vunpack.c.l.b16 %v1433
    %v2141 = vunpack.c.h.b16 %v1433
    %v2142 = vunpack.c.l.b16 %v1434
    %v2143 = vunpack.c.h.b16 %v1434
    %v2144 = vunpack.c.l.b16 %v1435
    %v2145 = vunpack.c.h.b16 %v1435
    %v2146 = vunpack.c.l.b16 %v1436
    %v2147 = vunpack.c.h.b16 %v1436
    %v2148 = vunpack.c.l.b16 %v1437
    %v2149 = vunpack.c.h.b16 %v1437
    %v2150 = vunpack.c.l.b16 %v1438
    %v2151 = vunpack.c.h.b16 %v1438
    %v2152 = vunpack.c.l.b16 %v1439
    %v2153 = vunpack.c.h.b16 %v1439
    %v2154 = vunpack.c.l.b16 %v1440
    %v2155 = vunpack.c.h.b16 %v1440
    %v2156 = vunpack.c.l.b16 %v1441
    %v2157 = vunpack.c.h.b16 %v1441
    %v2158 = vunpack.c.l.b16 %v1442
    %v2159 = vunpack.c.h.b16 %v1442
    %v2160 = vunpack.c.l.b16 %v1443
    %v2161 = vunpack.c.h.b16 %v1443
    %v2162 = vunpack.c.l.b16 %v1444
    %v2163 = vunpack.c.h.b16 %v1444
    %v2164 = vunpack.c.l.b16 %v1445
    %v2165 = vunpack.c.h.b16 %v1445
    %v2166 = vunpack.c.l.b16 %v1446
    %v2167 = vunpack.c.h.b16 %v1446
    %v2168 = vunpack.c.l.b16 %v1447
    %v2169 = vunpack.c.h.b16 %v1447
    %v2170 = vunpack.c.l.b16 %v1448
    %v2171 = vunpack.c.h.b16 %v1448
    %v2172 = vunpack.c.l.b16 %v1449
    %v2173 = vunpack.c.h.b16 %v1449
    %v2174 = vunpack.c.l.b16 %v1450
    %v2175 = vunpack.c.h.b16 %v1450
    %v2176 = vunpack.c.l.b16 %v1451
    %v2177 = vunpack.c.h.b16 %v1451
    %v2178 = vunpack.c.l.b16 %v1452
    %v2179 = vunpack.c.h.b16 %v1452
    %v2180 = vunpack.c.l.b16 %v1453
    %v2181 = vunpack.c.h.b16 %v1453
    %v2182 = vunpack.c.l.b16 %v1454
    %v2183 = vunpack.c.h.b16 %v1454
    %v2184 = vunpack.c.l.b16 %v1455
    %v2185 = vunpack.c.h.b16 %v1455
    %v2186 = vunpack.c.l.b16 %v1456
    %v2187 = vunpack.c.h.b16 %v1456
    %v2188 = vunpack.c.l.b16 %v1457
    %v2189 = vunpack.c.h.b16 %v1457
    %v2190 = vunpack.c.l.b16 %v1458
    %v2191 = vunpack.c.h.b16 %v1458
    %v2192 = vunpack.c.l.b16 %v1459
    %v2193 = vunpack.c.h.b16 %v1459
    %v2194 = vunpack.c.l.b16 %v1460
    %v2195 = vunpack.c.h.b16 %v1460
    %v2196 = vunpack.c.l.b16 %v1461
    %v2197 = vunpack.c.h.b16 %v1461
    %v2198 = vunpack.c.l.b16 %v1462
    %v2199 = vunpack.c.h.b16 %v1462
    %v2200 = vunpack.c.l.b16 %v1463
    %v2201 = vunpack.c.h.b16 %v1463
    %v2202 = vunpack.c.l.b16 %v1464
    %v2203 = vunpack.c.h.b16 %v1464
    %v2204 = vunpack.c.l.b16 %v1465
    %v2205 = vunpack.c.h.b16 %v1465
    %v2206 = vunpack.c.l.b16 %v1466
    %v2207 = vunpack.c.h.b16 %v1466
    %v2208 = vunpack.c.l.b16 %v1467
    %v2209 = vunpack.c.h.b16 %v1467
    %v2210 = vunpack.c.l.b16 %v1468
    %v2211 = vunpack.c.h.b16 %v1468
    %v2212 = vunpack.c.l.b16 %v1469
    %v2213 = vunpack.c.h.b16 %v1469
    %v2214 = vunpack.c.l.b16 %v1470
    %v2215 = vunpack.c.h.b16 %v1470
    %v2216 = vunpack.c.l.b16 %v1471
    %v2217 = vunpack.c.h.b16 %v1471
    %v2218 = vunpack.c.l.b16 %v1472
    %v2219 = vunpack.c.h.b16 %v1472
    %v2220 = vunpack.c.l.b16 %v1473
    %v2221 = vunpack.c.h.b16 %v1473
    %v2222 = vunpack.c.l.b16 %v1474
    %v2223 = vunpack.c.h.b16 %v1474
    %v2224 = vunpack.c.l.b16 %v1475
    %v2225 = vunpack.c.h.b16 %v1475
    %v2226 = vunpack.c.l.b16 %v1476
    %v2227 = vunpack.c.h.b16 %v1476
    %v2228 = vunpack.c.l.b16 %v1477
    %v2229 = vunpack.c.h.b16 %v1477
    %v2230 = vunpack.c.l.b16 %v1478
    %v2231 = vunpack.c.h.b16 %v1478
    %v2232 = vunpack.c.l.b16 %v1479
    %v2233 = vunpack.c.h.b16 %v1479
    %v2234 = vunpack.c.l.b16 %v1480
    %v2235 = vunpack.c.h.b16 %v1480
    %v2236 = vunpack.c.l.b16 %v1481
    %v2237 = vunpack.c.h.b16 %v1481
    %v2238 = vunpack.c.l.b16 %v1482
    %v2239 = vunpack.c.h.b16 %v1482
    %v2240 = vunpack.c.l.b16 %v1483
    %v2241 = vunpack.c.h.b16 %v1483
    %v2242 = vunpack.c.l.b16 %v1484
    %v2243 = vunpack.c.h.b16 %v1484
    %v2244 = vunpack.c.l.b16 %v1485
    %v2245 = vunpack.c.h.b16 %v1485
    %v2246 = vunpack.c.l.b16 %v1486
    %v2247 = vunpack.c.h.b16 %v1486
    %v2248 = vunpack.c.l.b16 %v1487
    %v2249 = vunpack.c.h.b16 %v1487
    %v2250 = vunpack.c.l.b16 %v1488
    %v2251 = vunpack.c.h.b16 %v1488
    %v2252 = vunpack.c.l.b16 %v1489
    %v2253 = vunpack.c.h.b16 %v1489
    %v2254 = vunpack.c.l.b16 %v1490
    %v2255 = vunpack.c.h.b16 %v1490
    %v2256 = vunpack.c.l.b16 %v1491
    %v2257 = vunpack.c.h.b16 %v1491
    %v2258 = vunpack.c.l.b16 %v1492
    %v2259 = vunpack.c.h.b16 %v1492
    %v2260 = vunpack.c.l.b16 %v1493
    %v2261 = vunpack.c.h.b16 %v1493
    %v2262 = vpack.c.b16 %v1758, %v1750
    %v2263 = vpack.c.b16 %v1759, %v1751
    %v2264 = vpack.c.b16 %v1760, %v1752
    %v2265 = vpack.c.b16 %v1761, %v1753
    %v2266 = vpack.c.b16 %v1762, %v1754
    %v2267 = vpack.c.b16 %v1763, %v1755
    %v2268 = vpack.c.b16 %v1764, %v1756
    %v2269 = vpack.c.b16 %v1765, %v1757
    %v2270 = vpack.c.b16 %v1774, %v1766
    %v2271 = vpack.c.b16 %v1775, %v1767
    %v2272 = vpack.c.b16 %v1776, %v1768
    %v2273 = vpack.c.b16 %v1777, %v1769
    %v2274 = vpack.c.b16 %v1778, %v1770
    %v2275 = vpack.c.b16 %v1779, %v1771
    %v2276 = vpack.c.b16 %v1780, %v1772
    %v2277 = vpack.c.b16 %v1781, %v1773
    %v2278 = vpack.c.b16 %v1790, %v1782
    %v2279 = vpack.c.b16 %v1791, %v1783
    %v2280 = vpack.c.b16 %v1792, %v1784
    %v2281 = vpack.c.b16 %v1793, %v1785
    %v2282 = vpack.c.b16 %v1794, %v1786
    %v2283 = vpack.c.b16 %v1795, %v1787
    %v2284 = vpack.c.b16 %v1796, %v1788
    %v2285 = vpack.c.b16 %v1797, %v1789
    %v2286 = vpack.c.b16 %v1806, %v1798
    %v2287 = vpack.c.b16 %v1807, %v1799
    %v2288 = vpack.c.b16 %v1808, %v1800
    %v2289 = vpack.c.b16 %v1809, %v1801
    %v2290 = vpack.c.b16 %v1810, %v1802
    %v2291 = vpack.c.b16 %v1811, %v1803
    %v2292 = vpack.c.b16 %v1812, %v1804
    %v2293 = vpack.c.b16 %v1813, %v1805
    %v2294 = vpack.c.b16 %v1822, %v1814
    %v2295 = vpack.c.b16 %v1823, %v1815
    %v2296 = vpack.c.b16 %v1824, %v1816
    %v2297 = vpack.c.b16 %v1825, %v1817
    %v2298 = vpack.c.b16 %v1826, %v1818
    %v2299 = vpack.c.b16 %v1827, %v1819
    %v2300 = vpack.c.b16 %v1828, %v1820
    %v2301 = vpack.c.b16 %v1829, %v1821
    %v2302 = vpack.c.b16 %v1838, %v1830
    %v2303 = vpack.c.b16 %v1839, %v1831
    %v2304 = vpack.c.b16 %v1840, %v1832
    %v2305 = vpack.c.b16 %v1841, %v1833
    %v2306 = vpack.c.b16 %v1842, %v1834
    %v2307 = vpack.c.b16 %v1843, %v1835
    %v2308 = vpack.c.b16 %v1844, %v1836
    %v2309 = vpack.c.b16 %v1845, %v1837
    %v2310 = vpack.c.b16 %v1854, %v1846
    %v2311 = vpack.c.b16 %v1855, %v1847
    %v2312 = vpack.c.b16 %v1856, %v1848
    %v2313 = vpack.c.b16 %v1857, %v1849
    %v2314 = vpack.c.b16 %v1858, %v1850
    %v2315 = vpack.c.b16 %v1859, %v1851
    %v2316 = vpack.c.b16 %v1860, %v1852
    %v2317 = vpack.c.b16 %v1861, %v1853
    %v2318 = vpack.c.b16 %v1870, %v1862
    %v2319 = vpack.c.b16 %v1871, %v1863
    %v2320 = vpack.c.b16 %v1872, %v1864
    %v2321 = vpack.c.b16 %v1873, %v1865
    %v2322 = vpack.c.b16 %v1874, %v1866
    %v2323 = vpack.c.b16 %v1875, %v1867
    %v2324 = vpack.c.b16 %v1876, %v1868
    %v2325 = vpack.c.b16 %v1877, %v1869
    %v2326 = vpack.c.b16 %v1886, %v1878
    %v2327 = vpack.c.b16 %v1887, %v1879
    %v2328 = vpack.c.b16 %v1888, %v1880
    %v2329 = vpack.c.b16 %v1889, %v1881
    %v2330 = vpack.c.b16 %v1890, %v1882
    %v2331 = vpack.c.b16 %v1891, %v1883
    %v2332 = vpack.c.b16 %v1892, %v1884
    %v2333 = vpack.c.b16 %v1893, %v1885
    %v2334 = vpack.c.b16 %v1902, %v1894
    %v2335 = vpack.c.b16 %v1903, %v1895
    %v2336 = vpack.c.b16 %v1904, %v1896
    %v2337 = vpack.c.b16 %v1905, %v1897
    %v2338 = vpack.c.b16 %v1906, %v1898
    %v2339 = vpack.c.b16 %v1907, %v1899
    %v2340 = vpack.c.b16 %v1908, %v1900
    %v2341 = vpack.c.b16 %v1909, %v1901
    %v2342 = vpack.c.b16 %v1918, %v1910
    %v2343 = vpack.c.b16 %v1919, %v1911
    %v2344 = vpack.c.b16 %v1920, %v1912
    %v2345 = vpack.c.b16 %v1921, %v1913
    %v2346 = vpack.c.b16 %v1922, %v1914
    %v2347 = vpack.c.b16 %v1923, %v1915
    %v2348 = vpack.c.b16 %v1924, %v1916
    %v2349 = vpack.c.b16 %v1925, %v1917
    %v2350 = vpack.c.b16 %v1934, %v1926
    %v2351 = vpack.c.b16 %v1935, %v1927
    %v2352 = vpack.c.b16 %v1936, %v1928
    %v2353 = vpack.c.b16 %v1937, %v1929
    %v2354 = vpack.c.b16 %v1938, %v1930
    %v2355 = vpack.c.b16 %v1939, %v1931
    %v2356 = vpack.c.b16 %v1940, %v1932
    %v2357 = vpack.c.b16 %v1941, %v1933
    %v2358 = vpack.c.b16 %v1950, %v1942
    %v2359 = vpack.c.b16 %v1951, %v1943
    %v2360 = vpack.c.b16 %v1952, %v1944
    %v2361 = vpack.c.b16 %v1953, %v1945
    %v2362 = vpack.c.b16 %v1954, %v1946
    %v2363 = vpack.c.b16 %v1955, %v1947
    %v2364 = vpack.c.b16 %v1956, %v1948
    %v2365 = vpack.c.b16 %v1957, %v1949
    %v2366 = vpack.c.b16 %v1966, %v1958
    %v2367 = vpack.c.b16 %v1967, %v1959
    %v2368 = vpack.c.b16 %v1968, %v1960
    %v2369 = vpack.c.b16 %v1969, %v1961
    %v2370 = vpack.c.b16 %v1970, %v1962
    %v2371 = vpack.c.b16 %v1971, %v1963
    %v2372 = vpack.c.b16 %v1972, %v1964
    %v2373 = vpack.c.b16 %v1973, %v1965
    %v2374 = vpack.c.b16 %v1982, %v1974
    %v2375 = vpack.c.b16 %v1983, %v1975
    %v2376 = vpack.c.b16 %v1984, %v1976
    %v2377 = vpack.c.b16 %v1985, %v1977
    %v2378 = vpack.c.b16 %v1986, %v1978
    %v2379 = vpack.c.b16 %v1987, %v1979
    %v2380 = vpack.c.b16 %v1988, %v1980
    %v2381 = vpack.c.b16 %v1989, %v1981
    %v2382 = vpack.c.b16 %v1998, %v1990
    %v2383 = vpack.c.b16 %v1999, %v1991
    %v2384 = vpack.c.b16 %v2000, %v1992
    %v2385 = vpack.c.b16 %v2001, %v1993
    %v2386 = vpack.c.b16 %v2002, %v1994
    %v2387 = vpack.c.b16 %v2003, %v1995
    %v2388 = vpack.c.b16 %v2004, %v1996
    %v2389 = vpack.c.b16 %v2005, %v1997
    %v2390 = vpack.c.b16 %v2014, %v2006
    %v2391 = vpack.c.b16 %v2015, %v2007
    %v2392 = vpack.c.b16 %v2016, %v2008
    %v2393 = vpack.c.b16 %v2017, %v2009
    %v2394 = vpack.c.b16 %v2018, %v2010
    %v2395 = vpack.c.b16 %v2019, %v2011
    %v2396 = vpack.c.b16 %v2020, %v2012
    %v2397 = vpack.c.b16 %v2021, %v2013
    %v2398 = vpack.c.b16 %v2030, %v2022
    %v2399 = vpack.c.b16 %v2031, %v2023
    %v2400 = vpack.c.b16 %v2032, %v2024
    %v2401 = vpack.c.b16 %v2033, %v2025
    %v2402 = vpack.c.b16 %v2034, %v2026
    %v2403 = vpack.c.b16 %v2035, %v2027
    %v2404 = vpack.c.b16 %v2036, %v2028
    %v2405 = vpack.c.b16 %v2037, %v2029
    %v2406 = vpack.c.b16 %v2046, %v2038
    %v2407 = vpack.c.b16 %v2047, %v2039
    %v2408 = vpack.c.b16 %v2048, %v2040
    %v2409 = vpack.c.b16 %v2049, %v2041
    %v2410 = vpack.c.b16 %v2050, %v2042
    %v2411 = vpack.c.b16 %v2051, %v2043
    %v2412 = vpack.c.b16 %v2052, %v2044
    %v2413 = vpack.c.b16 %v2053, %v2045
    %v2414 = vpack.c.b16 %v2062, %v2054
    %v2415 = vpack.c.b16 %v2063, %v2055
    %v2416 = vpack.c.b16 %v2064, %v2056
    %v2417 = vpack.c.b16 %v2065, %v2057
    %v2418 = vpack.c.b16 %v2066, %v2058
    %v2419 = vpack.c.b16 %v2067, %v2059
    %v2420 = vpack.c.b16 %v2068, %v2060
    %v2421 = vpack.c.b16 %v2069, %v2061
    %v2422 = vpack.c.b16 %v2078, %v2070
    %v2423 = vpack.c.b16 %v2079, %v2071
    %v2424 = vpack.c.b16 %v2080, %v2072
    %v2425 = vpack.c.b16 %v2081, %v2073
    %v2426 = vpack.c.b16 %v2082, %v2074
    %v2427 = vpack.c.b16 %v2083, %v2075
    %v2428 = vpack.c.b16 %v2084, %v2076
    %v2429 = vpack.c.b16 %v2085, %v2077
    %v2430 = vpack.c.b16 %v2094, %v2086
    %v2431 = vpack.c.b16 %v2095, %v2087
    %v2432 = vpack.c.b16 %v2096, %v2088
    %v2433 = vpack.c.b16 %v2097, %v2089
    %v2434 = vpack.c.b16 %v2098, %v2090
    %v2435 = vpack.c.b16 %v2099, %v2091
    %v2436 = vpack.c.b16 %v2100, %v2092
    %v2437 = vpack.c.b16 %v2101, %v2093
    %v2438 = vpack.c.b16 %v2110, %v2102
    %v2439 = vpack.c.b16 %v2111, %v2103
    %v2440 = vpack.c.b16 %v2112, %v2104
    %v2441 = vpack.c.b16 %v2113, %v2105
    %v2442 = vpack.c.b16 %v2114, %v2106
    %v2443 = vpack.c.b16 %v2115, %v2107
    %v2444 = vpack.c.b16 %v2116, %v2108
    %v2445 = vpack.c.b16 %v2117, %v2109
    %v2446 = vpack.c.b16 %v2126, %v2118
    %v2447 = vpack.c.b16 %v2127, %v2119
    %v2448 = vpack.c.b16 %v2128, %v2120
    %v2449 = vpack.c.b16 %v2129, %v2121
    %v2450 = vpack.c.b16 %v2130, %v2122
    %v2451 = vpack.c.b16 %v2131, %v2123
    %v2452 = vpack.c.b16 %v2132, %v2124
    %v2453 = vpack.c.b16 %v2133, %v2125
    %v2454 = vpack.c.b16 %v2142, %v2134
    %v2455 = vpack.c.b16 %v2143, %v2135
    %v2456 = vpack.c.b16 %v2144, %v2136
    %v2457 = vpack.c.b16 %v2145, %v2137
    %v2458 = vpack.c.b16 %v2146, %v2138
    %v2459 = vpack.c.b16 %v2147, %v2139
    %v2460 = vpack.c.b16 %v2148, %v2140
    %v2461 = vpack.c.b16 %v2149, %v2141
    %v2462 = vpack.c.b16 %v2158, %v2150
    %v2463 = vpack.c.b16 %v2159, %v2151
    %v2464 = vpack.c.b16 %v2160, %v2152
    %v2465 = vpack.c.b16 %v2161, %v2153
    %v2466 = vpack.c.b16 %v2162, %v2154
    %v2467 = vpack.c.b16 %v2163, %v2155
    %v2468 = vpack.c.b16 %v2164, %v2156
    %v2469 = vpack.c.b16 %v2165, %v2157
    %v2470 = vpack.c.b16 %v2174, %v2166
    %v2471 = vpack.c.b16 %v2175, %v2167
    %v2472 = vpack.c.b16 %v2176, %v2168
    %v2473 = vpack.c.b16 %v2177, %v2169
    %v2474 = vpack.c.b16 %v2178, %v2170
    %v2475 = vpack.c.b16 %v2179, %v2171
    %v2476 = vpack.c.b16 %v2180, %v2172
    %v2477 = vpack.c.b16 %v2181, %v2173
    %v2478 = vpack.c.b16 %v2190, %v2182
    %v2479 = vpack.c.b16 %v2191, %v2183
    %v2480 = vpack.c.b16 %v2192, %v2184
    %v2481 = vpack.c.b16 %v2193, %v2185
    %v2482 = vpack.c.b16 %v2194, %v2186
    %v2483 = vpack.c.b16 %v2195, %v2187
    %v2484 = vpack.c.b16 %v2196, %v2188
    %v2485 = vpack.c.b16 %v2197, %v2189
    %v2486 = vpack.c.b16 %v2206, %v2198
    %v2487 = vpack.c.b16 %v2207, %v2199
    %v2488 = vpack.c.b16 %v2208, %v2200
    %v2489 = vpack.c.b16 %v2209, %v2201
    %v2490 = vpack.c.b16 %v2210, %v2202
    %v2491 = vpack.c.b16 %v2211, %v2203
    %v2492 = vpack.c.b16 %v2212, %v2204
    %v2493 = vpack.c.b16 %v2213, %v2205
    %v2494 = vpack.c.b16 %v2222, %v2214
    %v2495 = vpack.c.b16 %v2223, %v2215
    %v2496 = vpack.c.b16 %v2224, %v2216
    %v2497 = vpack.c.b16 %v2225, %v2217
    %v2498 = vpack.c.b16 %v2226, %v2218
    %v2499 = vpack.c.b16 %v2227, %v2219
    %v2500 = vpack.c.b16 %v2228, %v2220
    %v2501 = vpack.c.b16 %v2229, %v2221
    %v2502 = vpack.c.b16 %v2238, %v2230
    %v2503 = vpack.c.b16 %v2239, %v2231
    %v2504 = vpack.c.b16 %v2240, %v2232
    %v2505 = vpack.c.b16 %v2241, %v2233
    %v2506 = vpack.c.b16 %v2242, %v2234
    %v2507 = vpack.c.b16 %v2243, %v2235
    %v2508 = vpack.c.b16 %v2244, %v2236
    %v2509 = vpack.c.b16 %v2245, %v2237
    %v2510 = vpack.c.b16 %v2254, %v2246
    %v2511 = vpack.c.b16 %v2255, %v2247
    %v2512 = vpack.c.b16 %v2256, %v2248
    %v2513 = vpack.c.b16 %v2257, %v2249
    %v2514 = vpack.c.b16 %v2258, %v2250
    %v2515 = vpack.c.b16 %v2259, %v2251
    %v2516 = vpack.c.b16 %v2260, %v2252
    %v2517 = vpack.c.b16 %v2261, %v2253
    %2774 = vmatpush.bf16.msra.mxu0 %v2318
    %2775 = vmatpush.bf16.msra.mxu0 %v2310
    %2776 = vmatpush.bf16.msra.mxu0 %v2302
    %2777 = vmatpush.bf16.msra.mxu0 %v2294
    %2778 = vmatpush.bf16.msra.mxu0 %v2286
    %2779 = vmatpush.bf16.msra.mxu0 %v2278
    %2780 = vmatpush.bf16.msra.mxu0 %v2270
    %2781 = vmatpush.bf16.msra.mxu0 %v2262
    %2782 = vmatmul.bf16.gmra.mxu0 %v1234
    %v2783 = vpop.f32.mrf.mxu0
    %v2784 = vadd.f32 0.0, %v2783
    %v2785 = vpop.f32.mrf.mxu0
    %2786 = vdwg.mxu0
    %2787 = vmatpush.bf16.msra.mxu0 %v2382
    %2788 = vmatpush.bf16.msra.mxu0 %v2374
    %2789 = vmatpush.bf16.msra.mxu0 %v2366
    %2790 = vmatpush.bf16.msra.mxu0 %v2358
    %2791 = vmatpush.bf16.msra.mxu0 %v2350
    %2792 = vmatpush.bf16.msra.mxu0 %v2342
    %2793 = vmatpush.bf16.msra.mxu0 %v2334
    %2794 = vmatpush.bf16.msra.mxu0 %v2326
    %2795 = vmatmul.bf16.gmra.mxu0 %v1235
    %v2796 = vpop.f32.mrf.mxu0
    %v2797 = vadd.f32 %v2784, %v2796
    %v2798 = vpop.f32.mrf.mxu0
    %2799 = vdwg.mxu0
    %2800 = vmatpush.bf16.msra.mxu0 %v2446
    %2801 = vmatpush.bf16.msra.mxu0 %v2438
    %2802 = vmatpush.bf16.msra.mxu0 %v2430
    %2803 = vmatpush.bf16.msra.mxu0 %v2422
    %2804 = vmatpush.bf16.msra.mxu0 %v2414
    %2805 = vmatpush.bf16.msra.mxu0 %v2406
    %2806 = vmatpush.bf16.msra.mxu0 %v2398
    %2807 = vmatpush.bf16.msra.mxu0 %v2390
    %2808 = vmatmul.bf16.gmra.mxu0 %v1236
    %v2809 = vpop.f32.mrf.mxu0
    %v2810 = vadd.f32 %v2797, %v2809
    %v2811 = vpop.f32.mrf.mxu0
    %2812 = vdwg.mxu0
    %2813 = vmatpush.bf16.msra.mxu0 %v2510
    %2814 = vmatpush.bf16.msra.mxu0 %v2502
    %2815 = vmatpush.bf16.msra.mxu0 %v2494
    %2816 = vmatpush.bf16.msra.mxu0 %v2486
    %2817 = vmatpush.bf16.msra.mxu0 %v2478
    %2818 = vmatpush.bf16.msra.mxu0 %v2470
    %2819 = vmatpush.bf16.msra.mxu0 %v2462
    %2820 = vmatpush.bf16.msra.mxu0 %v2454
    %2821 = vmatmul.bf16.gmra.mxu0 %v1237
    %v2822 = vpop.f32.mrf.mxu0
    %v2823 = vadd.f32 %v2810, %v2822
    %v2824 = vpop.f32.mrf.mxu0
    %2825 = vdwg.mxu0
    %2826 = vmatpush.bf16.msra.mxu0 %v2319
    %2827 = vmatpush.bf16.msra.mxu0 %v2311
    %2828 = vmatpush.bf16.msra.mxu0 %v2303
    %2829 = vmatpush.bf16.msra.mxu0 %v2295
    %2830 = vmatpush.bf16.msra.mxu0 %v2287
    %2831 = vmatpush.bf16.msra.mxu0 %v2279
    %2832 = vmatpush.bf16.msra.mxu0 %v2271
    %2833 = vmatpush.bf16.msra.mxu0 %v2263
    %2834 = vmatmul.bf16.gmra.mxu0 %v1234
    %v2835 = vpop.f32.mrf.mxu0
    %v2836 = vadd.f32 0.0, %v2835
    %v2837 = vpop.f32.mrf.mxu0
    %2838 = vdwg.mxu0
    %2839 = vmatpush.bf16.msra.mxu0 %v2383
    %2840 = vmatpush.bf16.msra.mxu0 %v2375
    %2841 = vmatpush.bf16.msra.mxu0 %v2367
    %2842 = vmatpush.bf16.msra.mxu0 %v2359
    %2843 = vmatpush.bf16.msra.mxu0 %v2351
    %2844 = vmatpush.bf16.msra.mxu0 %v2343
    %2845 = vmatpush.bf16.msra.mxu0 %v2335
    %2846 = vmatpush.bf16.msra.mxu0 %v2327
    %2847 = vmatmul.bf16.gmra.mxu0 %v1235
    %v2848 = vpop.f32.mrf.mxu0
    %v2849 = vadd.f32 %v2836, %v2848
    %v2850 = vpop.f32.mrf.mxu0
    %2851 = vdwg.mxu0
    %2852 = vmatpush.bf16.msra.mxu0 %v2447
    %2853 = vmatpush.bf16.msra.mxu0 %v2439
    %2854 = vmatpush.bf16.msra.mxu0 %v2431
    %2855 = vmatpush.bf16.msra.mxu0 %v2423
    %2856 = vmatpush.bf16.msra.mxu0 %v2415
    %2857 = vmatpush.bf16.msra.mxu0 %v2407
    %2858 = vmatpush.bf16.msra.mxu0 %v2399
    %2859 = vmatpush.bf16.msra.mxu0 %v2391
    %2860 = vmatmul.bf16.gmra.mxu0 %v1236
    %v2861 = vpop.f32.mrf.mxu0
    %v2862 = vadd.f32 %v2849, %v2861
    %v2863 = vpop.f32.mrf.mxu0
    %2864 = vdwg.mxu0
    %2865 = vmatpush.bf16.msra.mxu0 %v2511
    %2866 = vmatpush.bf16.msra.mxu0 %v2503
    %2867 = vmatpush.bf16.msra.mxu0 %v2495
    %2868 = vmatpush.bf16.msra.mxu0 %v2487
    %2869 = vmatpush.bf16.msra.mxu0 %v2479
    %2870 = vmatpush.bf16.msra.mxu0 %v2471
    %2871 = vmatpush.bf16.msra.mxu0 %v2463
    %2872 = vmatpush.bf16.msra.mxu0 %v2455
    %2873 = vmatmul.bf16.gmra.mxu0 %v1237
    %v2874 = vpop.f32.mrf.mxu0
    %v2875 = vadd.f32 %v2862, %v2874
    %v2876 = vpop.f32.mrf.mxu0
    %2877 = vdwg.mxu0
    %2878 = vmatpush.bf16.msra.mxu0 %v2320
    %2879 = vmatpush.bf16.msra.mxu0 %v2312
    %2880 = vmatpush.bf16.msra.mxu0 %v2304
    %2881 = vmatpush.bf16.msra.mxu0 %v2296
    %2882 = vmatpush.bf16.msra.mxu0 %v2288
    %2883 = vmatpush.bf16.msra.mxu0 %v2280
    %2884 = vmatpush.bf16.msra.mxu0 %v2272
    %2885 = vmatpush.bf16.msra.mxu0 %v2264
    %2886 = vmatmul.bf16.gmra.mxu0 %v1234
    %v2887 = vpop.f32.mrf.mxu0
    %v2888 = vadd.f32 0.0, %v2887
    %v2889 = vpop.f32.mrf.mxu0
    %2890 = vdwg.mxu0
    %2891 = vmatpush.bf16.msra.mxu0 %v2384
    %2892 = vmatpush.bf16.msra.mxu0 %v2376
    %2893 = vmatpush.bf16.msra.mxu0 %v2368
    %2894 = vmatpush.bf16.msra.mxu0 %v2360
    %2895 = vmatpush.bf16.msra.mxu0 %v2352
    %2896 = vmatpush.bf16.msra.mxu0 %v2344
    %2897 = vmatpush.bf16.msra.mxu0 %v2336
    %2898 = vmatpush.bf16.msra.mxu0 %v2328
    %2899 = vmatmul.bf16.gmra.mxu0 %v1235
    %v2900 = vpop.f32.mrf.mxu0
    %v2901 = vadd.f32 %v2888, %v2900
    %v2902 = vpop.f32.mrf.mxu0
    %2903 = vdwg.mxu0
    %2904 = vmatpush.bf16.msra.mxu0 %v2448
    %2905 = vmatpush.bf16.msra.mxu0 %v2440
    %2906 = vmatpush.bf16.msra.mxu0 %v2432
    %2907 = vmatpush.bf16.msra.mxu0 %v2424
    %2908 = vmatpush.bf16.msra.mxu0 %v2416
    %2909 = vmatpush.bf16.msra.mxu0 %v2408
    %2910 = vmatpush.bf16.msra.mxu0 %v2400
    %2911 = vmatpush.bf16.msra.mxu0 %v2392
    %2912 = vmatmul.bf16.gmra.mxu0 %v1236
    %v2913 = vpop.f32.mrf.mxu0
    %v2914 = vadd.f32 %v2901, %v2913
    %v2915 = vpop.f32.mrf.mxu0
    %2916 = vdwg.mxu0
    %2917 = vmatpush.bf16.msra.mxu0 %v2512
    %2918 = vmatpush.bf16.msra.mxu0 %v2504
    %2919 = vmatpush.bf16.msra.mxu0 %v2496
    %2920 = vmatpush.bf16.msra.mxu0 %v2488
    %2921 = vmatpush.bf16.msra.mxu0 %v2480
    %2922 = vmatpush.bf16.msra.mxu0 %v2472
    %2923 = vmatpush.bf16.msra.mxu0 %v2464
    %2924 = vmatpush.bf16.msra.mxu0 %v2456
    %2925 = vmatmul.bf16.gmra.mxu0 %v1237
    %v2926 = vpop.f32.mrf.mxu0
    %v2927 = vadd.f32 %v2914, %v2926
    %v2928 = vpop.f32.mrf.mxu0
    %2929 = vdwg.mxu0
    %2930 = vmatpush.bf16.msra.mxu0 %v2321
    %2931 = vmatpush.bf16.msra.mxu0 %v2313
    %2932 = vmatpush.bf16.msra.mxu0 %v2305
    %2933 = vmatpush.bf16.msra.mxu0 %v2297
    %2934 = vmatpush.bf16.msra.mxu0 %v2289
    %2935 = vmatpush.bf16.msra.mxu0 %v2281
    %2936 = vmatpush.bf16.msra.mxu0 %v2273
    %2937 = vmatpush.bf16.msra.mxu0 %v2265
    %2938 = vmatmul.bf16.gmra.mxu0 %v1234
    %v2939 = vpop.f32.mrf.mxu0
    %v2940 = vadd.f32 0.0, %v2939
    %v2941 = vpop.f32.mrf.mxu0
    %2942 = vdwg.mxu0
    %2943 = vmatpush.bf16.msra.mxu0 %v2385
    %2944 = vmatpush.bf16.msra.mxu0 %v2377
    %2945 = vmatpush.bf16.msra.mxu0 %v2369
    %2946 = vmatpush.bf16.msra.mxu0 %v2361
    %2947 = vmatpush.bf16.msra.mxu0 %v2353
    %2948 = vmatpush.bf16.msra.mxu0 %v2345
    %2949 = vmatpush.bf16.msra.mxu0 %v2337
    %2950 = vmatpush.bf16.msra.mxu0 %v2329
    %2951 = vmatmul.bf16.gmra.mxu0 %v1235
    %v2952 = vpop.f32.mrf.mxu0
    %v2953 = vadd.f32 %v2940, %v2952
    %v2954 = vpop.f32.mrf.mxu0
    %2955 = vdwg.mxu0
    %2956 = vmatpush.bf16.msra.mxu0 %v2449
    %2957 = vmatpush.bf16.msra.mxu0 %v2441
    %2958 = vmatpush.bf16.msra.mxu0 %v2433
    %2959 = vmatpush.bf16.msra.mxu0 %v2425
    %2960 = vmatpush.bf16.msra.mxu0 %v2417
    %2961 = vmatpush.bf16.msra.mxu0 %v2409
    %2962 = vmatpush.bf16.msra.mxu0 %v2401
    %2963 = vmatpush.bf16.msra.mxu0 %v2393
    %2964 = vmatmul.bf16.gmra.mxu0 %v1236
    %v2965 = vpop.f32.mrf.mxu0
    %v2966 = vadd.f32 %v2953, %v2965
    %v2967 = vpop.f32.mrf.mxu0
    %2968 = vdwg.mxu0
    %2969 = vmatpush.bf16.msra.mxu0 %v2513
    %2970 = vmatpush.bf16.msra.mxu0 %v2505
    %2971 = vmatpush.bf16.msra.mxu0 %v2497
    %2972 = vmatpush.bf16.msra.mxu0 %v2489
    %2973 = vmatpush.bf16.msra.mxu0 %v2481
    %2974 = vmatpush.bf16.msra.mxu0 %v2473
    %2975 = vmatpush.bf16.msra.mxu0 %v2465
    %2976 = vmatpush.bf16.msra.mxu0 %v2457
    %2977 = vmatmul.bf16.gmra.mxu0 %v1237
    %v2978 = vpop.f32.mrf.mxu0
    %v2979 = vadd.f32 %v2966, %v2978
    %v2980 = vpop.f32.mrf.mxu0
    %2981 = vdwg.mxu0
    %2982 = vmatpush.bf16.msra.mxu0 %v2322
    %2983 = vmatpush.bf16.msra.mxu0 %v2314
    %2984 = vmatpush.bf16.msra.mxu0 %v2306
    %2985 = vmatpush.bf16.msra.mxu0 %v2298
    %2986 = vmatpush.bf16.msra.mxu0 %v2290
    %2987 = vmatpush.bf16.msra.mxu0 %v2282
    %2988 = vmatpush.bf16.msra.mxu0 %v2274
    %2989 = vmatpush.bf16.msra.mxu0 %v2266
    %2990 = vmatmul.bf16.gmra.mxu0 %v1234
    %v2991 = vpop.f32.mrf.mxu0
    %v2992 = vadd.f32 0.0, %v2991
    %v2993 = vpop.f32.mrf.mxu0
    %2994 = vdwg.mxu0
    %2995 = vmatpush.bf16.msra.mxu0 %v2386
    %2996 = vmatpush.bf16.msra.mxu0 %v2378
    %2997 = vmatpush.bf16.msra.mxu0 %v2370
    %2998 = vmatpush.bf16.msra.mxu0 %v2362
    %2999 = vmatpush.bf16.msra.mxu0 %v2354
    %3000 = vmatpush.bf16.msra.mxu0 %v2346
    %3001 = vmatpush.bf16.msra.mxu0 %v2338
    %3002 = vmatpush.bf16.msra.mxu0 %v2330
    %3003 = vmatmul.bf16.gmra.mxu0 %v1235
    %v3004 = vpop.f32.mrf.mxu0
    %v3005 = vadd.f32 %v2992, %v3004
    %v3006 = vpop.f32.mrf.mxu0
    %3007 = vdwg.mxu0
    %3008 = vmatpush.bf16.msra.mxu0 %v2450
    %3009 = vmatpush.bf16.msra.mxu0 %v2442
    %3010 = vmatpush.bf16.msra.mxu0 %v2434
    %3011 = vmatpush.bf16.msra.mxu0 %v2426
    %3012 = vmatpush.bf16.msra.mxu0 %v2418
    %3013 = vmatpush.bf16.msra.mxu0 %v2410
    %3014 = vmatpush.bf16.msra.mxu0 %v2402
    %3015 = vmatpush.bf16.msra.mxu0 %v2394
    %3016 = vmatmul.bf16.gmra.mxu0 %v1236
    %v3017 = vpop.f32.mrf.mxu0
    %v3018 = vadd.f32 %v3005, %v3017
    %v3019 = vpop.f32.mrf.mxu0
    %3020 = vdwg.mxu0
    %3021 = vmatpush.bf16.msra.mxu0 %v2514
    %3022 = vmatpush.bf16.msra.mxu0 %v2506
    %3023 = vmatpush.bf16.msra.mxu0 %v2498
    %3024 = vmatpush.bf16.msra.mxu0 %v2490
    %3025 = vmatpush.bf16.msra.mxu0 %v2482
    %3026 = vmatpush.bf16.msra.mxu0 %v2474
    %3027 = vmatpush.bf16.msra.mxu0 %v2466
    %3028 = vmatpush.bf16.msra.mxu0 %v2458
    %3029 = vmatmul.bf16.gmra.mxu0 %v1237
    %v3030 = vpop.f32.mrf.mxu0
    %v3031 = vadd.f32 %v3018, %v3030
    %v3032 = vpop.f32.mrf.mxu0
    %3033 = vdwg.mxu0
    %3034 = vmatpush.bf16.msra.mxu0 %v2323
    %3035 = vmatpush.bf16.msra.mxu0 %v2315
    %3036 = vmatpush.bf16.msra.mxu0 %v2307
    %3037 = vmatpush.bf16.msra.mxu0 %v2299
    %3038 = vmatpush.bf16.msra.mxu0 %v2291
    %3039 = vmatpush.bf16.msra.mxu0 %v2283
    %3040 = vmatpush.bf16.msra.mxu0 %v2275
    %3041 = vmatpush.bf16.msra.mxu0 %v2267
    %3042 = vmatmul.bf16.gmra.mxu0 %v1234
    %v3043 = vpop.f32.mrf.mxu0
    %v3044 = vadd.f32 0.0, %v3043
    %v3045 = vpop.f32.mrf.mxu0
    %3046 = vdwg.mxu0
    %3047 = vmatpush.bf16.msra.mxu0 %v2387
    %3048 = vmatpush.bf16.msra.mxu0 %v2379
    %3049 = vmatpush.bf16.msra.mxu0 %v2371
    %3050 = vmatpush.bf16.msra.mxu0 %v2363
    %3051 = vmatpush.bf16.msra.mxu0 %v2355
    %3052 = vmatpush.bf16.msra.mxu0 %v2347
    %3053 = vmatpush.bf16.msra.mxu0 %v2339
    %3054 = vmatpush.bf16.msra.mxu0 %v2331
    %3055 = vmatmul.bf16.gmra.mxu0 %v1235
    %v3056 = vpop.f32.mrf.mxu0
    %v3057 = vadd.f32 %v3044, %v3056
    %v3058 = vpop.f32.mrf.mxu0
    %3059 = vdwg.mxu0
    %3060 = vmatpush.bf16.msra.mxu0 %v2451
    %3061 = vmatpush.bf16.msra.mxu0 %v2443
    %3062 = vmatpush.bf16.msra.mxu0 %v2435
    %3063 = vmatpush.bf16.msra.mxu0 %v2427
    %3064 = vmatpush.bf16.msra.mxu0 %v2419
    %3065 = vmatpush.bf16.msra.mxu0 %v2411
    %3066 = vmatpush.bf16.msra.mxu0 %v2403
    %3067 = vmatpush.bf16.msra.mxu0 %v2395
    %3068 = vmatmul.bf16.gmra.mxu0 %v1236
    %v3069 = vpop.f32.mrf.mxu0
    %v3070 = vadd.f32 %v3057, %v3069
    %v3071 = vpop.f32.mrf.mxu0
    %3072 = vdwg.mxu0
    %3073 = vmatpush.bf16.msra.mxu0 %v2515
    %3074 = vmatpush.bf16.msra.mxu0 %v2507
    %3075 = vmatpush.bf16.msra.mxu0 %v2499
    %3076 = vmatpush.bf16.msra.mxu0 %v2491
    %3077 = vmatpush.bf16.msra.mxu0 %v2483
    %3078 = vmatpush.bf16.msra.mxu0 %v2475
    %3079 = vmatpush.bf16.msra.mxu0 %v2467
    %3080 = vmatpush.bf16.msra.mxu0 %v2459
    %3081 = vmatmul.bf16.gmra.mxu0 %v1237
    %v3082 = vpop.f32.mrf.mxu0
    %v3083 = vadd.f32 %v3070, %v3082
    %v3084 = vpop.f32.mrf.mxu0
    %3085 = vdwg.mxu0
    %3086 = vmatpush.bf16.msra.mxu0 %v2324
    %3087 = vmatpush.bf16.msra.mxu0 %v2316
    %3088 = vmatpush.bf16.msra.mxu0 %v2308
    %3089 = vmatpush.bf16.msra.mxu0 %v2300
    %3090 = vmatpush.bf16.msra.mxu0 %v2292
    %3091 = vmatpush.bf16.msra.mxu0 %v2284
    %3092 = vmatpush.bf16.msra.mxu0 %v2276
    %3093 = vmatpush.bf16.msra.mxu0 %v2268
    %3094 = vmatmul.bf16.gmra.mxu0 %v1234
    %v3095 = vpop.f32.mrf.mxu0
    %v3096 = vadd.f32 0.0, %v3095
    %v3097 = vpop.f32.mrf.mxu0
    %3098 = vdwg.mxu0
    %3099 = vmatpush.bf16.msra.mxu0 %v2388
    %3100 = vmatpush.bf16.msra.mxu0 %v2380
    %3101 = vmatpush.bf16.msra.mxu0 %v2372
    %3102 = vmatpush.bf16.msra.mxu0 %v2364
    %3103 = vmatpush.bf16.msra.mxu0 %v2356
    %3104 = vmatpush.bf16.msra.mxu0 %v2348
    %3105 = vmatpush.bf16.msra.mxu0 %v2340
    %3106 = vmatpush.bf16.msra.mxu0 %v2332
    %3107 = vmatmul.bf16.gmra.mxu0 %v1235
    %v3108 = vpop.f32.mrf.mxu0
    %v3109 = vadd.f32 %v3096, %v3108
    %v3110 = vpop.f32.mrf.mxu0
    %3111 = vdwg.mxu0
    %3112 = vmatpush.bf16.msra.mxu0 %v2452
    %3113 = vmatpush.bf16.msra.mxu0 %v2444
    %3114 = vmatpush.bf16.msra.mxu0 %v2436
    %3115 = vmatpush.bf16.msra.mxu0 %v2428
    %3116 = vmatpush.bf16.msra.mxu0 %v2420
    %3117 = vmatpush.bf16.msra.mxu0 %v2412
    %3118 = vmatpush.bf16.msra.mxu0 %v2404
    %3119 = vmatpush.bf16.msra.mxu0 %v2396
    %3120 = vmatmul.bf16.gmra.mxu0 %v1236
    %v3121 = vpop.f32.mrf.mxu0
    %v3122 = vadd.f32 %v3109, %v3121
    %v3123 = vpop.f32.mrf.mxu0
    %3124 = vdwg.mxu0
    %3125 = vmatpush.bf16.msra.mxu0 %v2516
    %3126 = vmatpush.bf16.msra.mxu0 %v2508
    %3127 = vmatpush.bf16.msra.mxu0 %v2500
    %3128 = vmatpush.bf16.msra.mxu0 %v2492
    %3129 = vmatpush.bf16.msra.mxu0 %v2484
    %3130 = vmatpush.bf16.msra.mxu0 %v2476
    %3131 = vmatpush.bf16.msra.mxu0 %v2468
    %3132 = vmatpush.bf16.msra.mxu0 %v2460
    %3133 = vmatmul.bf16.gmra.mxu0 %v1237
    %v3134 = vpop.f32.mrf.mxu0
    %v3135 = vadd.f32 %v3122, %v3134
    %v3136 = vpop.f32.mrf.mxu0
    %3137 = vdwg.mxu0
    %3138 = vmatpush.bf16.msra.mxu0 %v2325
    %3139 = vmatpush.bf16.msra.mxu0 %v2317
    %3140 = vmatpush.bf16.msra.mxu0 %v2309
    %3141 = vmatpush.bf16.msra.mxu0 %v2301
    %3142 = vmatpush.bf16.msra.mxu0 %v2293
    %3143 = vmatpush.bf16.msra.mxu0 %v2285
    %3144 = vmatpush.bf16.msra.mxu0 %v2277
    %3145 = vmatpush.bf16.msra.mxu0 %v2269
    %3146 = vmatmul.bf16.gmra.mxu0 %v1234
    %v3147 = vpop.f32.mrf.mxu0
    %v3148 = vadd.f32 0.0, %v3147
    %v3149 = vpop.f32.mrf.mxu0
    %3150 = vdwg.mxu0
    %3151 = vmatpush.bf16.msra.mxu0 %v2389
    %3152 = vmatpush.bf16.msra.mxu0 %v2381
    %3153 = vmatpush.bf16.msra.mxu0 %v2373
    %3154 = vmatpush.bf16.msra.mxu0 %v2365
    %3155 = vmatpush.bf16.msra.mxu0 %v2357
    %3156 = vmatpush.bf16.msra.mxu0 %v2349
    %3157 = vmatpush.bf16.msra.mxu0 %v2341
    %3158 = vmatpush.bf16.msra.mxu0 %v2333
    %3159 = vmatmul.bf16.gmra.mxu0 %v1235
    %v3160 = vpop.f32.mrf.mxu0
    %v3161 = vadd.f32 %v3148, %v3160
    %v3162 = vpop.f32.mrf.mxu0
    %3163 = vdwg.mxu0
    %3164 = vmatpush.bf16.msra.mxu0 %v2453
    %3165 = vmatpush.bf16.msra.mxu0 %v2445
    %3166 = vmatpush.bf16.msra.mxu0 %v2437
    %3167 = vmatpush.bf16.msra.mxu0 %v2429
    %3168 = vmatpush.bf16.msra.mxu0 %v2421
    %3169 = vmatpush.bf16.msra.mxu0 %v2413
    %3170 = vmatpush.bf16.msra.mxu0 %v2405
    %3171 = vmatpush.bf16.msra.mxu0 %v2397
    %3172 = vmatmul.bf16.gmra.mxu0 %v1236
    %v3173 = vpop.f32.mrf.mxu0
    %v3174 = vadd.f32 %v3161, %v3173
    %v3175 = vpop.f32.mrf.mxu0
    %3176 = vdwg.mxu0
    %3177 = vmatpush.bf16.msra.mxu0 %v2517
    %3178 = vmatpush.bf16.msra.mxu0 %v2509
    %3179 = vmatpush.bf16.msra.mxu0 %v2501
    %3180 = vmatpush.bf16.msra.mxu0 %v2493
    %3181 = vmatpush.bf16.msra.mxu0 %v2485
    %3182 = vmatpush.bf16.msra.mxu0 %v2477
    %3183 = vmatpush.bf16.msra.mxu0 %v2469
    %3184 = vmatpush.bf16.msra.mxu0 %v2461
    %3185 = vmatmul.bf16.gmra.mxu0 %v1237
    %v3186 = vpop.f32.mrf.mxu0
    %v3187 = vadd.f32 %v3174, %v3186
    %v3188 = vpop.f32.mrf.mxu0
    %3189 = vdwg.mxu0
    %v3190 = vld [vmem:[#allocation19] sm:$0xff]
    %v3191 = vld [vmem:[#allocation20] sm:$0xff]
    %v3192 = vrot.slane %v2823, 4
    %v3193 = vadd.f32 %v2823, %v3192
    %v3194 = vrot.slane %v3193, 2
    %v3195 = vadd.f32 %v3193, %v3194
    %v3196 = vrot.slane %v3195, 1
    %v3197 = vadd.f32 %v3195, %v3196
    %v3198 = vrot.slane %v2875, 4
    %v3199 = vadd.f32 %v2875, %v3198
    %v3200 = vrot.slane %v3199, 2
    %v3201 = vadd.f32 %v3199, %v3200
    %v3202 = vrot.slane %v3201, 1
    %v3203 = vadd.f32 %v3201, %v3202
    %v3204 = vrot.slane %v2927, 4
    %v3205 = vadd.f32 %v2927, %v3204
    %v3206 = vrot.slane %v3205, 2
    %v3207 = vadd.f32 %v3205, %v3206
    %v3208 = vrot.slane %v3207, 1
    %v3209 = vadd.f32 %v3207, %v3208
    %v3210 = vrot.slane %v2979, 4
    %v3211 = vadd.f32 %v2979, %v3210
    %v3212 = vrot.slane %v3211, 2
    %v3213 = vadd.f32 %v3211, %v3212
    %v3214 = vrot.slane %v3213, 1
    %v3215 = vadd.f32 %v3213, %v3214
    %v3216 = vrot.slane %v3031, 4
    %v3217 = vadd.f32 %v3031, %v3216
    %v3218 = vrot.slane %v3217, 2
    %v3219 = vadd.f32 %v3217, %v3218
    %v3220 = vrot.slane %v3219, 1
    %v3221 = vadd.f32 %v3219, %v3220
    %v3222 = vrot.slane %v3083, 4
    %v3223 = vadd.f32 %v3083, %v3222
    %v3224 = vrot.slane %v3223, 2
    %v3225 = vadd.f32 %v3223, %v3224
    %v3226 = vrot.slane %v3225, 1
    %v3227 = vadd.f32 %v3225, %v3226
    %v3228 = vrot.slane %v3135, 4
    %v3229 = vadd.f32 %v3135, %v3228
    %v3230 = vrot.slane %v3229, 2
    %v3231 = vadd.f32 %v3229, %v3230
    %v3232 = vrot.slane %v3231, 1
    %v3233 = vadd.f32 %v3231, %v3232
    %v3234 = vrot.slane %v3187, 4
    %v3235 = vadd.f32 %v3187, %v3234
    %v3236 = vrot.slane %v3235, 2
    %v3237 = vadd.f32 %v3235, %v3236
    %v3238 = vrot.slane %v3237, 1
    %v3239 = vadd.f32 %v3237, %v3238
    %v3240 = vmul.f32 %v3197, %v476
    %v3241 = vmul.f32 %v3203, %v476
    %v3242 = vmul.f32 %v3209, %v476
    %v3243 = vmul.f32 %v3215, %v476
    %v3244 = vmul.f32 %v3221, %v476
    %v3245 = vmul.f32 %v3227, %v476
    %v3246 = vmul.f32 %v3233, %v476
    %v3247 = vmul.f32 %v3239, %v476
    %v3248 = vmul.f32 %v2823, %v2823
    %v3249 = vmul.f32 %v2875, %v2875
    %v3250 = vmul.f32 %v2927, %v2927
    %v3251 = vmul.f32 %v2979, %v2979
    %v3252 = vmul.f32 %v3031, %v3031
    %v3253 = vmul.f32 %v3083, %v3083
    %v3254 = vmul.f32 %v3135, %v3135
    %v3255 = vmul.f32 %v3187, %v3187
    %v3256 = vrot.slane %v3248, 4
    %v3257 = vadd.f32 %v3248, %v3256
    %v3258 = vrot.slane %v3257, 2
    %v3259 = vadd.f32 %v3257, %v3258
    %v3260 = vrot.slane %v3259, 1
    %v3261 = vadd.f32 %v3259, %v3260
    %v3262 = vrot.slane %v3249, 4
    %v3263 = vadd.f32 %v3249, %v3262
    %v3264 = vrot.slane %v3263, 2
    %v3265 = vadd.f32 %v3263, %v3264
    %v3266 = vrot.slane %v3265, 1
    %v3267 = vadd.f32 %v3265, %v3266
    %v3268 = vrot.slane %v3250, 4
    %v3269 = vadd.f32 %v3250, %v3268
    %v3270 = vrot.slane %v3269, 2
    %v3271 = vadd.f32 %v3269, %v3270
    %v3272 = vrot.slane %v3271, 1
    %v3273 = vadd.f32 %v3271, %v3272
    %v3274 = vrot.slane %v3251, 4
    %v3275 = vadd.f32 %v3251, %v3274
    %v3276 = vrot.slane %v3275, 2
    %v3277 = vadd.f32 %v3275, %v3276
    %v3278 = vrot.slane %v3277, 1
    %v3279 = vadd.f32 %v3277, %v3278
    %v3280 = vrot.slane %v3252, 4
    %v3281 = vadd.f32 %v3252, %v3280
    %v3282 = vrot.slane %v3281, 2
    %v3283 = vadd.f32 %v3281, %v3282
    %v3284 = vrot.slane %v3283, 1
    %v3285 = vadd.f32 %v3283, %v3284
    %v3286 = vrot.slane %v3253, 4
    %v3287 = vadd.f32 %v3253, %v3286
    %v3288 = vrot.slane %v3287, 2
    %v3289 = vadd.f32 %v3287, %v3288
    %v3290 = vrot.slane %v3289, 1
    %v3291 = vadd.f32 %v3289, %v3290
    %v3292 = vrot.slane %v3254, 4
    %v3293 = vadd.f32 %v3254, %v3292
    %v3294 = vrot.slane %v3293, 2
    %v3295 = vadd.f32 %v3293, %v3294
    %v3296 = vrot.slane %v3295, 1
    %v3297 = vadd.f32 %v3295, %v3296
    %v3298 = vrot.slane %v3255, 4
    %v3299 = vadd.f32 %v3255, %v3298
    %v3300 = vrot.slane %v3299, 2
    %v3301 = vadd.f32 %v3299, %v3300
    %v3302 = vrot.slane %v3301, 1
    %v3303 = vadd.f32 %v3301, %v3302
    %v3304 = vmul.f32 %v3261, %v476
    %v3305 = vmul.f32 %v3267, %v476
    %v3306 = vmul.f32 %v3273, %v476
    %v3307 = vmul.f32 %v3279, %v476
    %v3308 = vmul.f32 %v3285, %v476
    %v3309 = vmul.f32 %v3291, %v476
    %v3310 = vmul.f32 %v3297, %v476
    %v3311 = vmul.f32 %v3303, %v476
    %v3312 = vmul.f32 %v3240, %v3240
    %v3313 = vmul.f32 %v3241, %v3241
    %v3314 = vmul.f32 %v3242, %v3242
    %v3315 = vmul.f32 %v3243, %v3243
    %v3316 = vmul.f32 %v3244, %v3244
    %v3317 = vmul.f32 %v3245, %v3245
    %v3318 = vmul.f32 %v3246, %v3246
    %v3319 = vmul.f32 %v3247, %v3247
    %v3320 = vsub.f32 %v3304, %v3312
    %v3321 = vsub.f32 %v3305, %v3313
    %v3322 = vsub.f32 %v3306, %v3314
    %v3323 = vsub.f32 %v3307, %v3315
    %v3324 = vsub.f32 %v3308, %v3316
    %v3325 = vsub.f32 %v3309, %v3317
    %v3326 = vsub.f32 %v3310, %v3318
    %v3327 = vsub.f32 %v3311, %v3319
    %v3328 = vmax.f32 %v3320, 0.0
    %v3329 = vmax.f32 %v3321, 0.0
    %v3330 = vmax.f32 %v3322, 0.0
    %v3331 = vmax.f32 %v3323, 0.0
    %v3332 = vmax.f32 %v3324, 0.0
    %v3333 = vmax.f32 %v3325, 0.0
    %v3334 = vmax.f32 %v3326, 0.0
    %v3335 = vmax.f32 %v3327, 0.0
    %v3336 = vadd.f32 %v3328, 0.8
    %v3337 = vadd.f32 %v3329, 0.8
    %v3338 = vadd.f32 %v3330, 0.8
    %v3339 = vadd.f32 %v3331, 0.8
    %v3340 = vadd.f32 %v3332, 0.8
    %v3341 = vadd.f32 %v3333, 0.8
    %v3342 = vadd.f32 %v3334, 0.8
    %v3343 = vadd.f32 %v3335, 0.8
    %v3344 = vrsqrt.pop %v3336
    %v3345 = vmul.f32 %v3344, %v3336
    %v3346 = vmul.f32 %v3345, %v3344
    %v3347 = vmul.f32 0.5, %v3346
    %v3348 = vsub.f32 1.5, %v3347
    %v3349 = vmul.f32 %v3344, %v3348
    %vm3350 = vweird.f32 %v3336
    %vm3351 = vweird.f32 %v3344
    %vm3352 = vmor %vm3350, %vm3351
    %v3353 = vsel %vm3352, %v3344, %v3349
    %v3354 = vrsqrt.pop %v3337
    %v3355 = vmul.f32 %v3354, %v3337
    %v3356 = vmul.f32 %v3355, %v3354
    %v3357 = vmul.f32 0.5, %v3356
    %v3358 = vsub.f32 1.5, %v3357
    %v3359 = vmul.f32 %v3354, %v3358
    %vm3360 = vweird.f32 %v3337
    %vm3361 = vweird.f32 %v3354
    %vm3362 = vmor %vm3360, %vm3361
    %v3363 = vsel %vm3362, %v3354, %v3359
    %v3364 = vrsqrt.pop %v3338
    %v3365 = vmul.f32 %v3364, %v3338
    %v3366 = vmul.f32 %v3365, %v3364
    %v3367 = vmul.f32 0.5, %v3366
    %v3368 = vsub.f32 1.5, %v3367
    %v3369 = vmul.f32 %v3364, %v3368
    %vm3370 = vweird.f32 %v3338
    %vm3371 = vweird.f32 %v3364
    %vm3372 = vmor %vm3370, %vm3371
    %v3373 = vsel %vm3372, %v3364, %v3369
    %v3374 = vrsqrt.pop %v3339
    %v3375 = vmul.f32 %v3374, %v3339
    %v3376 = vmul.f32 %v3375, %v3374
    %v3377 = vmul.f32 0.5, %v3376
    %v3378 = vsub.f32 1.5, %v3377
    %v3379 = vmul.f32 %v3374, %v3378
    %vm3380 = vweird.f32 %v3339
    %vm3381 = vweird.f32 %v3374
    %vm3382 = vmor %vm3380, %vm3381
    %v3383 = vsel %vm3382, %v3374, %v3379
    %v3384 = vrsqrt.pop %v3340
    %v3385 = vmul.f32 %v3384, %v3340
    %v3386 = vmul.f32 %v3385, %v3384
    %v3387 = vmul.f32 0.5, %v3386
    %v3388 = vsub.f32 1.5, %v3387
    %v3389 = vmul.f32 %v3384, %v3388
    %vm3390 = vweird.f32 %v3340
    %vm3391 = vweird.f32 %v3384
    %vm3392 = vmor %vm3390, %vm3391
    %v3393 = vsel %vm3392, %v3384, %v3389
    %v3394 = vrsqrt.pop %v3341
    %v3395 = vmul.f32 %v3394, %v3341
    %v3396 = vmul.f32 %v3395, %v3394
    %v3397 = vmul.f32 0.5, %v3396
    %v3398 = vsub.f32 1.5, %v3397
    %v3399 = vmul.f32 %v3394, %v3398
    %vm3400 = vweird.f32 %v3341
    %vm3401 = vweird.f32 %v3394
    %vm3402 = vmor %vm3400, %vm3401
    %v3403 = vsel %vm3402, %v3394, %v3399
    %v3404 = vrsqrt.pop %v3342
    %v3405 = vmul.f32 %v3404, %v3342
    %v3406 = vmul.f32 %v3405, %v3404
    %v3407 = vmul.f32 0.5, %v3406
    %v3408 = vsub.f32 1.5, %v3407
    %v3409 = vmul.f32 %v3404, %v3408
    %vm3410 = vweird.f32 %v3342
    %vm3411 = vweird.f32 %v3404
    %vm3412 = vmor %vm3410, %vm3411
    %v3413 = vsel %vm3412, %v3404, %v3409
    %v3414 = vrsqrt.pop %v3343
    %v3415 = vmul.f32 %v3414, %v3343
    %v3416 = vmul.f32 %v3415, %v3414
    %v3417 = vmul.f32 0.5, %v3416
    %v3418 = vsub.f32 1.5, %v3417
    %v3419 = vmul.f32 %v3414, %v3418
    %vm3420 = vweird.f32 %v3343
    %vm3421 = vweird.f32 %v3414
    %vm3422 = vmor %vm3420, %vm3421
    %v3423 = vsel %vm3422, %v3414, %v3419
    %v3432 = vrot.slane %v3363, 7
    %v3433 = vrot.slane %v3373, 6
    %v3434 = vrot.slane %v3383, 5
    %v3435 = vrot.slane %v3393, 4
    %v3436 = vrot.slane %v3403, 3
    %v3437 = vrot.slane %v3413, 2
    %v3438 = vrot.slane %v3423, 1
    %v3439 = vsel %vm526, %v3353, %v3432
    %v3440 = vsel %vm1174, %v3433, %v3434
    %v3441 = vsel %vm1176, %v3439, %v3440
    %vm3442 = vcmask 1044484
    %v3443 = vsel %vm3442, %v3435, %v3436
    %vm3444 = vcmask 1046534
    %v3445 = vsel %vm3444, %v3437, %v3438
    %vm3446 = vcmask 1045508
    %v3447 = vsel %vm3446, %v3443, %v3445
    %vm3448 = vcmask 1043456
    %v3449 = vsel %vm3448, %v3441, %v3447
    %v3451 = vmul.f32 %v3190, %v3449
    %v3453 = vperm.slane %v3451, 0
    %v3454 = vperm.slane %v3451, 1
    %v3455 = vperm.slane %v3451, 2
    %v3456 = vperm.slane %v3451, 3
    %v3457 = vperm.slane %v3451, 4
    %v3458 = vperm.slane %v3451, 5
    %v3459 = vperm.slane %v3451, 6
    %v3460 = vperm.slane %v3451, 7
    %v3469 = vmul.f32 %v3240, %v3453
    %v3470 = vmul.f32 %v3241, %v3454
    %v3471 = vmul.f32 %v3242, %v3455
    %v3472 = vmul.f32 %v3243, %v3456
    %v3473 = vmul.f32 %v3244, %v3457
    %v3474 = vmul.f32 %v3245, %v3458
    %v3475 = vmul.f32 %v3246, %v3459
    %v3476 = vmul.f32 %v3247, %v3460
    %v3485 = vrot.slane %v3470, 7
    %v3486 = vrot.slane %v3471, 6
    %v3487 = vrot.slane %v3472, 5
    %v3488 = vrot.slane %v3473, 4
    %v3489 = vrot.slane %v3474, 3
    %v3490 = vrot.slane %v3475, 2
    %v3491 = vrot.slane %v3476, 1
    %v3492 = vsel %vm526, %v3469, %v3485
    %v3493 = vsel %vm1174, %v3486, %v3487
    %v3494 = vsel %vm1176, %v3492, %v3493
    %v3495 = vsel %vm3442, %v3488, %v3489
    %v3496 = vsel %vm3444, %v3490, %v3491
    %v3497 = vsel %vm3446, %v3495, %v3496
    %v3498 = vsel %vm3448, %v3494, %v3497
    %v3500 = vsub.f32 %v3191, %v3498
    %v3501 = vmul.f32 %v2823, %v3453
    %v3502 = vmul.f32 %v2875, %v3454
    %v3503 = vmul.f32 %v2927, %v3455
    %v3504 = vmul.f32 %v2979, %v3456
    %v3505 = vmul.f32 %v3031, %v3457
    %v3506 = vmul.f32 %v3083, %v3458
    %v3507 = vmul.f32 %v3135, %v3459
    %v3508 = vmul.f32 %v3187, %v3460
    %v3510 = vperm.slane %v3500, 0
    %v3511 = vperm.slane %v3500, 1
    %v3512 = vperm.slane %v3500, 2
    %v3513 = vperm.slane %v3500, 3
    %v3514 = vperm.slane %v3500, 4
    %v3515 = vperm.slane %v3500, 5
    %v3516 = vperm.slane %v3500, 6
    %v3517 = vperm.slane %v3500, 7
    %v3526 = vadd.f32 %v3501, %v3510
    %v3527 = vadd.f32 %v3502, %v3511
    %v3528 = vadd.f32 %v3503, %v3512
    %v3529 = vadd.f32 %v3504, %v3513
    %v3530 = vadd.f32 %v3505, %v3514
    %v3531 = vadd.f32 %v3506, %v3515
    %v3532 = vadd.f32 %v3507, %v3516
    %v3533 = vadd.f32 %v3508, %v3517
    %vm3534 = vcmp.gt.f32.partialorder %v3526, 0.0
    %vm3535 = vcmp.gt.f32.partialorder %v3527, 0.0
    %vm3536 = vcmp.gt.f32.partialorder %v3528, 0.0
    %vm3537 = vcmp.gt.f32.partialorder %v3529, 0.0
    %vm3538 = vcmp.gt.f32.partialorder %v3530, 0.0
    %vm3539 = vcmp.gt.f32.partialorder %v3531, 0.0
    %vm3540 = vcmp.gt.f32.partialorder %v3532, 0.0
    %vm3541 = vcmp.gt.f32.partialorder %v3533, 0.0
    %v3542 = vmul.f32 %v3526, 0.2
    %v3543 = vmul.f32 %v3527, 0.2
    %v3544 = vmul.f32 %v3528, 0.2
    %v3545 = vmul.f32 %v3529, 0.2
    %v3546 = vmul.f32 %v3530, 0.2
    %v3547 = vmul.f32 %v3531, 0.2
    %v3548 = vmul.f32 %v3532, 0.2
    %v3549 = vmul.f32 %v3533, 0.2
    %v3550 = vsel %vm3534, %v3526, %v3542
    %v3551 = vsel %vm3535, %v3527, %v3543
    %v3552 = vsel %vm3536, %v3528, %v3544
    %v3553 = vsel %vm3537, %v3529, %v3545
    %v3554 = vsel %vm3538, %v3530, %v3546
    %v3555 = vsel %vm3539, %v3531, %v3547
    %v3556 = vsel %vm3540, %v3532, %v3548
    %v3557 = vsel %vm3541, %v3533, %v3549
    %v3558 = vpack.c.bf16 %v3550, %v3550
    %v3559 = vpack.c.bf16 %v3551, %v3551
    %v3560 = vpack.c.bf16 %v3552, %v3552
    %v3561 = vpack.c.bf16 %v3553, %v3553
    %v3562 = vpack.c.bf16 %v3554, %v3554
    %v3563 = vpack.c.bf16 %v3555, %v3555
    %v3564 = vpack.c.bf16 %v3556, %v3556
    %v3565 = vpack.c.bf16 %v3557, %v3557
    %v3566 = vld [vmem:[#allocation22] sm:$0xff]
    %v3567 = vld [vmem:[#allocation22 + $0x8] sm:$0xff]
    %v3568 = vld [vmem:[#allocation22 + $0x10] sm:$0xff]
    %v3569 = vld [vmem:[#allocation22 + $0x18] sm:$0xf]
    %v3570 = vld [vmem:[#allocation22 + $0x1c] sm:$0xff]
    %v3571 = vld [vmem:[#allocation22 + $0x24] sm:$0xff]
    %v3572 = vld [vmem:[#allocation22 + $0x2c] sm:$0xff]
    %v3573 = vld [vmem:[#allocation22 + $0x34] sm:$0xf]
    %v3574 = vld [vmem:[#allocation22 + $0x38] sm:$0xff]
    %v3575 = vld [vmem:[#allocation22 + $0x40] sm:$0xff]
    %v3576 = vld [vmem:[#allocation22 + $0x48] sm:$0xff]
    %v3577 = vld [vmem:[#allocation22 + $0x50] sm:$0xf]
    %v3578 = vld [vmem:[#allocation22 + $0x54] sm:$0xff]
    %v3579 = vld [vmem:[#allocation22 + $0x5c] sm:$0xff]
    %v3580 = vld [vmem:[#allocation22 + $0x64] sm:$0xff]
    %v3581 = vld [vmem:[#allocation22 + $0x6c] sm:$0xf]
    %v3582 = vld [vmem:[#allocation22 + $0x70] sm:$0xff]
    %v3583 = vld [vmem:[#allocation22 + $0x78] sm:$0xff]
    %v3584 = vld [vmem:[#allocation22 + $0x80] sm:$0xff]
    %v3585 = vld [vmem:[#allocation22 + $0x88] sm:$0xf]
    %v3586 = vld [vmem:[#allocation22 + $0x8c] sm:$0xff]
    %v3587 = vld [vmem:[#allocation22 + $0x94] sm:$0xff]
    %v3588 = vld [vmem:[#allocation22 + $0x9c] sm:$0xff]
    %v3589 = vld [vmem:[#allocation22 + $0xa4] sm:$0xf]
    %v3590 = vld [vmem:[#allocation22 + $0xa8] sm:$0xff]
    %v3591 = vld [vmem:[#allocation22 + $0xb0] sm:$0xff]
    %v3592 = vld [vmem:[#allocation22 + $0xb8] sm:$0xff]
    %v3593 = vld [vmem:[#allocation22 + $0xc0] sm:$0xf]
    %v3594 = vld [vmem:[#allocation22 + $0xc4] sm:$0xff]
    %v3595 = vld [vmem:[#allocation22 + $0xcc] sm:$0xff]
    %v3596 = vld [vmem:[#allocation22 + $0xd4] sm:$0xff]
    %v3597 = vld [vmem:[#allocation22 + $0xdc] sm:$0xf]
    %v3598 = vld [vmem:[#allocation22 + $0xe0] sm:$0xff]
    %v3599 = vld [vmem:[#allocation22 + $0xe8] sm:$0xff]
    %v3600 = vld [vmem:[#allocation22 + $0xf0] sm:$0xff]
    %v3601 = vld [vmem:[#allocation22 + $0xf8] sm:$0xf]
    %v3602 = vld [vmem:[#allocation22 + $0xfc] sm:$0xff]
    %v3603 = vld [vmem:[#allocation22 + $0x104] sm:$0xff]
    %v3604 = vld [vmem:[#allocation22 + $0x10c] sm:$0xff]
    %v3605 = vld [vmem:[#allocation22 + $0x114] sm:$0xf]
    %v3606 = vld [vmem:[#allocation22 + $0x118] sm:$0xff]
    %v3607 = vld [vmem:[#allocation22 + $0x120] sm:$0xff]
    %v3608 = vld [vmem:[#allocation22 + $0x128] sm:$0xff]
    %v3609 = vld [vmem:[#allocation22 + $0x130] sm:$0xf]
    %v3610 = vld [vmem:[#allocation22 + $0x134] sm:$0xff]
    %v3611 = vld [vmem:[#allocation22 + $0x13c] sm:$0xff]
    %v3612 = vld [vmem:[#allocation22 + $0x144] sm:$0xff]
    %v3613 = vld [vmem:[#allocation22 + $0x14c] sm:$0xf]
    %v3614 = vld [vmem:[#allocation22 + $0x150] sm:$0xff]
    %v3615 = vld [vmem:[#allocation22 + $0x158] sm:$0xff]
    %v3616 = vld [vmem:[#allocation22 + $0x160] sm:$0xff]
    %v3617 = vld [vmem:[#allocation22 + $0x168] sm:$0xf]
    %v3618 = vld [vmem:[#allocation22 + $0x16c] sm:$0xff]
    %v3619 = vld [vmem:[#allocation22 + $0x174] sm:$0xff]
    %v3620 = vld [vmem:[#allocation22 + $0x17c] sm:$0xff]
    %v3621 = vld [vmem:[#allocation22 + $0x184] sm:$0xf]
    %v3622 = vld [vmem:[#allocation22 + $0x188] sm:$0xff]
    %v3623 = vld [vmem:[#allocation22 + $0x190] sm:$0xff]
    %v3624 = vld [vmem:[#allocation22 + $0x198] sm:$0xff]
    %v3625 = vld [vmem:[#allocation22 + $0x1a0] sm:$0xf]
    %v3626 = vld [vmem:[#allocation22 + $0x1a4] sm:$0xff]
    %v3627 = vld [vmem:[#allocation22 + $0x1ac] sm:$0xff]
    %v3628 = vld [vmem:[#allocation22 + $0x1b4] sm:$0xff]
    %v3629 = vld [vmem:[#allocation22 + $0x1bc] sm:$0xf]
    %v3630 = vld [vmem:[#allocation22 + $0x1c0] sm:$0xff]
    %v3631 = vld [vmem:[#allocation22 + $0x1c8] sm:$0xff]
    %v3632 = vld [vmem:[#allocation22 + $0x1d0] sm:$0xff]
    %v3633 = vld [vmem:[#allocation22 + $0x1d8] sm:$0xf]
    %v3634 = vld [vmem:[#allocation22 + $0x1dc] sm:$0xff]
    %v3635 = vld [vmem:[#allocation22 + $0x1e4] sm:$0xff]
    %v3636 = vld [vmem:[#allocation22 + $0x1ec] sm:$0xff]
    %v3637 = vld [vmem:[#allocation22 + $0x1f4] sm:$0xf]
    %v3638 = vld [vmem:[#allocation22 + $0x1f8] sm:$0xff]
    %v3639 = vld [vmem:[#allocation22 + $0x200] sm:$0xff]
    %v3640 = vld [vmem:[#allocation22 + $0x208] sm:$0xff]
    %v3641 = vld [vmem:[#allocation22 + $0x210] sm:$0xf]
    %v3642 = vld [vmem:[#allocation22 + $0x214] sm:$0xff]
    %v3643 = vld [vmem:[#allocation22 + $0x21c] sm:$0xff]
    %v3644 = vld [vmem:[#allocation22 + $0x224] sm:$0xff]
    %v3645 = vld [vmem:[#allocation22 + $0x22c] sm:$0xf]
    %v3646 = vld [vmem:[#allocation22 + $0x230] sm:$0xff]
    %v3647 = vld [vmem:[#allocation22 + $0x238] sm:$0xff]
    %v3648 = vld [vmem:[#allocation22 + $0x240] sm:$0xff]
    %v3649 = vld [vmem:[#allocation22 + $0x248] sm:$0xf]
    %v3650 = vld [vmem:[#allocation22 + $0x24c] sm:$0xff]
    %v3651 = vld [vmem:[#allocation22 + $0x254] sm:$0xff]
    %v3652 = vld [vmem:[#allocation22 + $0x25c] sm:$0xff]
    %v3653 = vld [vmem:[#allocation22 + $0x264] sm:$0xf]
    %v3654 = vld [vmem:[#allocation22 + $0x268] sm:$0xff]
    %v3655 = vld [vmem:[#allocation22 + $0x270] sm:$0xff]
    %v3656 = vld [vmem:[#allocation22 + $0x278] sm:$0xff]
    %v3657 = vld [vmem:[#allocation22 + $0x280] sm:$0xf]
    %v3658 = vld [vmem:[#allocation22 + $0x284] sm:$0xff]
    %v3659 = vld [vmem:[#allocation22 + $0x28c] sm:$0xff]
    %v3660 = vld [vmem:[#allocation22 + $0x294] sm:$0xff]
    %v3661 = vld [vmem:[#allocation22 + $0x29c] sm:$0xf]
    %v3662 = vld [vmem:[#allocation22 + $0x2a0] sm:$0xff]
    %v3663 = vld [vmem:[#allocation22 + $0x2a8] sm:$0xff]
    %v3664 = vld [vmem:[#allocation22 + $0x2b0] sm:$0xff]
    %v3665 = vld [vmem:[#allocation22 + $0x2b8] sm:$0xf]
    %v3666 = vld [vmem:[#allocation22 + $0x2bc] sm:$0xff]
    %v3667 = vld [vmem:[#allocation22 + $0x2c4] sm:$0xff]
    %v3668 = vld [vmem:[#allocation22 + $0x2cc] sm:$0xff]
    %v3669 = vld [vmem:[#allocation22 + $0x2d4] sm:$0xf]
    %v3670 = vld [vmem:[#allocation22 + $0x2d8] sm:$0xff]
    %v3671 = vld [vmem:[#allocation22 + $0x2e0] sm:$0xff]
    %v3672 = vld [vmem:[#allocation22 + $0x2e8] sm:$0xff]
    %v3673 = vld [vmem:[#allocation22 + $0x2f0] sm:$0xf]
    %v3674 = vld [vmem:[#allocation22 + $0x2f4] sm:$0xff]
    %v3675 = vld [vmem:[#allocation22 + $0x2fc] sm:$0xff]
    %v3676 = vld [vmem:[#allocation22 + $0x304] sm:$0xff]
    %v3677 = vld [vmem:[#allocation22 + $0x30c] sm:$0xf]
    %v3678 = vld [vmem:[#allocation22 + $0x310] sm:$0xff]
    %v3679 = vld [vmem:[#allocation22 + $0x318] sm:$0xff]
    %v3680 = vld [vmem:[#allocation22 + $0x320] sm:$0xff]
    %v3681 = vld [vmem:[#allocation22 + $0x328] sm:$0xf]
    %v3682 = vld [vmem:[#allocation22 + $0x32c] sm:$0xff]
    %v3683 = vld [vmem:[#allocation22 + $0x334] sm:$0xff]
    %v3684 = vld [vmem:[#allocation22 + $0x33c] sm:$0xff]
    %v3685 = vld [vmem:[#allocation22 + $0x344] sm:$0xf]
    %v3686 = vld [vmem:[#allocation22 + $0x348] sm:$0xff]
    %v3687 = vld [vmem:[#allocation22 + $0x350] sm:$0xff]
    %v3688 = vld [vmem:[#allocation22 + $0x358] sm:$0xff]
    %v3689 = vld [vmem:[#allocation22 + $0x360] sm:$0xf]
    %v3690 = vld [vmem:[#allocation22 + $0x364] sm:$0xff]
    %v3691 = vld [vmem:[#allocation22 + $0x36c] sm:$0xff]
    %v3692 = vld [vmem:[#allocation22 + $0x374] sm:$0xff]
    %v3693 = vld [vmem:[#allocation22 + $0x37c] sm:$0xf]
    %v3694 = vld [vmem:[#allocation22 + $0x380] sm:$0xff]
    %v3695 = vld [vmem:[#allocation22 + $0x388] sm:$0xff]
    %v3696 = vld [vmem:[#allocation22 + $0x390] sm:$0xff]
    %v3697 = vld [vmem:[#allocation22 + $0x398] sm:$0xf]
    %v3698 = vld [vmem:[#allocation22 + $0x39c] sm:$0xff]
    %v3699 = vld [vmem:[#allocation22 + $0x3a4] sm:$0xff]
    %v3700 = vld [vmem:[#allocation22 + $0x3ac] sm:$0xff]
    %v3701 = vld [vmem:[#allocation22 + $0x3b4] sm:$0xf]
    %v3702 = vld [vmem:[#allocation22 + $0x3b8] sm:$0xff]
    %v3703 = vld [vmem:[#allocation22 + $0x3c0] sm:$0xff]
    %v3704 = vld [vmem:[#allocation22 + $0x3c8] sm:$0xff]
    %v3705 = vld [vmem:[#allocation22 + $0x3d0] sm:$0xf]
    %v3706 = vld [vmem:[#allocation22 + $0x3d4] sm:$0xff]
    %v3707 = vld [vmem:[#allocation22 + $0x3dc] sm:$0xff]
    %v3708 = vld [vmem:[#allocation22 + $0x3e4] sm:$0xff]
    %v3709 = vld [vmem:[#allocation22 + $0x3ec] sm:$0xf]
    %v3710 = vld [vmem:[#allocation22 + $0x3f0] sm:$0xff]
    %v3711 = vld [vmem:[#allocation22 + $0x3f8] sm:$0xff]
    %v3712 = vld [vmem:[#allocation22 + $0x400] sm:$0xff]
    %v3713 = vld [vmem:[#allocation22 + $0x408] sm:$0xf]
    %v3714 = vld [vmem:[#allocation22 + $0x40c] sm:$0xff]
    %v3715 = vld [vmem:[#allocation22 + $0x414] sm:$0xff]
    %v3716 = vld [vmem:[#allocation22 + $0x41c] sm:$0xff]
    %v3717 = vld [vmem:[#allocation22 + $0x424] sm:$0xf]
    %v3718 = vld [vmem:[#allocation22 + $0x428] sm:$0xff]
    %v3719 = vld [vmem:[#allocation22 + $0x430] sm:$0xff]
    %v3720 = vld [vmem:[#allocation22 + $0x438] sm:$0xff]
    %v3721 = vld [vmem:[#allocation22 + $0x440] sm:$0xf]
    %v3722 = vld [vmem:[#allocation22 + $0x444] sm:$0xff]
    %v3723 = vld [vmem:[#allocation22 + $0x44c] sm:$0xff]
    %v3724 = vld [vmem:[#allocation22 + $0x454] sm:$0xff]
    %v3725 = vld [vmem:[#allocation22 + $0x45c] sm:$0xf]
    %v3726 = vld [vmem:[#allocation22 + $0x460] sm:$0xff]
    %v3727 = vld [vmem:[#allocation22 + $0x468] sm:$0xff]
    %v3728 = vld [vmem:[#allocation22 + $0x470] sm:$0xff]
    %v3729 = vld [vmem:[#allocation22 + $0x478] sm:$0xf]
    %v3730 = vld [vmem:[#allocation22 + $0x47c] sm:$0xff]
    %v3731 = vld [vmem:[#allocation22 + $0x484] sm:$0xff]
    %v3732 = vld [vmem:[#allocation22 + $0x48c] sm:$0xff]
    %v3733 = vld [vmem:[#allocation22 + $0x494] sm:$0xf]
    %v3734 = vld [vmem:[#allocation22 + $0x498] sm:$0xff]
    %v3735 = vld [vmem:[#allocation22 + $0x4a0] sm:$0xff]
    %v3736 = vld [vmem:[#allocation22 + $0x4a8] sm:$0xff]
    %v3737 = vld [vmem:[#allocation22 + $0x4b0] sm:$0xf]
    %v3738 = vld [vmem:[#allocation22 + $0x4b4] sm:$0xff]
    %v3739 = vld [vmem:[#allocation22 + $0x4bc] sm:$0xff]
    %v3740 = vld [vmem:[#allocation22 + $0x4c4] sm:$0xff]
    %v3741 = vld [vmem:[#allocation22 + $0x4cc] sm:$0xf]
    %v3742 = vld [vmem:[#allocation22 + $0x4d0] sm:$0xff]
    %v3743 = vld [vmem:[#allocation22 + $0x4d8] sm:$0xff]
    %v3744 = vld [vmem:[#allocation22 + $0x4e0] sm:$0xff]
    %v3745 = vld [vmem:[#allocation22 + $0x4e8] sm:$0xf]
    %v3746 = vld [vmem:[#allocation22 + $0x4ec] sm:$0xff]
    %v3747 = vld [vmem:[#allocation22 + $0x4f4] sm:$0xff]
    %v3748 = vld [vmem:[#allocation22 + $0x4fc] sm:$0xff]
    %v3749 = vld [vmem:[#allocation22 + $0x504] sm:$0xf]
    %v3750 = vld [vmem:[#allocation22 + $0x508] sm:$0xff]
    %v3751 = vld [vmem:[#allocation22 + $0x510] sm:$0xff]
    %v3752 = vld [vmem:[#allocation22 + $0x518] sm:$0xff]
    %v3753 = vld [vmem:[#allocation22 + $0x520] sm:$0xf]
    %v3754 = vld [vmem:[#allocation22 + $0x524] sm:$0xff]
    %v3755 = vld [vmem:[#allocation22 + $0x52c] sm:$0xff]
    %v3756 = vld [vmem:[#allocation22 + $0x534] sm:$0xff]
    %v3757 = vld [vmem:[#allocation22 + $0x53c] sm:$0xf]
    %v3758 = vld [vmem:[#allocation22 + $0x540] sm:$0xff]
    %v3759 = vld [vmem:[#allocation22 + $0x548] sm:$0xff]
    %v3760 = vld [vmem:[#allocation22 + $0x550] sm:$0xff]
    %v3761 = vld [vmem:[#allocation22 + $0x558] sm:$0xf]
    %v3762 = vld [vmem:[#allocation22 + $0x55c] sm:$0xff]
    %v3763 = vld [vmem:[#allocation22 + $0x564] sm:$0xff]
    %v3764 = vld [vmem:[#allocation22 + $0x56c] sm:$0xff]
    %v3765 = vld [vmem:[#allocation22 + $0x574] sm:$0xf]
    %v3766 = vld [vmem:[#allocation22 + $0x578] sm:$0xff]
    %v3767 = vld [vmem:[#allocation22 + $0x580] sm:$0xff]
    %v3768 = vld [vmem:[#allocation22 + $0x588] sm:$0xff]
    %v3769 = vld [vmem:[#allocation22 + $0x590] sm:$0xf]
    %v3770 = vld [vmem:[#allocation22 + $0x594] sm:$0xff]
    %v3771 = vld [vmem:[#allocation22 + $0x59c] sm:$0xff]
    %v3772 = vld [vmem:[#allocation22 + $0x5a4] sm:$0xff]
    %v3773 = vld [vmem:[#allocation22 + $0x5ac] sm:$0xf]
    %v3774 = vld [vmem:[#allocation22 + $0x5b0] sm:$0xff]
    %v3775 = vld [vmem:[#allocation22 + $0x5b8] sm:$0xff]
    %v3776 = vld [vmem:[#allocation22 + $0x5c0] sm:$0xff]
    %v3777 = vld [vmem:[#allocation22 + $0x5c8] sm:$0xf]
    %v3778 = vld [vmem:[#allocation22 + $0x5cc] sm:$0xff]
    %v3779 = vld [vmem:[#allocation22 + $0x5d4] sm:$0xff]
    %v3780 = vld [vmem:[#allocation22 + $0x5dc] sm:$0xff]
    %v3781 = vld [vmem:[#allocation22 + $0x5e4] sm:$0xf]
    %v3782 = vld [vmem:[#allocation22 + $0x5e8] sm:$0xff]
    %v3783 = vld [vmem:[#allocation22 + $0x5f0] sm:$0xff]
    %v3784 = vld [vmem:[#allocation22 + $0x5f8] sm:$0xff]
    %v3785 = vld [vmem:[#allocation22 + $0x600] sm:$0xf]
    %v3786 = vld [vmem:[#allocation22 + $0x604] sm:$0xff]
    %v3787 = vld [vmem:[#allocation22 + $0x60c] sm:$0xff]
    %v3788 = vld [vmem:[#allocation22 + $0x614] sm:$0xff]
    %v3789 = vld [vmem:[#allocation22 + $0x61c] sm:$0xf]
    %v3790 = vld [vmem:[#allocation22 + $0x620] sm:$0xff]
    %v3791 = vld [vmem:[#allocation22 + $0x628] sm:$0xff]
    %v3792 = vld [vmem:[#allocation22 + $0x630] sm:$0xff]
    %v3793 = vld [vmem:[#allocation22 + $0x638] sm:$0xf]
    %v3794 = vld [vmem:[#allocation22 + $0x63c] sm:$0xff]
    %v3795 = vld [vmem:[#allocation22 + $0x644] sm:$0xff]
    %v3796 = vld [vmem:[#allocation22 + $0x64c] sm:$0xff]
    %v3797 = vld [vmem:[#allocation22 + $0x654] sm:$0xf]
    %v3798 = vld [vmem:[#allocation22 + $0x658] sm:$0xff]
    %v3799 = vld [vmem:[#allocation22 + $0x660] sm:$0xff]
    %v3800 = vld [vmem:[#allocation22 + $0x668] sm:$0xff]
    %v3801 = vld [vmem:[#allocation22 + $0x670] sm:$0xf]
    %v3802 = vld [vmem:[#allocation22 + $0x674] sm:$0xff]
    %v3803 = vld [vmem:[#allocation22 + $0x67c] sm:$0xff]
    %v3804 = vld [vmem:[#allocation22 + $0x684] sm:$0xff]
    %v3805 = vld [vmem:[#allocation22 + $0x68c] sm:$0xf]
    %v3806 = vld [vmem:[#allocation22 + $0x690] sm:$0xff]
    %v3807 = vld [vmem:[#allocation22 + $0x698] sm:$0xff]
    %v3808 = vld [vmem:[#allocation22 + $0x6a0] sm:$0xff]
    %v3809 = vld [vmem:[#allocation22 + $0x6a8] sm:$0xf]
    %v3810 = vld [vmem:[#allocation22 + $0x6ac] sm:$0xff]
    %v3811 = vld [vmem:[#allocation22 + $0x6b4] sm:$0xff]
    %v3812 = vld [vmem:[#allocation22 + $0x6bc] sm:$0xff]
    %v3813 = vld [vmem:[#allocation22 + $0x6c4] sm:$0xf]
    %v3814 = vld [vmem:[#allocation22 + $0x6c8] sm:$0xff]
    %v3815 = vld [vmem:[#allocation22 + $0x6d0] sm:$0xff]
    %v3816 = vld [vmem:[#allocation22 + $0x6d8] sm:$0xff]
    %v3817 = vld [vmem:[#allocation22 + $0x6e0] sm:$0xf]
    %v3818 = vld [vmem:[#allocation22 + $0x6e4] sm:$0xff]
    %v3819 = vld [vmem:[#allocation22 + $0x6ec] sm:$0xff]
    %v3820 = vld [vmem:[#allocation22 + $0x6f4] sm:$0xff]
    %v3821 = vld [vmem:[#allocation22 + $0x6fc] sm:$0xf]
    %v3822 = vld [vmem:[#allocation22 + $0x700] sm:$0xff]
    %v3823 = vld [vmem:[#allocation22 + $0x708] sm:$0xff]
    %v3824 = vld [vmem:[#allocation22 + $0x710] sm:$0xff]
    %v3825 = vld [vmem:[#allocation22 + $0x718] sm:$0xf]
    %v3826 = vld [vmem:[#allocation22 + $0x71c] sm:$0xff]
    %v3827 = vld [vmem:[#allocation22 + $0x724] sm:$0xff]
    %v3828 = vld [vmem:[#allocation22 + $0x72c] sm:$0xff]
    %v3829 = vld [vmem:[#allocation22 + $0x734] sm:$0xf]
    %v3830 = vld [vmem:[#allocation22 + $0x738] sm:$0xff]
    %v3831 = vld [vmem:[#allocation22 + $0x740] sm:$0xff]
    %v3832 = vld [vmem:[#allocation22 + $0x748] sm:$0xff]
    %v3833 = vld [vmem:[#allocation22 + $0x750] sm:$0xf]
    %v3834 = vld [vmem:[#allocation22 + $0x754] sm:$0xff]
    %v3835 = vld [vmem:[#allocation22 + $0x75c] sm:$0xff]
    %v3836 = vld [vmem:[#allocation22 + $0x764] sm:$0xff]
    %v3837 = vld [vmem:[#allocation22 + $0x76c] sm:$0xf]
    %v3838 = vld [vmem:[#allocation22 + $0x770] sm:$0xff]
    %v3839 = vld [vmem:[#allocation22 + $0x778] sm:$0xff]
    %v3840 = vld [vmem:[#allocation22 + $0x780] sm:$0xff]
    %v3841 = vld [vmem:[#allocation22 + $0x788] sm:$0xf]
    %v3842 = vld [vmem:[#allocation22 + $0x78c] sm:$0xff]
    %v3843 = vld [vmem:[#allocation22 + $0x794] sm:$0xff]
    %v3844 = vld [vmem:[#allocation22 + $0x79c] sm:$0xff]
    %v3845 = vld [vmem:[#allocation22 + $0x7a4] sm:$0xf]
    %v3846 = vld [vmem:[#allocation22 + $0x7a8] sm:$0xff]
    %v3847 = vld [vmem:[#allocation22 + $0x7b0] sm:$0xff]
    %v3848 = vld [vmem:[#allocation22 + $0x7b8] sm:$0xff]
    %v3849 = vld [vmem:[#allocation22 + $0x7c0] sm:$0xf]
    %v3850 = vld [vmem:[#allocation22 + $0x7c4] sm:$0xff]
    %v3851 = vld [vmem:[#allocation22 + $0x7cc] sm:$0xff]
    %v3852 = vld [vmem:[#allocation22 + $0x7d4] sm:$0xff]
    %v3853 = vld [vmem:[#allocation22 + $0x7dc] sm:$0xf]
    %v3854 = vld [vmem:[#allocation22 + $0x7e0] sm:$0xff]
    %v3855 = vld [vmem:[#allocation22 + $0x7e8] sm:$0xff]
    %v3856 = vld [vmem:[#allocation22 + $0x7f0] sm:$0xff]
    %v3857 = vld [vmem:[#allocation22 + $0x7f8] sm:$0xf]
    %v3858 = vld [vmem:[#allocation22 + $0x7fc] sm:$0xff]
    %v3859 = vld [vmem:[#allocation22 + $0x804] sm:$0xff]
    %v3860 = vld [vmem:[#allocation22 + $0x80c] sm:$0xff]
    %v3861 = vld [vmem:[#allocation22 + $0x814] sm:$0xf]
    %v3862 = vld [vmem:[#allocation22 + $0x818] sm:$0xff]
    %v3863 = vld [vmem:[#allocation22 + $0x820] sm:$0xff]
    %v3864 = vld [vmem:[#allocation22 + $0x828] sm:$0xff]
    %v3865 = vld [vmem:[#allocation22 + $0x830] sm:$0xf]
    %v3866 = vld [vmem:[#allocation22 + $0x834] sm:$0xff]
    %v3867 = vld [vmem:[#allocation22 + $0x83c] sm:$0xff]
    %v3868 = vld [vmem:[#allocation22 + $0x844] sm:$0xff]
    %v3869 = vld [vmem:[#allocation22 + $0x84c] sm:$0xf]
    %v3870 = vld [vmem:[#allocation22 + $0x850] sm:$0xff]
    %v3871 = vld [vmem:[#allocation22 + $0x858] sm:$0xff]
    %v3872 = vld [vmem:[#allocation22 + $0x860] sm:$0xff]
    %v3873 = vld [vmem:[#allocation22 + $0x868] sm:$0xf]
    %v3874 = vld [vmem:[#allocation22 + $0x86c] sm:$0xff]
    %v3875 = vld [vmem:[#allocation22 + $0x874] sm:$0xff]
    %v3876 = vld [vmem:[#allocation22 + $0x87c] sm:$0xff]
    %v3877 = vld [vmem:[#allocation22 + $0x884] sm:$0xf]
    %v3878 = vld [vmem:[#allocation22 + $0x888] sm:$0xff]
    %v3879 = vld [vmem:[#allocation22 + $0x890] sm:$0xff]
    %v3880 = vld [vmem:[#allocation22 + $0x898] sm:$0xff]
    %v3881 = vld [vmem:[#allocation22 + $0x8a0] sm:$0xf]
    %v3882 = vld [vmem:[#allocation22 + $0x8a4] sm:$0xff]
    %v3883 = vld [vmem:[#allocation22 + $0x8ac] sm:$0xff]
    %v3884 = vld [vmem:[#allocation22 + $0x8b4] sm:$0xff]
    %v3885 = vld [vmem:[#allocation22 + $0x8bc] sm:$0xf]
    %v3886 = vld [vmem:[#allocation22 + $0x8c0] sm:$0xff]
    %v3887 = vld [vmem:[#allocation22 + $0x8c8] sm:$0xff]
    %v3888 = vld [vmem:[#allocation22 + $0x8d0] sm:$0xff]
    %v3889 = vld [vmem:[#allocation22 + $0x8d8] sm:$0xf]
    %v3890 = vld [vmem:[#allocation22 + $0x8dc] sm:$0xff]
    %v3891 = vld [vmem:[#allocation22 + $0x8e4] sm:$0xff]
    %v3892 = vld [vmem:[#allocation22 + $0x8ec] sm:$0xff]
    %v3893 = vld [vmem:[#allocation22 + $0x8f4] sm:$0xf]
    %v3894 = vld [vmem:[#allocation22 + $0x8f8] sm:$0xff]
    %v3895 = vld [vmem:[#allocation22 + $0x900] sm:$0xff]
    %v3896 = vld [vmem:[#allocation22 + $0x908] sm:$0xff]
    %v3897 = vld [vmem:[#allocation22 + $0x910] sm:$0xf]
    %v3898 = vld [vmem:[#allocation22 + $0x914] sm:$0xff]
    %v3899 = vld [vmem:[#allocation22 + $0x91c] sm:$0xff]
    %v3900 = vld [vmem:[#allocation22 + $0x924] sm:$0xff]
    %v3901 = vld [vmem:[#allocation22 + $0x92c] sm:$0xf]
    %v3902 = vld [vmem:[#allocation22 + $0x930] sm:$0xff]
    %v3903 = vld [vmem:[#allocation22 + $0x938] sm:$0xff]
    %v3904 = vld [vmem:[#allocation22 + $0x940] sm:$0xff]
    %v3905 = vld [vmem:[#allocation22 + $0x948] sm:$0xf]
    %v3906 = vld [vmem:[#allocation22 + $0x94c] sm:$0xff]
    %v3907 = vld [vmem:[#allocation22 + $0x954] sm:$0xff]
    %v3908 = vld [vmem:[#allocation22 + $0x95c] sm:$0xff]
    %v3909 = vld [vmem:[#allocation22 + $0x964] sm:$0xf]
    %v3910 = vld [vmem:[#allocation22 + $0x968] sm:$0xff]
    %v3911 = vld [vmem:[#allocation22 + $0x970] sm:$0xff]
    %v3912 = vld [vmem:[#allocation22 + $0x978] sm:$0xff]
    %v3913 = vld [vmem:[#allocation22 + $0x980] sm:$0xf]
    %v3914 = vld [vmem:[#allocation22 + $0x984] sm:$0xff]
    %v3915 = vld [vmem:[#allocation22 + $0x98c] sm:$0xff]
    %v3916 = vld [vmem:[#allocation22 + $0x994] sm:$0xff]
    %v3917 = vld [vmem:[#allocation22 + $0x99c] sm:$0xf]
    %v3918 = vld [vmem:[#allocation22 + $0x9a0] sm:$0xff]
    %v3919 = vld [vmem:[#allocation22 + $0x9a8] sm:$0xff]
    %v3920 = vld [vmem:[#allocation22 + $0x9b0] sm:$0xff]
    %v3921 = vld [vmem:[#allocation22 + $0x9b8] sm:$0xf]
    %v3922 = vld [vmem:[#allocation22 + $0x9bc] sm:$0xff]
    %v3923 = vld [vmem:[#allocation22 + $0x9c4] sm:$0xff]
    %v3924 = vld [vmem:[#allocation22 + $0x9cc] sm:$0xff]
    %v3925 = vld [vmem:[#allocation22 + $0x9d4] sm:$0xf]
    %v3926 = vld [vmem:[#allocation22 + $0x9d8] sm:$0xff]
    %v3927 = vld [vmem:[#allocation22 + $0x9e0] sm:$0xff]
    %v3928 = vld [vmem:[#allocation22 + $0x9e8] sm:$0xff]
    %v3929 = vld [vmem:[#allocation22 + $0x9f0] sm:$0xf]
    %v3930 = vld [vmem:[#allocation22 + $0x9f4] sm:$0xff]
    %v3931 = vld [vmem:[#allocation22 + $0x9fc] sm:$0xff]
    %v3932 = vld [vmem:[#allocation22 + $0xa04] sm:$0xff]
    %v3933 = vld [vmem:[#allocation22 + $0xa0c] sm:$0xf]
    %v3934 = vld [vmem:[#allocation22 + $0xa10] sm:$0xff]
    %v3935 = vld [vmem:[#allocation22 + $0xa18] sm:$0xff]
    %v3936 = vld [vmem:[#allocation22 + $0xa20] sm:$0xff]
    %v3937 = vld [vmem:[#allocation22 + $0xa28] sm:$0xf]
    %v3938 = vld [vmem:[#allocation22 + $0xa2c] sm:$0xff]
    %v3939 = vld [vmem:[#allocation22 + $0xa34] sm:$0xff]
    %v3940 = vld [vmem:[#allocation22 + $0xa3c] sm:$0xff]
    %v3941 = vld [vmem:[#allocation22 + $0xa44] sm:$0xf]
    %v3942 = vld [vmem:[#allocation22 + $0xa48] sm:$0xff]
    %v3943 = vld [vmem:[#allocation22 + $0xa50] sm:$0xff]
    %v3944 = vld [vmem:[#allocation22 + $0xa58] sm:$0xff]
    %v3945 = vld [vmem:[#allocation22 + $0xa60] sm:$0xf]
    %v3946 = vld [vmem:[#allocation22 + $0xa64] sm:$0xff]
    %v3947 = vld [vmem:[#allocation22 + $0xa6c] sm:$0xff]
    %v3948 = vld [vmem:[#allocation22 + $0xa74] sm:$0xff]
    %v3949 = vld [vmem:[#allocation22 + $0xa7c] sm:$0xf]
    %v3950 = vld [vmem:[#allocation22 + $0xa80] sm:$0xff]
    %v3951 = vld [vmem:[#allocation22 + $0xa88] sm:$0xff]
    %v3952 = vld [vmem:[#allocation22 + $0xa90] sm:$0xff]
    %v3953 = vld [vmem:[#allocation22 + $0xa98] sm:$0xf]
    %v3954 = vld [vmem:[#allocation22 + $0xa9c] sm:$0xff]
    %v3955 = vld [vmem:[#allocation22 + $0xaa4] sm:$0xff]
    %v3956 = vld [vmem:[#allocation22 + $0xaac] sm:$0xff]
    %v3957 = vld [vmem:[#allocation22 + $0xab4] sm:$0xf]
    %v3958 = vld [vmem:[#allocation22 + $0xab8] sm:$0xff]
    %v3959 = vld [vmem:[#allocation22 + $0xac0] sm:$0xff]
    %v3960 = vld [vmem:[#allocation22 + $0xac8] sm:$0xff]
    %v3961 = vld [vmem:[#allocation22 + $0xad0] sm:$0xf]
    %v3962 = vld [vmem:[#allocation22 + $0xad4] sm:$0xff]
    %v3963 = vld [vmem:[#allocation22 + $0xadc] sm:$0xff]
    %v3964 = vld [vmem:[#allocation22 + $0xae4] sm:$0xff]
    %v3965 = vld [vmem:[#allocation22 + $0xaec] sm:$0xf]
    %v3966 = vld [vmem:[#allocation22 + $0xaf0] sm:$0xff]
    %v3967 = vld [vmem:[#allocation22 + $0xaf8] sm:$0xff]
    %v3968 = vld [vmem:[#allocation22 + $0xb00] sm:$0xff]
    %v3969 = vld [vmem:[#allocation22 + $0xb08] sm:$0xf]
    %v3970 = vld [vmem:[#allocation22 + $0xb0c] sm:$0xff]
    %v3971 = vld [vmem:[#allocation22 + $0xb14] sm:$0xff]
    %v3972 = vld [vmem:[#allocation22 + $0xb1c] sm:$0xff]
    %v3973 = vld [vmem:[#allocation22 + $0xb24] sm:$0xf]
    %v3974 = vld [vmem:[#allocation22 + $0xb28] sm:$0xff]
    %v3975 = vld [vmem:[#allocation22 + $0xb30] sm:$0xff]
    %v3976 = vld [vmem:[#allocation22 + $0xb38] sm:$0xff]
    %v3977 = vld [vmem:[#allocation22 + $0xb40] sm:$0xf]
    %v3978 = vld [vmem:[#allocation22 + $0xb44] sm:$0xff]
    %v3979 = vld [vmem:[#allocation22 + $0xb4c] sm:$0xff]
    %v3980 = vld [vmem:[#allocation22 + $0xb54] sm:$0xff]
    %v3981 = vld [vmem:[#allocation22 + $0xb5c] sm:$0xf]
    %v3982 = vld [vmem:[#allocation22 + $0xb60] sm:$0xff]
    %v3983 = vld [vmem:[#allocation22 + $0xb68] sm:$0xff]
    %v3984 = vld [vmem:[#allocation22 + $0xb70] sm:$0xff]
    %v3985 = vld [vmem:[#allocation22 + $0xb78] sm:$0xf]
    %v3986 = vld [vmem:[#allocation22 + $0xb7c] sm:$0xff]
    %v3987 = vld [vmem:[#allocation22 + $0xb84] sm:$0xff]
    %v3988 = vld [vmem:[#allocation22 + $0xb8c] sm:$0xff]
    %v3989 = vld [vmem:[#allocation22 + $0xb94] sm:$0xf]
    %v3990 = vld [vmem:[#allocation22 + $0xb98] sm:$0xff]
    %v3991 = vld [vmem:[#allocation22 + $0xba0] sm:$0xff]
    %v3992 = vld [vmem:[#allocation22 + $0xba8] sm:$0xff]
    %v3993 = vld [vmem:[#allocation22 + $0xbb0] sm:$0xf]
    %v3994 = vld [vmem:[#allocation22 + $0xbb4] sm:$0xff]
    %v3995 = vld [vmem:[#allocation22 + $0xbbc] sm:$0xff]
    %v3996 = vld [vmem:[#allocation22 + $0xbc4] sm:$0xff]
    %v3997 = vld [vmem:[#allocation22 + $0xbcc] sm:$0xf]
    %v3998 = vld [vmem:[#allocation22 + $0xbd0] sm:$0xff]
    %v3999 = vld [vmem:[#allocation22 + $0xbd8] sm:$0xff]
    %v4000 = vld [vmem:[#allocation22 + $0xbe0] sm:$0xff]
    %v4001 = vld [vmem:[#allocation22 + $0xbe8] sm:$0xf]
    %v4002 = vld [vmem:[#allocation22 + $0xbec] sm:$0xff]
    %v4003 = vld [vmem:[#allocation22 + $0xbf4] sm:$0xff]
    %v4004 = vld [vmem:[#allocation22 + $0xbfc] sm:$0xff]
    %v4005 = vld [vmem:[#allocation22 + $0xc04] sm:$0xf]
    %v4006 = vld [vmem:[#allocation22 + $0xc08] sm:$0xff]
    %v4007 = vld [vmem:[#allocation22 + $0xc10] sm:$0xff]
    %v4008 = vld [vmem:[#allocation22 + $0xc18] sm:$0xff]
    %v4009 = vld [vmem:[#allocation22 + $0xc20] sm:$0xf]
    %v4010 = vld [vmem:[#allocation22 + $0xc24] sm:$0xff]
    %v4011 = vld [vmem:[#allocation22 + $0xc2c] sm:$0xff]
    %v4012 = vld [vmem:[#allocation22 + $0xc34] sm:$0xff]
    %v4013 = vld [vmem:[#allocation22 + $0xc3c] sm:$0xf]
    %v4014 = vld [vmem:[#allocation22 + $0xc40] sm:$0xff]
    %v4015 = vld [vmem:[#allocation22 + $0xc48] sm:$0xff]
    %v4016 = vld [vmem:[#allocation22 + $0xc50] sm:$0xff]
    %v4017 = vld [vmem:[#allocation22 + $0xc58] sm:$0xf]
    %v4018 = vld [vmem:[#allocation22 + $0xc5c] sm:$0xff]
    %v4019 = vld [vmem:[#allocation22 + $0xc64] sm:$0xff]
    %v4020 = vld [vmem:[#allocation22 + $0xc6c] sm:$0xff]
    %v4021 = vld [vmem:[#allocation22 + $0xc74] sm:$0xf]
    %v4022 = vld [vmem:[#allocation22 + $0xc78] sm:$0xff]
    %v4023 = vld [vmem:[#allocation22 + $0xc80] sm:$0xff]
    %v4024 = vld [vmem:[#allocation22 + $0xc88] sm:$0xff]
    %v4025 = vld [vmem:[#allocation22 + $0xc90] sm:$0xf]
    %v4026 = vld [vmem:[#allocation22 + $0xc94] sm:$0xff]
    %v4027 = vld [vmem:[#allocation22 + $0xc9c] sm:$0xff]
    %v4028 = vld [vmem:[#allocation22 + $0xca4] sm:$0xff]
    %v4029 = vld [vmem:[#allocation22 + $0xcac] sm:$0xf]
    %v4030 = vld [vmem:[#allocation22 + $0xcb0] sm:$0xff]
    %v4031 = vld [vmem:[#allocation22 + $0xcb8] sm:$0xff]
    %v4032 = vld [vmem:[#allocation22 + $0xcc0] sm:$0xff]
    %v4033 = vld [vmem:[#allocation22 + $0xcc8] sm:$0xf]
    %v4034 = vld [vmem:[#allocation22 + $0xccc] sm:$0xff]
    %v4035 = vld [vmem:[#allocation22 + $0xcd4] sm:$0xff]
    %v4036 = vld [vmem:[#allocation22 + $0xcdc] sm:$0xff]
    %v4037 = vld [vmem:[#allocation22 + $0xce4] sm:$0xf]
    %v4038 = vld [vmem:[#allocation22 + $0xce8] sm:$0xff]
    %v4039 = vld [vmem:[#allocation22 + $0xcf0] sm:$0xff]
    %v4040 = vld [vmem:[#allocation22 + $0xcf8] sm:$0xff]
    %v4041 = vld [vmem:[#allocation22 + $0xd00] sm:$0xf]
    %v4042 = vld [vmem:[#allocation22 + $0xd04] sm:$0xff]
    %v4043 = vld [vmem:[#allocation22 + $0xd0c] sm:$0xff]
    %v4044 = vld [vmem:[#allocation22 + $0xd14] sm:$0xff]
    %v4045 = vld [vmem:[#allocation22 + $0xd1c] sm:$0xf]
    %v4046 = vld [vmem:[#allocation22 + $0xd20] sm:$0xff]
    %v4047 = vld [vmem:[#allocation22 + $0xd28] sm:$0xff]
    %v4048 = vld [vmem:[#allocation22 + $0xd30] sm:$0xff]
    %v4049 = vld [vmem:[#allocation22 + $0xd38] sm:$0xf]
    %v4050 = vld [vmem:[#allocation22 + $0xd3c] sm:$0xff]
    %v4051 = vld [vmem:[#allocation22 + $0xd44] sm:$0xff]
    %v4052 = vld [vmem:[#allocation22 + $0xd4c] sm:$0xff]
    %v4053 = vld [vmem:[#allocation22 + $0xd54] sm:$0xf]
    %v4054 = vld [vmem:[#allocation22 + $0xd58] sm:$0xff]
    %v4055 = vld [vmem:[#allocation22 + $0xd60] sm:$0xff]
    %v4056 = vld [vmem:[#allocation22 + $0xd68] sm:$0xff]
    %v4057 = vld [vmem:[#allocation22 + $0xd70] sm:$0xf]
    %v4058 = vld [vmem:[#allocation22 + $0xd74] sm:$0xff]
    %v4059 = vld [vmem:[#allocation22 + $0xd7c] sm:$0xff]
    %v4060 = vld [vmem:[#allocation22 + $0xd84] sm:$0xff]
    %v4061 = vld [vmem:[#allocation22 + $0xd8c] sm:$0xf]
    %v4062 = vld [vmem:[#allocation22 + $0xd90] sm:$0xff]
    %v4063 = vld [vmem:[#allocation22 + $0xd98] sm:$0xff]
    %v4064 = vld [vmem:[#allocation22 + $0xda0] sm:$0xff]
    %v4065 = vld [vmem:[#allocation22 + $0xda8] sm:$0xf]
    %v4066 = vld [vmem:[#allocation22 + $0xdac] sm:$0xff]
    %v4067 = vld [vmem:[#allocation22 + $0xdb4] sm:$0xff]
    %v4068 = vld [vmem:[#allocation22 + $0xdbc] sm:$0xff]
    %v4069 = vld [vmem:[#allocation22 + $0xdc4] sm:$0xf]
    %v4070 = vld [vmem:[#allocation22 + $0xdc8] sm:$0xff]
    %v4071 = vld [vmem:[#allocation22 + $0xdd0] sm:$0xff]
    %v4072 = vld [vmem:[#allocation22 + $0xdd8] sm:$0xff]
    %v4073 = vld [vmem:[#allocation22 + $0xde0] sm:$0xf]
    %v4074 = vld [vmem:[#allocation22 + $0xde4] sm:$0xff]
    %v4075 = vld [vmem:[#allocation22 + $0xdec] sm:$0xff]
    %v4076 = vld [vmem:[#allocation22 + $0xdf4] sm:$0xff]
    %v4077 = vld [vmem:[#allocation22 + $0xdfc] sm:$0xf]
    %v4078 = vld [vmem:[#allocation23] sm:$0xff]
    %v4080 = vperm.slane %v4078, 0
    %v4081 = vperm.slane %v4078, 1
    %v4082 = vperm.slane %v4078, 2
    %v4083 = vperm.slane %v4078, 3
    %v4084 = vperm.slane %v4078, 4
    %v4085 = vperm.slane %v4078, 5
    %v4086 = vperm.slane %v4078, 6
    %v4606 = vunpack.c.l.b16 %v3566
    %v4607 = vunpack.c.h.b16 %v3566
    %v4608 = vunpack.c.l.b16 %v3567
    %v4609 = vunpack.c.h.b16 %v3567
    %v4610 = vunpack.c.l.b16 %v3568
    %v4611 = vunpack.c.h.b16 %v3568
    %v4612 = vunpack.c.l.b16 %v3569
    %v4613 = vunpack.c.l.b16 %v3570
    %v4614 = vunpack.c.h.b16 %v3570
    %v4615 = vunpack.c.l.b16 %v3571
    %v4616 = vunpack.c.h.b16 %v3571
    %v4617 = vunpack.c.l.b16 %v3572
    %v4618 = vunpack.c.h.b16 %v3572
    %v4619 = vunpack.c.l.b16 %v3573
    %v4620 = vunpack.c.l.b16 %v3574
    %v4621 = vunpack.c.h.b16 %v3574
    %v4622 = vunpack.c.l.b16 %v3575
    %v4623 = vunpack.c.h.b16 %v3575
    %v4624 = vunpack.c.l.b16 %v3576
    %v4625 = vunpack.c.h.b16 %v3576
    %v4626 = vunpack.c.l.b16 %v3577
    %v4627 = vunpack.c.l.b16 %v3578
    %v4628 = vunpack.c.h.b16 %v3578
    %v4629 = vunpack.c.l.b16 %v3579
    %v4630 = vunpack.c.h.b16 %v3579
    %v4631 = vunpack.c.l.b16 %v3580
    %v4632 = vunpack.c.h.b16 %v3580
    %v4633 = vunpack.c.l.b16 %v3581
    %v4634 = vunpack.c.l.b16 %v3582
    %v4635 = vunpack.c.h.b16 %v3582
    %v4636 = vunpack.c.l.b16 %v3583
    %v4637 = vunpack.c.h.b16 %v3583
    %v4638 = vunpack.c.l.b16 %v3584
    %v4639 = vunpack.c.h.b16 %v3584
    %v4640 = vunpack.c.l.b16 %v3585
    %v4641 = vunpack.c.l.b16 %v3586
    %v4642 = vunpack.c.h.b16 %v3586
    %v4643 = vunpack.c.l.b16 %v3587
    %v4644 = vunpack.c.h.b16 %v3587
    %v4645 = vunpack.c.l.b16 %v3588
    %v4646 = vunpack.c.h.b16 %v3588
    %v4647 = vunpack.c.l.b16 %v3589
    %v4648 = vunpack.c.l.b16 %v3590
    %v4649 = vunpack.c.h.b16 %v3590
    %v4650 = vunpack.c.l.b16 %v3591
    %v4651 = vunpack.c.h.b16 %v3591
    %v4652 = vunpack.c.l.b16 %v3592
    %v4653 = vunpack.c.h.b16 %v3592
    %v4654 = vunpack.c.l.b16 %v3593
    %v4655 = vunpack.c.l.b16 %v3594
    %v4656 = vunpack.c.h.b16 %v3594
    %v4657 = vunpack.c.l.b16 %v3595
    %v4658 = vunpack.c.h.b16 %v3595
    %v4659 = vunpack.c.l.b16 %v3596
    %v4660 = vunpack.c.h.b16 %v3596
    %v4661 = vunpack.c.l.b16 %v3597
    %v4662 = vunpack.c.l.b16 %v3598
    %v4663 = vunpack.c.h.b16 %v3598
    %v4664 = vunpack.c.l.b16 %v3599
    %v4665 = vunpack.c.h.b16 %v3599
    %v4666 = vunpack.c.l.b16 %v3600
    %v4667 = vunpack.c.h.b16 %v3600
    %v4668 = vunpack.c.l.b16 %v3601
    %v4669 = vunpack.c.l.b16 %v3602
    %v4670 = vunpack.c.h.b16 %v3602
    %v4671 = vunpack.c.l.b16 %v3603
    %v4672 = vunpack.c.h.b16 %v3603
    %v4673 = vunpack.c.l.b16 %v3604
    %v4674 = vunpack.c.h.b16 %v3604
    %v4675 = vunpack.c.l.b16 %v3605
    %v4676 = vunpack.c.l.b16 %v3606
    %v4677 = vunpack.c.h.b16 %v3606
    %v4678 = vunpack.c.l.b16 %v3607
    %v4679 = vunpack.c.h.b16 %v3607
    %v4680 = vunpack.c.l.b16 %v3608
    %v4681 = vunpack.c.h.b16 %v3608
    %v4682 = vunpack.c.l.b16 %v3609
    %v4683 = vunpack.c.l.b16 %v3610
    %v4684 = vunpack.c.h.b16 %v3610
    %v4685 = vunpack.c.l.b16 %v3611
    %v4686 = vunpack.c.h.b16 %v3611
    %v4687 = vunpack.c.l.b16 %v3612
    %v4688 = vunpack.c.h.b16 %v3612
    %v4689 = vunpack.c.l.b16 %v3613
    %v4690 = vunpack.c.l.b16 %v3614
    %v4691 = vunpack.c.h.b16 %v3614
    %v4692 = vunpack.c.l.b16 %v3615
    %v4693 = vunpack.c.h.b16 %v3615
    %v4694 = vunpack.c.l.b16 %v3616
    %v4695 = vunpack.c.h.b16 %v3616
    %v4696 = vunpack.c.l.b16 %v3617
    %v4697 = vunpack.c.l.b16 %v3618
    %v4698 = vunpack.c.h.b16 %v3618
    %v4699 = vunpack.c.l.b16 %v3619
    %v4700 = vunpack.c.h.b16 %v3619
    %v4701 = vunpack.c.l.b16 %v3620
    %v4702 = vunpack.c.h.b16 %v3620
    %v4703 = vunpack.c.l.b16 %v3621
    %v4704 = vunpack.c.l.b16 %v3622
    %v4705 = vunpack.c.h.b16 %v3622
    %v4706 = vunpack.c.l.b16 %v3623
    %v4707 = vunpack.c.h.b16 %v3623
    %v4708 = vunpack.c.l.b16 %v3624
    %v4709 = vunpack.c.h.b16 %v3624
    %v4710 = vunpack.c.l.b16 %v3625
    %v4711 = vunpack.c.l.b16 %v3626
    %v4712 = vunpack.c.h.b16 %v3626
    %v4713 = vunpack.c.l.b16 %v3627
    %v4714 = vunpack.c.h.b16 %v3627
    %v4715 = vunpack.c.l.b16 %v3628
    %v4716 = vunpack.c.h.b16 %v3628
    %v4717 = vunpack.c.l.b16 %v3629
    %v4718 = vunpack.c.l.b16 %v3630
    %v4719 = vunpack.c.h.b16 %v3630
    %v4720 = vunpack.c.l.b16 %v3631
    %v4721 = vunpack.c.h.b16 %v3631
    %v4722 = vunpack.c.l.b16 %v3632
    %v4723 = vunpack.c.h.b16 %v3632
    %v4724 = vunpack.c.l.b16 %v3633
    %v4725 = vunpack.c.l.b16 %v3634
    %v4726 = vunpack.c.h.b16 %v3634
    %v4727 = vunpack.c.l.b16 %v3635
    %v4728 = vunpack.c.h.b16 %v3635
    %v4729 = vunpack.c.l.b16 %v3636
    %v4730 = vunpack.c.h.b16 %v3636
    %v4731 = vunpack.c.l.b16 %v3637
    %v4732 = vunpack.c.l.b16 %v3638
    %v4733 = vunpack.c.h.b16 %v3638
    %v4734 = vunpack.c.l.b16 %v3639
    %v4735 = vunpack.c.h.b16 %v3639
    %v4736 = vunpack.c.l.b16 %v3640
    %v4737 = vunpack.c.h.b16 %v3640
    %v4738 = vunpack.c.l.b16 %v3641
    %v4739 = vunpack.c.l.b16 %v3642
    %v4740 = vunpack.c.h.b16 %v3642
    %v4741 = vunpack.c.l.b16 %v3643
    %v4742 = vunpack.c.h.b16 %v3643
    %v4743 = vunpack.c.l.b16 %v3644
    %v4744 = vunpack.c.h.b16 %v3644
    %v4745 = vunpack.c.l.b16 %v3645
    %v4746 = vunpack.c.l.b16 %v3646
    %v4747 = vunpack.c.h.b16 %v3646
    %v4748 = vunpack.c.l.b16 %v3647
    %v4749 = vunpack.c.h.b16 %v3647
    %v4750 = vunpack.c.l.b16 %v3648
    %v4751 = vunpack.c.h.b16 %v3648
    %v4752 = vunpack.c.l.b16 %v3649
    %v4753 = vunpack.c.l.b16 %v3650
    %v4754 = vunpack.c.h.b16 %v3650
    %v4755 = vunpack.c.l.b16 %v3651
    %v4756 = vunpack.c.h.b16 %v3651
    %v4757 = vunpack.c.l.b16 %v3652
    %v4758 = vunpack.c.h.b16 %v3652
    %v4759 = vunpack.c.l.b16 %v3653
    %v4760 = vunpack.c.l.b16 %v3654
    %v4761 = vunpack.c.h.b16 %v3654
    %v4762 = vunpack.c.l.b16 %v3655
    %v4763 = vunpack.c.h.b16 %v3655
    %v4764 = vunpack.c.l.b16 %v3656
    %v4765 = vunpack.c.h.b16 %v3656
    %v4766 = vunpack.c.l.b16 %v3657
    %v4767 = vunpack.c.l.b16 %v3658
    %v4768 = vunpack.c.h.b16 %v3658
    %v4769 = vunpack.c.l.b16 %v3659
    %v4770 = vunpack.c.h.b16 %v3659
    %v4771 = vunpack.c.l.b16 %v3660
    %v4772 = vunpack.c.h.b16 %v3660
    %v4773 = vunpack.c.l.b16 %v3661
    %v4774 = vunpack.c.l.b16 %v3662
    %v4775 = vunpack.c.h.b16 %v3662
    %v4776 = vunpack.c.l.b16 %v3663
    %v4777 = vunpack.c.h.b16 %v3663
    %v4778 = vunpack.c.l.b16 %v3664
    %v4779 = vunpack.c.h.b16 %v3664
    %v4780 = vunpack.c.l.b16 %v3665
    %v4781 = vunpack.c.l.b16 %v3666
    %v4782 = vunpack.c.h.b16 %v3666
    %v4783 = vunpack.c.l.b16 %v3667
    %v4784 = vunpack.c.h.b16 %v3667
    %v4785 = vunpack.c.l.b16 %v3668
    %v4786 = vunpack.c.h.b16 %v3668
    %v4787 = vunpack.c.l.b16 %v3669
    %v4788 = vunpack.c.l.b16 %v3670
    %v4789 = vunpack.c.h.b16 %v3670
    %v4790 = vunpack.c.l.b16 %v3671
    %v4791 = vunpack.c.h.b16 %v3671
    %v4792 = vunpack.c.l.b16 %v3672
    %v4793 = vunpack.c.h.b16 %v3672
    %v4794 = vunpack.c.l.b16 %v3673
    %v4795 = vunpack.c.l.b16 %v3674
    %v4796 = vunpack.c.h.b16 %v3674
    %v4797 = vunpack.c.l.b16 %v3675
    %v4798 = vunpack.c.h.b16 %v3675
    %v4799 = vunpack.c.l.b16 %v3676
    %v4800 = vunpack.c.h.b16 %v3676
    %v4801 = vunpack.c.l.b16 %v3677
    %v4802 = vunpack.c.l.b16 %v3678
    %v4803 = vunpack.c.h.b16 %v3678
    %v4804 = vunpack.c.l.b16 %v3679
    %v4805 = vunpack.c.h.b16 %v3679
    %v4806 = vunpack.c.l.b16 %v3680
    %v4807 = vunpack.c.h.b16 %v3680
    %v4808 = vunpack.c.l.b16 %v3681
    %v4809 = vunpack.c.l.b16 %v3682
    %v4810 = vunpack.c.h.b16 %v3682
    %v4811 = vunpack.c.l.b16 %v3683
    %v4812 = vunpack.c.h.b16 %v3683
    %v4813 = vunpack.c.l.b16 %v3684
    %v4814 = vunpack.c.h.b16 %v3684
    %v4815 = vunpack.c.l.b16 %v3685
    %v4816 = vunpack.c.l.b16 %v3686
    %v4817 = vunpack.c.h.b16 %v3686
    %v4818 = vunpack.c.l.b16 %v3687
    %v4819 = vunpack.c.h.b16 %v3687
    %v4820 = vunpack.c.l.b16 %v3688
    %v4821 = vunpack.c.h.b16 %v3688
    %v4822 = vunpack.c.l.b16 %v3689
    %v4823 = vunpack.c.l.b16 %v3690
    %v4824 = vunpack.c.h.b16 %v3690
    %v4825 = vunpack.c.l.b16 %v3691
    %v4826 = vunpack.c.h.b16 %v3691
    %v4827 = vunpack.c.l.b16 %v3692
    %v4828 = vunpack.c.h.b16 %v3692
    %v4829 = vunpack.c.l.b16 %v3693
    %v4830 = vunpack.c.l.b16 %v3694
    %v4831 = vunpack.c.h.b16 %v3694
    %v4832 = vunpack.c.l.b16 %v3695
    %v4833 = vunpack.c.h.b16 %v3695
    %v4834 = vunpack.c.l.b16 %v3696
    %v4835 = vunpack.c.h.b16 %v3696
    %v4836 = vunpack.c.l.b16 %v3697
    %v4837 = vunpack.c.l.b16 %v3698
    %v4838 = vunpack.c.h.b16 %v3698
    %v4839 = vunpack.c.l.b16 %v3699
    %v4840 = vunpack.c.h.b16 %v3699
    %v4841 = vunpack.c.l.b16 %v3700
    %v4842 = vunpack.c.h.b16 %v3700
    %v4843 = vunpack.c.l.b16 %v3701
    %v4844 = vunpack.c.l.b16 %v3702
    %v4845 = vunpack.c.h.b16 %v3702
    %v4846 = vunpack.c.l.b16 %v3703
    %v4847 = vunpack.c.h.b16 %v3703
    %v4848 = vunpack.c.l.b16 %v3704
    %v4849 = vunpack.c.h.b16 %v3704
    %v4850 = vunpack.c.l.b16 %v3705
    %v4851 = vunpack.c.l.b16 %v3706
    %v4852 = vunpack.c.h.b16 %v3706
    %v4853 = vunpack.c.l.b16 %v3707
    %v4854 = vunpack.c.h.b16 %v3707
    %v4855 = vunpack.c.l.b16 %v3708
    %v4856 = vunpack.c.h.b16 %v3708
    %v4857 = vunpack.c.l.b16 %v3709
    %v4858 = vunpack.c.l.b16 %v3710
    %v4859 = vunpack.c.h.b16 %v3710
    %v4860 = vunpack.c.l.b16 %v3711
    %v4861 = vunpack.c.h.b16 %v3711
    %v4862 = vunpack.c.l.b16 %v3712
    %v4863 = vunpack.c.h.b16 %v3712
    %v4864 = vunpack.c.l.b16 %v3713
    %v4865 = vunpack.c.l.b16 %v3714
    %v4866 = vunpack.c.h.b16 %v3714
    %v4867 = vunpack.c.l.b16 %v3715
    %v4868 = vunpack.c.h.b16 %v3715
    %v4869 = vunpack.c.l.b16 %v3716
    %v4870 = vunpack.c.h.b16 %v3716
    %v4871 = vunpack.c.l.b16 %v3717
    %v4872 = vunpack.c.l.b16 %v3718
    %v4873 = vunpack.c.h.b16 %v3718
    %v4874 = vunpack.c.l.b16 %v3719
    %v4875 = vunpack.c.h.b16 %v3719
    %v4876 = vunpack.c.l.b16 %v3720
    %v4877 = vunpack.c.h.b16 %v3720
    %v4878 = vunpack.c.l.b16 %v3721
    %v4879 = vunpack.c.l.b16 %v3722
    %v4880 = vunpack.c.h.b16 %v3722
    %v4881 = vunpack.c.l.b16 %v3723
    %v4882 = vunpack.c.h.b16 %v3723
    %v4883 = vunpack.c.l.b16 %v3724
    %v4884 = vunpack.c.h.b16 %v3724
    %v4885 = vunpack.c.l.b16 %v3725
    %v4886 = vunpack.c.l.b16 %v3726
    %v4887 = vunpack.c.h.b16 %v3726
    %v4888 = vunpack.c.l.b16 %v3727
    %v4889 = vunpack.c.h.b16 %v3727
    %v4890 = vunpack.c.l.b16 %v3728
    %v4891 = vunpack.c.h.b16 %v3728
    %v4892 = vunpack.c.l.b16 %v3729
    %v4893 = vunpack.c.l.b16 %v3730
    %v4894 = vunpack.c.h.b16 %v3730
    %v4895 = vunpack.c.l.b16 %v3731
    %v4896 = vunpack.c.h.b16 %v3731
    %v4897 = vunpack.c.l.b16 %v3732
    %v4898 = vunpack.c.h.b16 %v3732
    %v4899 = vunpack.c.l.b16 %v3733
    %v4900 = vunpack.c.l.b16 %v3734
    %v4901 = vunpack.c.h.b16 %v3734
    %v4902 = vunpack.c.l.b16 %v3735
    %v4903 = vunpack.c.h.b16 %v3735
    %v4904 = vunpack.c.l.b16 %v3736
    %v4905 = vunpack.c.h.b16 %v3736
    %v4906 = vunpack.c.l.b16 %v3737
    %v4907 = vunpack.c.l.b16 %v3738
    %v4908 = vunpack.c.h.b16 %v3738
    %v4909 = vunpack.c.l.b16 %v3739
    %v4910 = vunpack.c.h.b16 %v3739
    %v4911 = vunpack.c.l.b16 %v3740
    %v4912 = vunpack.c.h.b16 %v3740
    %v4913 = vunpack.c.l.b16 %v3741
    %v4914 = vunpack.c.l.b16 %v3742
    %v4915 = vunpack.c.h.b16 %v3742
    %v4916 = vunpack.c.l.b16 %v3743
    %v4917 = vunpack.c.h.b16 %v3743
    %v4918 = vunpack.c.l.b16 %v3744
    %v4919 = vunpack.c.h.b16 %v3744
    %v4920 = vunpack.c.l.b16 %v3745
    %v4921 = vunpack.c.l.b16 %v3746
    %v4922 = vunpack.c.h.b16 %v3746
    %v4923 = vunpack.c.l.b16 %v3747
    %v4924 = vunpack.c.h.b16 %v3747
    %v4925 = vunpack.c.l.b16 %v3748
    %v4926 = vunpack.c.h.b16 %v3748
    %v4927 = vunpack.c.l.b16 %v3749
    %v4928 = vunpack.c.l.b16 %v3750
    %v4929 = vunpack.c.h.b16 %v3750
    %v4930 = vunpack.c.l.b16 %v3751
    %v4931 = vunpack.c.h.b16 %v3751
    %v4932 = vunpack.c.l.b16 %v3752
    %v4933 = vunpack.c.h.b16 %v3752
    %v4934 = vunpack.c.l.b16 %v3753
    %v4935 = vunpack.c.l.b16 %v3754
    %v4936 = vunpack.c.h.b16 %v3754
    %v4937 = vunpack.c.l.b16 %v3755
    %v4938 = vunpack.c.h.b16 %v3755
    %v4939 = vunpack.c.l.b16 %v3756
    %v4940 = vunpack.c.h.b16 %v3756
    %v4941 = vunpack.c.l.b16 %v3757
    %v4942 = vunpack.c.l.b16 %v3758
    %v4943 = vunpack.c.h.b16 %v3758
    %v4944 = vunpack.c.l.b16 %v3759
    %v4945 = vunpack.c.h.b16 %v3759
    %v4946 = vunpack.c.l.b16 %v3760
    %v4947 = vunpack.c.h.b16 %v3760
    %v4948 = vunpack.c.l.b16 %v3761
    %v4949 = vunpack.c.l.b16 %v3762
    %v4950 = vunpack.c.h.b16 %v3762
    %v4951 = vunpack.c.l.b16 %v3763
    %v4952 = vunpack.c.h.b16 %v3763
    %v4953 = vunpack.c.l.b16 %v3764
    %v4954 = vunpack.c.h.b16 %v3764
    %v4955 = vunpack.c.l.b16 %v3765
    %v4956 = vunpack.c.l.b16 %v3766
    %v4957 = vunpack.c.h.b16 %v3766
    %v4958 = vunpack.c.l.b16 %v3767
    %v4959 = vunpack.c.h.b16 %v3767
    %v4960 = vunpack.c.l.b16 %v3768
    %v4961 = vunpack.c.h.b16 %v3768
    %v4962 = vunpack.c.l.b16 %v3769
    %v4963 = vunpack.c.l.b16 %v3770
    %v4964 = vunpack.c.h.b16 %v3770
    %v4965 = vunpack.c.l.b16 %v3771
    %v4966 = vunpack.c.h.b16 %v3771
    %v4967 = vunpack.c.l.b16 %v3772
    %v4968 = vunpack.c.h.b16 %v3772
    %v4969 = vunpack.c.l.b16 %v3773
    %v4970 = vunpack.c.l.b16 %v3774
    %v4971 = vunpack.c.h.b16 %v3774
    %v4972 = vunpack.c.l.b16 %v3775
    %v4973 = vunpack.c.h.b16 %v3775
    %v4974 = vunpack.c.l.b16 %v3776
    %v4975 = vunpack.c.h.b16 %v3776
    %v4976 = vunpack.c.l.b16 %v3777
    %v4977 = vunpack.c.l.b16 %v3778
    %v4978 = vunpack.c.h.b16 %v3778
    %v4979 = vunpack.c.l.b16 %v3779
    %v4980 = vunpack.c.h.b16 %v3779
    %v4981 = vunpack.c.l.b16 %v3780
    %v4982 = vunpack.c.h.b16 %v3780
    %v4983 = vunpack.c.l.b16 %v3781
    %v4984 = vunpack.c.l.b16 %v3782
    %v4985 = vunpack.c.h.b16 %v3782
    %v4986 = vunpack.c.l.b16 %v3783
    %v4987 = vunpack.c.h.b16 %v3783
    %v4988 = vunpack.c.l.b16 %v3784
    %v4989 = vunpack.c.h.b16 %v3784
    %v4990 = vunpack.c.l.b16 %v3785
    %v4991 = vunpack.c.l.b16 %v3786
    %v4992 = vunpack.c.h.b16 %v3786
    %v4993 = vunpack.c.l.b16 %v3787
    %v4994 = vunpack.c.h.b16 %v3787
    %v4995 = vunpack.c.l.b16 %v3788
    %v4996 = vunpack.c.h.b16 %v3788
    %v4997 = vunpack.c.l.b16 %v3789
    %v4998 = vunpack.c.l.b16 %v3790
    %v4999 = vunpack.c.h.b16 %v3790
    %v5000 = vunpack.c.l.b16 %v3791
    %v5001 = vunpack.c.h.b16 %v3791
    %v5002 = vunpack.c.l.b16 %v3792
    %v5003 = vunpack.c.h.b16 %v3792
    %v5004 = vunpack.c.l.b16 %v3793
    %v5005 = vunpack.c.l.b16 %v3794
    %v5006 = vunpack.c.h.b16 %v3794
    %v5007 = vunpack.c.l.b16 %v3795
    %v5008 = vunpack.c.h.b16 %v3795
    %v5009 = vunpack.c.l.b16 %v3796
    %v5010 = vunpack.c.h.b16 %v3796
    %v5011 = vunpack.c.l.b16 %v3797
    %v5012 = vunpack.c.l.b16 %v3798
    %v5013 = vunpack.c.h.b16 %v3798
    %v5014 = vunpack.c.l.b16 %v3799
    %v5015 = vunpack.c.h.b16 %v3799
    %v5016 = vunpack.c.l.b16 %v3800
    %v5017 = vunpack.c.h.b16 %v3800
    %v5018 = vunpack.c.l.b16 %v3801
    %v5019 = vunpack.c.l.b16 %v3802
    %v5020 = vunpack.c.h.b16 %v3802
    %v5021 = vunpack.c.l.b16 %v3803
    %v5022 = vunpack.c.h.b16 %v3803
    %v5023 = vunpack.c.l.b16 %v3804
    %v5024 = vunpack.c.h.b16 %v3804
    %v5025 = vunpack.c.l.b16 %v3805
    %v5026 = vunpack.c.l.b16 %v3806
    %v5027 = vunpack.c.h.b16 %v3806
    %v5028 = vunpack.c.l.b16 %v3807
    %v5029 = vunpack.c.h.b16 %v3807
    %v5030 = vunpack.c.l.b16 %v3808
    %v5031 = vunpack.c.h.b16 %v3808
    %v5032 = vunpack.c.l.b16 %v3809
    %v5033 = vunpack.c.l.b16 %v3810
    %v5034 = vunpack.c.h.b16 %v3810
    %v5035 = vunpack.c.l.b16 %v3811
    %v5036 = vunpack.c.h.b16 %v3811
    %v5037 = vunpack.c.l.b16 %v3812
    %v5038 = vunpack.c.h.b16 %v3812
    %v5039 = vunpack.c.l.b16 %v3813
    %v5040 = vunpack.c.l.b16 %v3814
    %v5041 = vunpack.c.h.b16 %v3814
    %v5042 = vunpack.c.l.b16 %v3815
    %v5043 = vunpack.c.h.b16 %v3815
    %v5044 = vunpack.c.l.b16 %v3816
    %v5045 = vunpack.c.h.b16 %v3816
    %v5046 = vunpack.c.l.b16 %v3817
    %v5047 = vunpack.c.l.b16 %v3818
    %v5048 = vunpack.c.h.b16 %v3818
    %v5049 = vunpack.c.l.b16 %v3819
    %v5050 = vunpack.c.h.b16 %v3819
    %v5051 = vunpack.c.l.b16 %v3820
    %v5052 = vunpack.c.h.b16 %v3820
    %v5053 = vunpack.c.l.b16 %v3821
    %v5054 = vunpack.c.l.b16 %v3822
    %v5055 = vunpack.c.h.b16 %v3822
    %v5056 = vunpack.c.l.b16 %v3823
    %v5057 = vunpack.c.h.b16 %v3823
    %v5058 = vunpack.c.l.b16 %v3824
    %v5059 = vunpack.c.h.b16 %v3824
    %v5060 = vunpack.c.l.b16 %v3825
    %v5061 = vunpack.c.l.b16 %v3826
    %v5062 = vunpack.c.h.b16 %v3826
    %v5063 = vunpack.c.l.b16 %v3827
    %v5064 = vunpack.c.h.b16 %v3827
    %v5065 = vunpack.c.l.b16 %v3828
    %v5066 = vunpack.c.h.b16 %v3828
    %v5067 = vunpack.c.l.b16 %v3829
    %v5068 = vunpack.c.l.b16 %v3830
    %v5069 = vunpack.c.h.b16 %v3830
    %v5070 = vunpack.c.l.b16 %v3831
    %v5071 = vunpack.c.h.b16 %v3831
    %v5072 = vunpack.c.l.b16 %v3832
    %v5073 = vunpack.c.h.b16 %v3832
    %v5074 = vunpack.c.l.b16 %v3833
    %v5075 = vunpack.c.l.b16 %v3834
    %v5076 = vunpack.c.h.b16 %v3834
    %v5077 = vunpack.c.l.b16 %v3835
    %v5078 = vunpack.c.h.b16 %v3835
    %v5079 = vunpack.c.l.b16 %v3836
    %v5080 = vunpack.c.h.b16 %v3836
    %v5081 = vunpack.c.l.b16 %v3837
    %v5082 = vunpack.c.l.b16 %v3838
    %v5083 = vunpack.c.h.b16 %v3838
    %v5084 = vunpack.c.l.b16 %v3839
    %v5085 = vunpack.c.h.b16 %v3839
    %v5086 = vunpack.c.l.b16 %v3840
    %v5087 = vunpack.c.h.b16 %v3840
    %v5088 = vunpack.c.l.b16 %v3841
    %v5089 = vunpack.c.l.b16 %v3842
    %v5090 = vunpack.c.h.b16 %v3842
    %v5091 = vunpack.c.l.b16 %v3843
    %v5092 = vunpack.c.h.b16 %v3843
    %v5093 = vunpack.c.l.b16 %v3844
    %v5094 = vunpack.c.h.b16 %v3844
    %v5095 = vunpack.c.l.b16 %v3845
    %v5096 = vunpack.c.l.b16 %v3846
    %v5097 = vunpack.c.h.b16 %v3846
    %v5098 = vunpack.c.l.b16 %v3847
    %v5099 = vunpack.c.h.b16 %v3847
    %v5100 = vunpack.c.l.b16 %v3848
    %v5101 = vunpack.c.h.b16 %v3848
    %v5102 = vunpack.c.l.b16 %v3849
    %v5103 = vunpack.c.l.b16 %v3850
    %v5104 = vunpack.c.h.b16 %v3850
    %v5105 = vunpack.c.l.b16 %v3851
    %v5106 = vunpack.c.h.b16 %v3851
    %v5107 = vunpack.c.l.b16 %v3852
    %v5108 = vunpack.c.h.b16 %v3852
    %v5109 = vunpack.c.l.b16 %v3853
    %v5110 = vunpack.c.l.b16 %v3854
    %v5111 = vunpack.c.h.b16 %v3854
    %v5112 = vunpack.c.l.b16 %v3855
    %v5113 = vunpack.c.h.b16 %v3855
    %v5114 = vunpack.c.l.b16 %v3856
    %v5115 = vunpack.c.h.b16 %v3856
    %v5116 = vunpack.c.l.b16 %v3857
    %v5117 = vunpack.c.l.b16 %v3858
    %v5118 = vunpack.c.h.b16 %v3858
    %v5119 = vunpack.c.l.b16 %v3859
    %v5120 = vunpack.c.h.b16 %v3859
    %v5121 = vunpack.c.l.b16 %v3860
    %v5122 = vunpack.c.h.b16 %v3860
    %v5123 = vunpack.c.l.b16 %v3861
    %v5124 = vunpack.c.l.b16 %v3862
    %v5125 = vunpack.c.h.b16 %v3862
    %v5126 = vunpack.c.l.b16 %v3863
    %v5127 = vunpack.c.h.b16 %v3863
    %v5128 = vunpack.c.l.b16 %v3864
    %v5129 = vunpack.c.h.b16 %v3864
    %v5130 = vunpack.c.l.b16 %v3865
    %v5131 = vunpack.c.l.b16 %v3866
    %v5132 = vunpack.c.h.b16 %v3866
    %v5133 = vunpack.c.l.b16 %v3867
    %v5134 = vunpack.c.h.b16 %v3867
    %v5135 = vunpack.c.l.b16 %v3868
    %v5136 = vunpack.c.h.b16 %v3868
    %v5137 = vunpack.c.l.b16 %v3869
    %v5138 = vunpack.c.l.b16 %v3870
    %v5139 = vunpack.c.h.b16 %v3870
    %v5140 = vunpack.c.l.b16 %v3871
    %v5141 = vunpack.c.h.b16 %v3871
    %v5142 = vunpack.c.l.b16 %v3872
    %v5143 = vunpack.c.h.b16 %v3872
    %v5144 = vunpack.c.l.b16 %v3873
    %v5145 = vunpack.c.l.b16 %v3874
    %v5146 = vunpack.c.h.b16 %v3874
    %v5147 = vunpack.c.l.b16 %v3875
    %v5148 = vunpack.c.h.b16 %v3875
    %v5149 = vunpack.c.l.b16 %v3876
    %v5150 = vunpack.c.h.b16 %v3876
    %v5151 = vunpack.c.l.b16 %v3877
    %v5152 = vunpack.c.l.b16 %v3878
    %v5153 = vunpack.c.h.b16 %v3878
    %v5154 = vunpack.c.l.b16 %v3879
    %v5155 = vunpack.c.h.b16 %v3879
    %v5156 = vunpack.c.l.b16 %v3880
    %v5157 = vunpack.c.h.b16 %v3880
    %v5158 = vunpack.c.l.b16 %v3881
    %v5159 = vunpack.c.l.b16 %v3882
    %v5160 = vunpack.c.h.b16 %v3882
    %v5161 = vunpack.c.l.b16 %v3883
    %v5162 = vunpack.c.h.b16 %v3883
    %v5163 = vunpack.c.l.b16 %v3884
    %v5164 = vunpack.c.h.b16 %v3884
    %v5165 = vunpack.c.l.b16 %v3885
    %v5166 = vunpack.c.l.b16 %v3886
    %v5167 = vunpack.c.h.b16 %v3886
    %v5168 = vunpack.c.l.b16 %v3887
    %v5169 = vunpack.c.h.b16 %v3887
    %v5170 = vunpack.c.l.b16 %v3888
    %v5171 = vunpack.c.h.b16 %v3888
    %v5172 = vunpack.c.l.b16 %v3889
    %v5173 = vunpack.c.l.b16 %v3890
    %v5174 = vunpack.c.h.b16 %v3890
    %v5175 = vunpack.c.l.b16 %v3891
    %v5176 = vunpack.c.h.b16 %v3891
    %v5177 = vunpack.c.l.b16 %v3892
    %v5178 = vunpack.c.h.b16 %v3892
    %v5179 = vunpack.c.l.b16 %v3893
    %v5180 = vunpack.c.l.b16 %v3894
    %v5181 = vunpack.c.h.b16 %v3894
    %v5182 = vunpack.c.l.b16 %v3895
    %v5183 = vunpack.c.h.b16 %v3895
    %v5184 = vunpack.c.l.b16 %v3896
    %v5185 = vunpack.c.h.b16 %v3896
    %v5186 = vunpack.c.l.b16 %v3897
    %v5187 = vunpack.c.l.b16 %v3898
    %v5188 = vunpack.c.h.b16 %v3898
    %v5189 = vunpack.c.l.b16 %v3899
    %v5190 = vunpack.c.h.b16 %v3899
    %v5191 = vunpack.c.l.b16 %v3900
    %v5192 = vunpack.c.h.b16 %v3900
    %v5193 = vunpack.c.l.b16 %v3901
    %v5194 = vunpack.c.l.b16 %v3902
    %v5195 = vunpack.c.h.b16 %v3902
    %v5196 = vunpack.c.l.b16 %v3903
    %v5197 = vunpack.c.h.b16 %v3903
    %v5198 = vunpack.c.l.b16 %v3904
    %v5199 = vunpack.c.h.b16 %v3904
    %v5200 = vunpack.c.l.b16 %v3905
    %v5201 = vunpack.c.l.b16 %v3906
    %v5202 = vunpack.c.h.b16 %v3906
    %v5203 = vunpack.c.l.b16 %v3907
    %v5204 = vunpack.c.h.b16 %v3907
    %v5205 = vunpack.c.l.b16 %v3908
    %v5206 = vunpack.c.h.b16 %v3908
    %v5207 = vunpack.c.l.b16 %v3909
    %v5208 = vunpack.c.l.b16 %v3910
    %v5209 = vunpack.c.h.b16 %v3910
    %v5210 = vunpack.c.l.b16 %v3911
    %v5211 = vunpack.c.h.b16 %v3911
    %v5212 = vunpack.c.l.b16 %v3912
    %v5213 = vunpack.c.h.b16 %v3912
    %v5214 = vunpack.c.l.b16 %v3913
    %v5215 = vunpack.c.l.b16 %v3914
    %v5216 = vunpack.c.h.b16 %v3914
    %v5217 = vunpack.c.l.b16 %v3915
    %v5218 = vunpack.c.h.b16 %v3915
    %v5219 = vunpack.c.l.b16 %v3916
    %v5220 = vunpack.c.h.b16 %v3916
    %v5221 = vunpack.c.l.b16 %v3917
    %v5222 = vunpack.c.l.b16 %v3918
    %v5223 = vunpack.c.h.b16 %v3918
    %v5224 = vunpack.c.l.b16 %v3919
    %v5225 = vunpack.c.h.b16 %v3919
    %v5226 = vunpack.c.l.b16 %v3920
    %v5227 = vunpack.c.h.b16 %v3920
    %v5228 = vunpack.c.l.b16 %v3921
    %v5229 = vunpack.c.l.b16 %v3922
    %v5230 = vunpack.c.h.b16 %v3922
    %v5231 = vunpack.c.l.b16 %v3923
    %v5232 = vunpack.c.h.b16 %v3923
    %v5233 = vunpack.c.l.b16 %v3924
    %v5234 = vunpack.c.h.b16 %v3924
    %v5235 = vunpack.c.l.b16 %v3925
    %v5236 = vunpack.c.l.b16 %v3926
    %v5237 = vunpack.c.h.b16 %v3926
    %v5238 = vunpack.c.l.b16 %v3927
    %v5239 = vunpack.c.h.b16 %v3927
    %v5240 = vunpack.c.l.b16 %v3928
    %v5241 = vunpack.c.h.b16 %v3928
    %v5242 = vunpack.c.l.b16 %v3929
    %v5243 = vunpack.c.l.b16 %v3930
    %v5244 = vunpack.c.h.b16 %v3930
    %v5245 = vunpack.c.l.b16 %v3931
    %v5246 = vunpack.c.h.b16 %v3931
    %v5247 = vunpack.c.l.b16 %v3932
    %v5248 = vunpack.c.h.b16 %v3932
    %v5249 = vunpack.c.l.b16 %v3933
    %v5250 = vunpack.c.l.b16 %v3934
    %v5251 = vunpack.c.h.b16 %v3934
    %v5252 = vunpack.c.l.b16 %v3935
    %v5253 = vunpack.c.h.b16 %v3935
    %v5254 = vunpack.c.l.b16 %v3936
    %v5255 = vunpack.c.h.b16 %v3936
    %v5256 = vunpack.c.l.b16 %v3937
    %v5257 = vunpack.c.l.b16 %v3938
    %v5258 = vunpack.c.h.b16 %v3938
    %v5259 = vunpack.c.l.b16 %v3939
    %v5260 = vunpack.c.h.b16 %v3939
    %v5261 = vunpack.c.l.b16 %v3940
    %v5262 = vunpack.c.h.b16 %v3940
    %v5263 = vunpack.c.l.b16 %v3941
    %v5264 = vunpack.c.l.b16 %v3942
    %v5265 = vunpack.c.h.b16 %v3942
    %v5266 = vunpack.c.l.b16 %v3943
    %v5267 = vunpack.c.h.b16 %v3943
    %v5268 = vunpack.c.l.b16 %v3944
    %v5269 = vunpack.c.h.b16 %v3944
    %v5270 = vunpack.c.l.b16 %v3945
    %v5271 = vunpack.c.l.b16 %v3946
    %v5272 = vunpack.c.h.b16 %v3946
    %v5273 = vunpack.c.l.b16 %v3947
    %v5274 = vunpack.c.h.b16 %v3947
    %v5275 = vunpack.c.l.b16 %v3948
    %v5276 = vunpack.c.h.b16 %v3948
    %v5277 = vunpack.c.l.b16 %v3949
    %v5278 = vunpack.c.l.b16 %v3950
    %v5279 = vunpack.c.h.b16 %v3950
    %v5280 = vunpack.c.l.b16 %v3951
    %v5281 = vunpack.c.h.b16 %v3951
    %v5282 = vunpack.c.l.b16 %v3952
    %v5283 = vunpack.c.h.b16 %v3952
    %v5284 = vunpack.c.l.b16 %v3953
    %v5285 = vunpack.c.l.b16 %v3954
    %v5286 = vunpack.c.h.b16 %v3954
    %v5287 = vunpack.c.l.b16 %v3955
    %v5288 = vunpack.c.h.b16 %v3955
    %v5289 = vunpack.c.l.b16 %v3956
    %v5290 = vunpack.c.h.b16 %v3956
    %v5291 = vunpack.c.l.b16 %v3957
    %v5292 = vunpack.c.l.b16 %v3958
    %v5293 = vunpack.c.h.b16 %v3958
    %v5294 = vunpack.c.l.b16 %v3959
    %v5295 = vunpack.c.h.b16 %v3959
    %v5296 = vunpack.c.l.b16 %v3960
    %v5297 = vunpack.c.h.b16 %v3960
    %v5298 = vunpack.c.l.b16 %v3961
    %v5299 = vunpack.c.l.b16 %v3962
    %v5300 = vunpack.c.h.b16 %v3962
    %v5301 = vunpack.c.l.b16 %v3963
    %v5302 = vunpack.c.h.b16 %v3963
    %v5303 = vunpack.c.l.b16 %v3964
    %v5304 = vunpack.c.h.b16 %v3964
    %v5305 = vunpack.c.l.b16 %v3965
    %v5306 = vunpack.c.l.b16 %v3966
    %v5307 = vunpack.c.h.b16 %v3966
    %v5308 = vunpack.c.l.b16 %v3967
    %v5309 = vunpack.c.h.b16 %v3967
    %v5310 = vunpack.c.l.b16 %v3968
    %v5311 = vunpack.c.h.b16 %v3968
    %v5312 = vunpack.c.l.b16 %v3969
    %v5313 = vunpack.c.l.b16 %v3970
    %v5314 = vunpack.c.h.b16 %v3970
    %v5315 = vunpack.c.l.b16 %v3971
    %v5316 = vunpack.c.h.b16 %v3971
    %v5317 = vunpack.c.l.b16 %v3972
    %v5318 = vunpack.c.h.b16 %v3972
    %v5319 = vunpack.c.l.b16 %v3973
    %v5320 = vunpack.c.l.b16 %v3974
    %v5321 = vunpack.c.h.b16 %v3974
    %v5322 = vunpack.c.l.b16 %v3975
    %v5323 = vunpack.c.h.b16 %v3975
    %v5324 = vunpack.c.l.b16 %v3976
    %v5325 = vunpack.c.h.b16 %v3976
    %v5326 = vunpack.c.l.b16 %v3977
    %v5327 = vunpack.c.l.b16 %v3978
    %v5328 = vunpack.c.h.b16 %v3978
    %v5329 = vunpack.c.l.b16 %v3979
    %v5330 = vunpack.c.h.b16 %v3979
    %v5331 = vunpack.c.l.b16 %v3980
    %v5332 = vunpack.c.h.b16 %v3980
    %v5333 = vunpack.c.l.b16 %v3981
    %v5334 = vunpack.c.l.b16 %v3982
    %v5335 = vunpack.c.h.b16 %v3982
    %v5336 = vunpack.c.l.b16 %v3983
    %v5337 = vunpack.c.h.b16 %v3983
    %v5338 = vunpack.c.l.b16 %v3984
    %v5339 = vunpack.c.h.b16 %v3984
    %v5340 = vunpack.c.l.b16 %v3985
    %v5341 = vunpack.c.l.b16 %v3986
    %v5342 = vunpack.c.h.b16 %v3986
    %v5343 = vunpack.c.l.b16 %v3987
    %v5344 = vunpack.c.h.b16 %v3987
    %v5345 = vunpack.c.l.b16 %v3988
    %v5346 = vunpack.c.h.b16 %v3988
    %v5347 = vunpack.c.l.b16 %v3989
    %v5348 = vunpack.c.l.b16 %v3990
    %v5349 = vunpack.c.h.b16 %v3990
    %v5350 = vunpack.c.l.b16 %v3991
    %v5351 = vunpack.c.h.b16 %v3991
    %v5352 = vunpack.c.l.b16 %v3992
    %v5353 = vunpack.c.h.b16 %v3992
    %v5354 = vunpack.c.l.b16 %v3993
    %v5355 = vunpack.c.l.b16 %v3994
    %v5356 = vunpack.c.h.b16 %v3994
    %v5357 = vunpack.c.l.b16 %v3995
    %v5358 = vunpack.c.h.b16 %v3995
    %v5359 = vunpack.c.l.b16 %v3996
    %v5360 = vunpack.c.h.b16 %v3996
    %v5361 = vunpack.c.l.b16 %v3997
    %v5362 = vunpack.c.l.b16 %v3998
    %v5363 = vunpack.c.h.b16 %v3998
    %v5364 = vunpack.c.l.b16 %v3999
    %v5365 = vunpack.c.h.b16 %v3999
    %v5366 = vunpack.c.l.b16 %v4000
    %v5367 = vunpack.c.h.b16 %v4000
    %v5368 = vunpack.c.l.b16 %v4001
    %v5369 = vunpack.c.l.b16 %v4002
    %v5370 = vunpack.c.h.b16 %v4002
    %v5371 = vunpack.c.l.b16 %v4003
    %v5372 = vunpack.c.h.b16 %v4003
    %v5373 = vunpack.c.l.b16 %v4004
    %v5374 = vunpack.c.h.b16 %v4004
    %v5375 = vunpack.c.l.b16 %v4005
    %v5376 = vunpack.c.l.b16 %v4006
    %v5377 = vunpack.c.h.b16 %v4006
    %v5378 = vunpack.c.l.b16 %v4007
    %v5379 = vunpack.c.h.b16 %v4007
    %v5380 = vunpack.c.l.b16 %v4008
    %v5381 = vunpack.c.h.b16 %v4008
    %v5382 = vunpack.c.l.b16 %v4009
    %v5383 = vunpack.c.l.b16 %v4010
    %v5384 = vunpack.c.h.b16 %v4010
    %v5385 = vunpack.c.l.b16 %v4011
    %v5386 = vunpack.c.h.b16 %v4011
    %v5387 = vunpack.c.l.b16 %v4012
    %v5388 = vunpack.c.h.b16 %v4012
    %v5389 = vunpack.c.l.b16 %v4013
    %v5390 = vunpack.c.l.b16 %v4014
    %v5391 = vunpack.c.h.b16 %v4014
    %v5392 = vunpack.c.l.b16 %v4015
    %v5393 = vunpack.c.h.b16 %v4015
    %v5394 = vunpack.c.l.b16 %v4016
    %v5395 = vunpack.c.h.b16 %v4016
    %v5396 = vunpack.c.l.b16 %v4017
    %v5397 = vunpack.c.l.b16 %v4018
    %v5398 = vunpack.c.h.b16 %v4018
    %v5399 = vunpack.c.l.b16 %v4019
    %v5400 = vunpack.c.h.b16 %v4019
    %v5401 = vunpack.c.l.b16 %v4020
    %v5402 = vunpack.c.h.b16 %v4020
    %v5403 = vunpack.c.l.b16 %v4021
    %v5404 = vunpack.c.l.b16 %v4022
    %v5405 = vunpack.c.h.b16 %v4022
    %v5406 = vunpack.c.l.b16 %v4023
    %v5407 = vunpack.c.h.b16 %v4023
    %v5408 = vunpack.c.l.b16 %v4024
    %v5409 = vunpack.c.h.b16 %v4024
    %v5410 = vunpack.c.l.b16 %v4025
    %v5411 = vunpack.c.l.b16 %v4026
    %v5412 = vunpack.c.h.b16 %v4026
    %v5413 = vunpack.c.l.b16 %v4027
    %v5414 = vunpack.c.h.b16 %v4027
    %v5415 = vunpack.c.l.b16 %v4028
    %v5416 = vunpack.c.h.b16 %v4028
    %v5417 = vunpack.c.l.b16 %v4029
    %v5418 = vunpack.c.l.b16 %v4030
    %v5419 = vunpack.c.h.b16 %v4030
    %v5420 = vunpack.c.l.b16 %v4031
    %v5421 = vunpack.c.h.b16 %v4031
    %v5422 = vunpack.c.l.b16 %v4032
    %v5423 = vunpack.c.h.b16 %v4032
    %v5424 = vunpack.c.l.b16 %v4033
    %v5425 = vunpack.c.l.b16 %v4034
    %v5426 = vunpack.c.h.b16 %v4034
    %v5427 = vunpack.c.l.b16 %v4035
    %v5428 = vunpack.c.h.b16 %v4035
    %v5429 = vunpack.c.l.b16 %v4036
    %v5430 = vunpack.c.h.b16 %v4036
    %v5431 = vunpack.c.l.b16 %v4037
    %v5432 = vunpack.c.l.b16 %v4038
    %v5433 = vunpack.c.h.b16 %v4038
    %v5434 = vunpack.c.l.b16 %v4039
    %v5435 = vunpack.c.h.b16 %v4039
    %v5436 = vunpack.c.l.b16 %v4040
    %v5437 = vunpack.c.h.b16 %v4040
    %v5438 = vunpack.c.l.b16 %v4041
    %v5439 = vunpack.c.l.b16 %v4042
    %v5440 = vunpack.c.h.b16 %v4042
    %v5441 = vunpack.c.l.b16 %v4043
    %v5442 = vunpack.c.h.b16 %v4043
    %v5443 = vunpack.c.l.b16 %v4044
    %v5444 = vunpack.c.h.b16 %v4044
    %v5445 = vunpack.c.l.b16 %v4045
    %v5446 = vunpack.c.l.b16 %v4046
    %v5447 = vunpack.c.h.b16 %v4046
    %v5448 = vunpack.c.l.b16 %v4047
    %v5449 = vunpack.c.h.b16 %v4047
    %v5450 = vunpack.c.l.b16 %v4048
    %v5451 = vunpack.c.h.b16 %v4048
    %v5452 = vunpack.c.l.b16 %v4049
    %v5453 = vunpack.c.l.b16 %v4050
    %v5454 = vunpack.c.h.b16 %v4050
    %v5455 = vunpack.c.l.b16 %v4051
    %v5456 = vunpack.c.h.b16 %v4051
    %v5457 = vunpack.c.l.b16 %v4052
    %v5458 = vunpack.c.h.b16 %v4052
    %v5459 = vunpack.c.l.b16 %v4053
    %v5460 = vunpack.c.l.b16 %v4054
    %v5461 = vunpack.c.h.b16 %v4054
    %v5462 = vunpack.c.l.b16 %v4055
    %v5463 = vunpack.c.h.b16 %v4055
    %v5464 = vunpack.c.l.b16 %v4056
    %v5465 = vunpack.c.h.b16 %v4056
    %v5466 = vunpack.c.l.b16 %v4057
    %v5467 = vunpack.c.l.b16 %v4058
    %v5468 = vunpack.c.h.b16 %v4058
    %v5469 = vunpack.c.l.b16 %v4059
    %v5470 = vunpack.c.h.b16 %v4059
    %v5471 = vunpack.c.l.b16 %v4060
    %v5472 = vunpack.c.h.b16 %v4060
    %v5473 = vunpack.c.l.b16 %v4061
    %v5474 = vunpack.c.l.b16 %v4062
    %v5475 = vunpack.c.h.b16 %v4062
    %v5476 = vunpack.c.l.b16 %v4063
    %v5477 = vunpack.c.h.b16 %v4063
    %v5478 = vunpack.c.l.b16 %v4064
    %v5479 = vunpack.c.h.b16 %v4064
    %v5480 = vunpack.c.l.b16 %v4065
    %v5481 = vunpack.c.l.b16 %v4066
    %v5482 = vunpack.c.h.b16 %v4066
    %v5483 = vunpack.c.l.b16 %v4067
    %v5484 = vunpack.c.h.b16 %v4067
    %v5485 = vunpack.c.l.b16 %v4068
    %v5486 = vunpack.c.h.b16 %v4068
    %v5487 = vunpack.c.l.b16 %v4069
    %v5488 = vunpack.c.l.b16 %v4070
    %v5489 = vunpack.c.h.b16 %v4070
    %v5490 = vunpack.c.l.b16 %v4071
    %v5491 = vunpack.c.h.b16 %v4071
    %v5492 = vunpack.c.l.b16 %v4072
    %v5493 = vunpack.c.h.b16 %v4072
    %v5494 = vunpack.c.l.b16 %v4073
    %v5495 = vunpack.c.l.b16 %v4074
    %v5496 = vunpack.c.h.b16 %v4074
    %v5497 = vunpack.c.l.b16 %v4075
    %v5498 = vunpack.c.h.b16 %v4075
    %v5499 = vunpack.c.l.b16 %v4076
    %v5500 = vunpack.c.h.b16 %v4076
    %v5501 = vunpack.c.l.b16 %v4077
    %v5502 = vpack.c.b16 %v4613, %v4606
    %v5503 = vpack.c.b16 %v4614, %v4607
    %v5504 = vpack.c.b16 %v4615, %v4608
    %v5505 = vpack.c.b16 %v4616, %v4609
    %v5506 = vpack.c.b16 %v4617, %v4610
    %v5507 = vpack.c.b16 %v4618, %v4611
    %v5508 = vpack.c.b16 %v4619, %v4612
    %v5509 = vpack.c.b16 %v4627, %v4620
    %v5510 = vpack.c.b16 %v4628, %v4621
    %v5511 = vpack.c.b16 %v4629, %v4622
    %v5512 = vpack.c.b16 %v4630, %v4623
    %v5513 = vpack.c.b16 %v4631, %v4624
    %v5514 = vpack.c.b16 %v4632, %v4625
    %v5515 = vpack.c.b16 %v4633, %v4626
    %v5516 = vpack.c.b16 %v4641, %v4634
    %v5517 = vpack.c.b16 %v4642, %v4635
    %v5518 = vpack.c.b16 %v4643, %v4636
    %v5519 = vpack.c.b16 %v4644, %v4637
    %v5520 = vpack.c.b16 %v4645, %v4638
    %v5521 = vpack.c.b16 %v4646, %v4639
    %v5522 = vpack.c.b16 %v4647, %v4640
    %v5523 = vpack.c.b16 %v4655, %v4648
    %v5524 = vpack.c.b16 %v4656, %v4649
    %v5525 = vpack.c.b16 %v4657, %v4650
    %v5526 = vpack.c.b16 %v4658, %v4651
    %v5527 = vpack.c.b16 %v4659, %v4652
    %v5528 = vpack.c.b16 %v4660, %v4653
    %v5529 = vpack.c.b16 %v4661, %v4654
    %v5530 = vpack.c.b16 %v4669, %v4662
    %v5531 = vpack.c.b16 %v4670, %v4663
    %v5532 = vpack.c.b16 %v4671, %v4664
    %v5533 = vpack.c.b16 %v4672, %v4665
    %v5534 = vpack.c.b16 %v4673, %v4666
    %v5535 = vpack.c.b16 %v4674, %v4667
    %v5536 = vpack.c.b16 %v4675, %v4668
    %v5537 = vpack.c.b16 %v4683, %v4676
    %v5538 = vpack.c.b16 %v4684, %v4677
    %v5539 = vpack.c.b16 %v4685, %v4678
    %v5540 = vpack.c.b16 %v4686, %v4679
    %v5541 = vpack.c.b16 %v4687, %v4680
    %v5542 = vpack.c.b16 %v4688, %v4681
    %v5543 = vpack.c.b16 %v4689, %v4682
    %v5544 = vpack.c.b16 %v4697, %v4690
    %v5545 = vpack.c.b16 %v4698, %v4691
    %v5546 = vpack.c.b16 %v4699, %v4692
    %v5547 = vpack.c.b16 %v4700, %v4693
    %v5548 = vpack.c.b16 %v4701, %v4694
    %v5549 = vpack.c.b16 %v4702, %v4695
    %v5550 = vpack.c.b16 %v4703, %v4696
    %v5551 = vpack.c.b16 %v4711, %v4704
    %v5552 = vpack.c.b16 %v4712, %v4705
    %v5553 = vpack.c.b16 %v4713, %v4706
    %v5554 = vpack.c.b16 %v4714, %v4707
    %v5555 = vpack.c.b16 %v4715, %v4708
    %v5556 = vpack.c.b16 %v4716, %v4709
    %v5557 = vpack.c.b16 %v4717, %v4710
    %v5558 = vpack.c.b16 %v4725, %v4718
    %v5559 = vpack.c.b16 %v4726, %v4719
    %v5560 = vpack.c.b16 %v4727, %v4720
    %v5561 = vpack.c.b16 %v4728, %v4721
    %v5562 = vpack.c.b16 %v4729, %v4722
    %v5563 = vpack.c.b16 %v4730, %v4723
    %v5564 = vpack.c.b16 %v4731, %v4724
    %v5565 = vpack.c.b16 %v4739, %v4732
    %v5566 = vpack.c.b16 %v4740, %v4733
    %v5567 = vpack.c.b16 %v4741, %v4734
    %v5568 = vpack.c.b16 %v4742, %v4735
    %v5569 = vpack.c.b16 %v4743, %v4736
    %v5570 = vpack.c.b16 %v4744, %v4737
    %v5571 = vpack.c.b16 %v4745, %v4738
    %v5572 = vpack.c.b16 %v4753, %v4746
    %v5573 = vpack.c.b16 %v4754, %v4747
    %v5574 = vpack.c.b16 %v4755, %v4748
    %v5575 = vpack.c.b16 %v4756, %v4749
    %v5576 = vpack.c.b16 %v4757, %v4750
    %v5577 = vpack.c.b16 %v4758, %v4751
    %v5578 = vpack.c.b16 %v4759, %v4752
    %v5579 = vpack.c.b16 %v4767, %v4760
    %v5580 = vpack.c.b16 %v4768, %v4761
    %v5581 = vpack.c.b16 %v4769, %v4762
    %v5582 = vpack.c.b16 %v4770, %v4763
    %v5583 = vpack.c.b16 %v4771, %v4764
    %v5584 = vpack.c.b16 %v4772, %v4765
    %v5585 = vpack.c.b16 %v4773, %v4766
    %v5586 = vpack.c.b16 %v4781, %v4774
    %v5587 = vpack.c.b16 %v4782, %v4775
    %v5588 = vpack.c.b16 %v4783, %v4776
    %v5589 = vpack.c.b16 %v4784, %v4777
    %v5590 = vpack.c.b16 %v4785, %v4778
    %v5591 = vpack.c.b16 %v4786, %v4779
    %v5592 = vpack.c.b16 %v4787, %v4780
    %v5593 = vpack.c.b16 %v4795, %v4788
    %v5594 = vpack.c.b16 %v4796, %v4789
    %v5595 = vpack.c.b16 %v4797, %v4790
    %v5596 = vpack.c.b16 %v4798, %v4791
    %v5597 = vpack.c.b16 %v4799, %v4792
    %v5598 = vpack.c.b16 %v4800, %v4793
    %v5599 = vpack.c.b16 %v4801, %v4794
    %v5600 = vpack.c.b16 %v4809, %v4802
    %v5601 = vpack.c.b16 %v4810, %v4803
    %v5602 = vpack.c.b16 %v4811, %v4804
    %v5603 = vpack.c.b16 %v4812, %v4805
    %v5604 = vpack.c.b16 %v4813, %v4806
    %v5605 = vpack.c.b16 %v4814, %v4807
    %v5606 = vpack.c.b16 %v4815, %v4808
    %v5607 = vpack.c.b16 %v4823, %v4816
    %v5608 = vpack.c.b16 %v4824, %v4817
    %v5609 = vpack.c.b16 %v4825, %v4818
    %v5610 = vpack.c.b16 %v4826, %v4819
    %v5611 = vpack.c.b16 %v4827, %v4820
    %v5612 = vpack.c.b16 %v4828, %v4821
    %v5613 = vpack.c.b16 %v4829, %v4822
    %v5614 = vpack.c.b16 %v4837, %v4830
    %v5615 = vpack.c.b16 %v4838, %v4831
    %v5616 = vpack.c.b16 %v4839, %v4832
    %v5617 = vpack.c.b16 %v4840, %v4833
    %v5618 = vpack.c.b16 %v4841, %v4834
    %v5619 = vpack.c.b16 %v4842, %v4835
    %v5620 = vpack.c.b16 %v4843, %v4836
    %v5621 = vpack.c.b16 %v4851, %v4844
    %v5622 = vpack.c.b16 %v4852, %v4845
    %v5623 = vpack.c.b16 %v4853, %v4846
    %v5624 = vpack.c.b16 %v4854, %v4847
    %v5625 = vpack.c.b16 %v4855, %v4848
    %v5626 = vpack.c.b16 %v4856, %v4849
    %v5627 = vpack.c.b16 %v4857, %v4850
    %v5628 = vpack.c.b16 %v4865, %v4858
    %v5629 = vpack.c.b16 %v4866, %v4859
    %v5630 = vpack.c.b16 %v4867, %v4860
    %v5631 = vpack.c.b16 %v4868, %v4861
    %v5632 = vpack.c.b16 %v4869, %v4862
    %v5633 = vpack.c.b16 %v4870, %v4863
    %v5634 = vpack.c.b16 %v4871, %v4864
    %v5635 = vpack.c.b16 %v4879, %v4872
    %v5636 = vpack.c.b16 %v4880, %v4873
    %v5637 = vpack.c.b16 %v4881, %v4874
    %v5638 = vpack.c.b16 %v4882, %v4875
    %v5639 = vpack.c.b16 %v4883, %v4876
    %v5640 = vpack.c.b16 %v4884, %v4877
    %v5641 = vpack.c.b16 %v4885, %v4878
    %v5642 = vpack.c.b16 %v4893, %v4886
    %v5643 = vpack.c.b16 %v4894, %v4887
    %v5644 = vpack.c.b16 %v4895, %v4888
    %v5645 = vpack.c.b16 %v4896, %v4889
    %v5646 = vpack.c.b16 %v4897, %v4890
    %v5647 = vpack.c.b16 %v4898, %v4891
    %v5648 = vpack.c.b16 %v4899, %v4892
    %v5649 = vpack.c.b16 %v4907, %v4900
    %v5650 = vpack.c.b16 %v4908, %v4901
    %v5651 = vpack.c.b16 %v4909, %v4902
    %v5652 = vpack.c.b16 %v4910, %v4903
    %v5653 = vpack.c.b16 %v4911, %v4904
    %v5654 = vpack.c.b16 %v4912, %v4905
    %v5655 = vpack.c.b16 %v4913, %v4906
    %v5656 = vpack.c.b16 %v4921, %v4914
    %v5657 = vpack.c.b16 %v4922, %v4915
    %v5658 = vpack.c.b16 %v4923, %v4916
    %v5659 = vpack.c.b16 %v4924, %v4917
    %v5660 = vpack.c.b16 %v4925, %v4918
    %v5661 = vpack.c.b16 %v4926, %v4919
    %v5662 = vpack.c.b16 %v4927, %v4920
    %v5663 = vpack.c.b16 %v4935, %v4928
    %v5664 = vpack.c.b16 %v4936, %v4929
    %v5665 = vpack.c.b16 %v4937, %v4930
    %v5666 = vpack.c.b16 %v4938, %v4931
    %v5667 = vpack.c.b16 %v4939, %v4932
    %v5668 = vpack.c.b16 %v4940, %v4933
    %v5669 = vpack.c.b16 %v4941, %v4934
    %v5670 = vpack.c.b16 %v4949, %v4942
    %v5671 = vpack.c.b16 %v4950, %v4943
    %v5672 = vpack.c.b16 %v4951, %v4944
    %v5673 = vpack.c.b16 %v4952, %v4945
    %v5674 = vpack.c.b16 %v4953, %v4946
    %v5675 = vpack.c.b16 %v4954, %v4947
    %v5676 = vpack.c.b16 %v4955, %v4948
    %v5677 = vpack.c.b16 %v4963, %v4956
    %v5678 = vpack.c.b16 %v4964, %v4957
    %v5679 = vpack.c.b16 %v4965, %v4958
    %v5680 = vpack.c.b16 %v4966, %v4959
    %v5681 = vpack.c.b16 %v4967, %v4960
    %v5682 = vpack.c.b16 %v4968, %v4961
    %v5683 = vpack.c.b16 %v4969, %v4962
    %v5684 = vpack.c.b16 %v4977, %v4970
    %v5685 = vpack.c.b16 %v4978, %v4971
    %v5686 = vpack.c.b16 %v4979, %v4972
    %v5687 = vpack.c.b16 %v4980, %v4973
    %v5688 = vpack.c.b16 %v4981, %v4974
    %v5689 = vpack.c.b16 %v4982, %v4975
    %v5690 = vpack.c.b16 %v4983, %v4976
    %v5691 = vpack.c.b16 %v4991, %v4984
    %v5692 = vpack.c.b16 %v4992, %v4985
    %v5693 = vpack.c.b16 %v4993, %v4986
    %v5694 = vpack.c.b16 %v4994, %v4987
    %v5695 = vpack.c.b16 %v4995, %v4988
    %v5696 = vpack.c.b16 %v4996, %v4989
    %v5697 = vpack.c.b16 %v4997, %v4990
    %v5698 = vpack.c.b16 %v5005, %v4998
    %v5699 = vpack.c.b16 %v5006, %v4999
    %v5700 = vpack.c.b16 %v5007, %v5000
    %v5701 = vpack.c.b16 %v5008, %v5001
    %v5702 = vpack.c.b16 %v5009, %v5002
    %v5703 = vpack.c.b16 %v5010, %v5003
    %v5704 = vpack.c.b16 %v5011, %v5004
    %v5705 = vpack.c.b16 %v5019, %v5012
    %v5706 = vpack.c.b16 %v5020, %v5013
    %v5707 = vpack.c.b16 %v5021, %v5014
    %v5708 = vpack.c.b16 %v5022, %v5015
    %v5709 = vpack.c.b16 %v5023, %v5016
    %v5710 = vpack.c.b16 %v5024, %v5017
    %v5711 = vpack.c.b16 %v5025, %v5018
    %v5712 = vpack.c.b16 %v5033, %v5026
    %v5713 = vpack.c.b16 %v5034, %v5027
    %v5714 = vpack.c.b16 %v5035, %v5028
    %v5715 = vpack.c.b16 %v5036, %v5029
    %v5716 = vpack.c.b16 %v5037, %v5030
    %v5717 = vpack.c.b16 %v5038, %v5031
    %v5718 = vpack.c.b16 %v5039, %v5032
    %v5719 = vpack.c.b16 %v5047, %v5040
    %v5720 = vpack.c.b16 %v5048, %v5041
    %v5721 = vpack.c.b16 %v5049, %v5042
    %v5722 = vpack.c.b16 %v5050, %v5043
    %v5723 = vpack.c.b16 %v5051, %v5044
    %v5724 = vpack.c.b16 %v5052, %v5045
    %v5725 = vpack.c.b16 %v5053, %v5046
    %v5726 = vpack.c.b16 %v5061, %v5054
    %v5727 = vpack.c.b16 %v5062, %v5055
    %v5728 = vpack.c.b16 %v5063, %v5056
    %v5729 = vpack.c.b16 %v5064, %v5057
    %v5730 = vpack.c.b16 %v5065, %v5058
    %v5731 = vpack.c.b16 %v5066, %v5059
    %v5732 = vpack.c.b16 %v5067, %v5060
    %v5733 = vpack.c.b16 %v5075, %v5068
    %v5734 = vpack.c.b16 %v5076, %v5069
    %v5735 = vpack.c.b16 %v5077, %v5070
    %v5736 = vpack.c.b16 %v5078, %v5071
    %v5737 = vpack.c.b16 %v5079, %v5072
    %v5738 = vpack.c.b16 %v5080, %v5073
    %v5739 = vpack.c.b16 %v5081, %v5074
    %v5740 = vpack.c.b16 %v5089, %v5082
    %v5741 = vpack.c.b16 %v5090, %v5083
    %v5742 = vpack.c.b16 %v5091, %v5084
    %v5743 = vpack.c.b16 %v5092, %v5085
    %v5744 = vpack.c.b16 %v5093, %v5086
    %v5745 = vpack.c.b16 %v5094, %v5087
    %v5746 = vpack.c.b16 %v5095, %v5088
    %v5747 = vpack.c.b16 %v5103, %v5096
    %v5748 = vpack.c.b16 %v5104, %v5097
    %v5749 = vpack.c.b16 %v5105, %v5098
    %v5750 = vpack.c.b16 %v5106, %v5099
    %v5751 = vpack.c.b16 %v5107, %v5100
    %v5752 = vpack.c.b16 %v5108, %v5101
    %v5753 = vpack.c.b16 %v5109, %v5102
    %v5754 = vpack.c.b16 %v5117, %v5110
    %v5755 = vpack.c.b16 %v5118, %v5111
    %v5756 = vpack.c.b16 %v5119, %v5112
    %v5757 = vpack.c.b16 %v5120, %v5113
    %v5758 = vpack.c.b16 %v5121, %v5114
    %v5759 = vpack.c.b16 %v5122, %v5115
    %v5760 = vpack.c.b16 %v5123, %v5116
    %v5761 = vpack.c.b16 %v5131, %v5124
    %v5762 = vpack.c.b16 %v5132, %v5125
    %v5763 = vpack.c.b16 %v5133, %v5126
    %v5764 = vpack.c.b16 %v5134, %v5127
    %v5765 = vpack.c.b16 %v5135, %v5128
    %v5766 = vpack.c.b16 %v5136, %v5129
    %v5767 = vpack.c.b16 %v5137, %v5130
    %v5768 = vpack.c.b16 %v5145, %v5138
    %v5769 = vpack.c.b16 %v5146, %v5139
    %v5770 = vpack.c.b16 %v5147, %v5140
    %v5771 = vpack.c.b16 %v5148, %v5141
    %v5772 = vpack.c.b16 %v5149, %v5142
    %v5773 = vpack.c.b16 %v5150, %v5143
    %v5774 = vpack.c.b16 %v5151, %v5144
    %v5775 = vpack.c.b16 %v5159, %v5152
    %v5776 = vpack.c.b16 %v5160, %v5153
    %v5777 = vpack.c.b16 %v5161, %v5154
    %v5778 = vpack.c.b16 %v5162, %v5155
    %v5779 = vpack.c.b16 %v5163, %v5156
    %v5780 = vpack.c.b16 %v5164, %v5157
    %v5781 = vpack.c.b16 %v5165, %v5158
    %v5782 = vpack.c.b16 %v5173, %v5166
    %v5783 = vpack.c.b16 %v5174, %v5167
    %v5784 = vpack.c.b16 %v5175, %v5168
    %v5785 = vpack.c.b16 %v5176, %v5169
    %v5786 = vpack.c.b16 %v5177, %v5170
    %v5787 = vpack.c.b16 %v5178, %v5171
    %v5788 = vpack.c.b16 %v5179, %v5172
    %v5789 = vpack.c.b16 %v5187, %v5180
    %v5790 = vpack.c.b16 %v5188, %v5181
    %v5791 = vpack.c.b16 %v5189, %v5182
    %v5792 = vpack.c.b16 %v5190, %v5183
    %v5793 = vpack.c.b16 %v5191, %v5184
    %v5794 = vpack.c.b16 %v5192, %v5185
    %v5795 = vpack.c.b16 %v5193, %v5186
    %v5796 = vpack.c.b16 %v5201, %v5194
    %v5797 = vpack.c.b16 %v5202, %v5195
    %v5798 = vpack.c.b16 %v5203, %v5196
    %v5799 = vpack.c.b16 %v5204, %v5197
    %v5800 = vpack.c.b16 %v5205, %v5198
    %v5801 = vpack.c.b16 %v5206, %v5199
    %v5802 = vpack.c.b16 %v5207, %v5200
    %v5803 = vpack.c.b16 %v5215, %v5208
    %v5804 = vpack.c.b16 %v5216, %v5209
    %v5805 = vpack.c.b16 %v5217, %v5210
    %v5806 = vpack.c.b16 %v5218, %v5211
    %v5807 = vpack.c.b16 %v5219, %v5212
    %v5808 = vpack.c.b16 %v5220, %v5213
    %v5809 = vpack.c.b16 %v5221, %v5214
    %v5810 = vpack.c.b16 %v5229, %v5222
    %v5811 = vpack.c.b16 %v5230, %v5223
    %v5812 = vpack.c.b16 %v5231, %v5224
    %v5813 = vpack.c.b16 %v5232, %v5225
    %v5814 = vpack.c.b16 %v5233, %v5226
    %v5815 = vpack.c.b16 %v5234, %v5227
    %v5816 = vpack.c.b16 %v5235, %v5228
    %v5817 = vpack.c.b16 %v5243, %v5236
    %v5818 = vpack.c.b16 %v5244, %v5237
    %v5819 = vpack.c.b16 %v5245, %v5238
    %v5820 = vpack.c.b16 %v5246, %v5239
    %v5821 = vpack.c.b16 %v5247, %v5240
    %v5822 = vpack.c.b16 %v5248, %v5241
    %v5823 = vpack.c.b16 %v5249, %v5242
    %v5824 = vpack.c.b16 %v5257, %v5250
    %v5825 = vpack.c.b16 %v5258, %v5251
    %v5826 = vpack.c.b16 %v5259, %v5252
    %v5827 = vpack.c.b16 %v5260, %v5253
    %v5828 = vpack.c.b16 %v5261, %v5254
    %v5829 = vpack.c.b16 %v5262, %v5255
    %v5830 = vpack.c.b16 %v5263, %v5256
    %v5831 = vpack.c.b16 %v5271, %v5264
    %v5832 = vpack.c.b16 %v5272, %v5265
    %v5833 = vpack.c.b16 %v5273, %v5266
    %v5834 = vpack.c.b16 %v5274, %v5267
    %v5835 = vpack.c.b16 %v5275, %v5268
    %v5836 = vpack.c.b16 %v5276, %v5269
    %v5837 = vpack.c.b16 %v5277, %v5270
    %v5838 = vpack.c.b16 %v5285, %v5278
    %v5839 = vpack.c.b16 %v5286, %v5279
    %v5840 = vpack.c.b16 %v5287, %v5280
    %v5841 = vpack.c.b16 %v5288, %v5281
    %v5842 = vpack.c.b16 %v5289, %v5282
    %v5843 = vpack.c.b16 %v5290, %v5283
    %v5844 = vpack.c.b16 %v5291, %v5284
    %v5845 = vpack.c.b16 %v5299, %v5292
    %v5846 = vpack.c.b16 %v5300, %v5293
    %v5847 = vpack.c.b16 %v5301, %v5294
    %v5848 = vpack.c.b16 %v5302, %v5295
    %v5849 = vpack.c.b16 %v5303, %v5296
    %v5850 = vpack.c.b16 %v5304, %v5297
    %v5851 = vpack.c.b16 %v5305, %v5298
    %v5852 = vpack.c.b16 %v5313, %v5306
    %v5853 = vpack.c.b16 %v5314, %v5307
    %v5854 = vpack.c.b16 %v5315, %v5308
    %v5855 = vpack.c.b16 %v5316, %v5309
    %v5856 = vpack.c.b16 %v5317, %v5310
    %v5857 = vpack.c.b16 %v5318, %v5311
    %v5858 = vpack.c.b16 %v5319, %v5312
    %v5859 = vpack.c.b16 %v5327, %v5320
    %v5860 = vpack.c.b16 %v5328, %v5321
    %v5861 = vpack.c.b16 %v5329, %v5322
    %v5862 = vpack.c.b16 %v5330, %v5323
    %v5863 = vpack.c.b16 %v5331, %v5324
    %v5864 = vpack.c.b16 %v5332, %v5325
    %v5865 = vpack.c.b16 %v5333, %v5326
    %v5866 = vpack.c.b16 %v5341, %v5334
    %v5867 = vpack.c.b16 %v5342, %v5335
    %v5868 = vpack.c.b16 %v5343, %v5336
    %v5869 = vpack.c.b16 %v5344, %v5337
    %v5870 = vpack.c.b16 %v5345, %v5338
    %v5871 = vpack.c.b16 %v5346, %v5339
    %v5872 = vpack.c.b16 %v5347, %v5340
    %v5873 = vpack.c.b16 %v5355, %v5348
    %v5874 = vpack.c.b16 %v5356, %v5349
    %v5875 = vpack.c.b16 %v5357, %v5350
    %v5876 = vpack.c.b16 %v5358, %v5351
    %v5877 = vpack.c.b16 %v5359, %v5352
    %v5878 = vpack.c.b16 %v5360, %v5353
    %v5879 = vpack.c.b16 %v5361, %v5354
    %v5880 = vpack.c.b16 %v5369, %v5362
    %v5881 = vpack.c.b16 %v5370, %v5363
    %v5882 = vpack.c.b16 %v5371, %v5364
    %v5883 = vpack.c.b16 %v5372, %v5365
    %v5884 = vpack.c.b16 %v5373, %v5366
    %v5885 = vpack.c.b16 %v5374, %v5367
    %v5886 = vpack.c.b16 %v5375, %v5368
    %v5887 = vpack.c.b16 %v5383, %v5376
    %v5888 = vpack.c.b16 %v5384, %v5377
    %v5889 = vpack.c.b16 %v5385, %v5378
    %v5890 = vpack.c.b16 %v5386, %v5379
    %v5891 = vpack.c.b16 %v5387, %v5380
    %v5892 = vpack.c.b16 %v5388, %v5381
    %v5893 = vpack.c.b16 %v5389, %v5382
    %v5894 = vpack.c.b16 %v5397, %v5390
    %v5895 = vpack.c.b16 %v5398, %v5391
    %v5896 = vpack.c.b16 %v5399, %v5392
    %v5897 = vpack.c.b16 %v5400, %v5393
    %v5898 = vpack.c.b16 %v5401, %v5394
    %v5899 = vpack.c.b16 %v5402, %v5395
    %v5900 = vpack.c.b16 %v5403, %v5396
    %v5901 = vpack.c.b16 %v5411, %v5404
    %v5902 = vpack.c.b16 %v5412, %v5405
    %v5903 = vpack.c.b16 %v5413, %v5406
    %v5904 = vpack.c.b16 %v5414, %v5407
    %v5905 = vpack.c.b16 %v5415, %v5408
    %v5906 = vpack.c.b16 %v5416, %v5409
    %v5907 = vpack.c.b16 %v5417, %v5410
    %v5908 = vpack.c.b16 %v5425, %v5418
    %v5909 = vpack.c.b16 %v5426, %v5419
    %v5910 = vpack.c.b16 %v5427, %v5420
    %v5911 = vpack.c.b16 %v5428, %v5421
    %v5912 = vpack.c.b16 %v5429, %v5422
    %v5913 = vpack.c.b16 %v5430, %v5423
    %v5914 = vpack.c.b16 %v5431, %v5424
    %v5915 = vpack.c.b16 %v5439, %v5432
    %v5916 = vpack.c.b16 %v5440, %v5433
    %v5917 = vpack.c.b16 %v5441, %v5434
    %v5918 = vpack.c.b16 %v5442, %v5435
    %v5919 = vpack.c.b16 %v5443, %v5436
    %v5920 = vpack.c.b16 %v5444, %v5437
    %v5921 = vpack.c.b16 %v5445, %v5438
    %v5922 = vpack.c.b16 %v5453, %v5446
    %v5923 = vpack.c.b16 %v5454, %v5447
    %v5924 = vpack.c.b16 %v5455, %v5448
    %v5925 = vpack.c.b16 %v5456, %v5449
    %v5926 = vpack.c.b16 %v5457, %v5450
    %v5927 = vpack.c.b16 %v5458, %v5451
    %v5928 = vpack.c.b16 %v5459, %v5452
    %v5929 = vpack.c.b16 %v5467, %v5460
    %v5930 = vpack.c.b16 %v5468, %v5461
    %v5931 = vpack.c.b16 %v5469, %v5462
    %v5932 = vpack.c.b16 %v5470, %v5463
    %v5933 = vpack.c.b16 %v5471, %v5464
    %v5934 = vpack.c.b16 %v5472, %v5465
    %v5935 = vpack.c.b16 %v5473, %v5466
    %v5936 = vpack.c.b16 %v5481, %v5474
    %v5937 = vpack.c.b16 %v5482, %v5475
    %v5938 = vpack.c.b16 %v5483, %v5476
    %v5939 = vpack.c.b16 %v5484, %v5477
    %v5940 = vpack.c.b16 %v5485, %v5478
    %v5941 = vpack.c.b16 %v5486, %v5479
    %v5942 = vpack.c.b16 %v5487, %v5480
    %v5943 = vpack.c.b16 %v5495, %v5488
    %v5944 = vpack.c.b16 %v5496, %v5489
    %v5945 = vpack.c.b16 %v5497, %v5490
    %v5946 = vpack.c.b16 %v5498, %v5491
    %v5947 = vpack.c.b16 %v5499, %v5492
    %v5948 = vpack.c.b16 %v5500, %v5493
    %v5949 = vpack.c.b16 %v5501, %v5494
    %6398 = vmatpush.bf16.msra.mxu0 %v5551
    %6399 = vmatpush.bf16.msra.mxu0 %v5544
    %6400 = vmatpush.bf16.msra.mxu0 %v5537
    %6401 = vmatpush.bf16.msra.mxu0 %v5530
    %6402 = vmatpush.bf16.msra.mxu0 %v5523
    %6403 = vmatpush.bf16.msra.mxu0 %v5516
    %6404 = vmatpush.bf16.msra.mxu0 %v5509
    %6405 = vmatpush.bf16.msra.mxu0 %v5502
    %6406 = vmatmul.bf16.gmra.mxu0 %v3558
    %v6407 = vpop.f32.mrf.mxu0
    %v6408 = vadd.f32 %v4080, %v6407
    %v6409 = vpop.f32.mrf.mxu0
    %6410 = vdwg.mxu0
    %6411 = vmatpush.bf16.msra.mxu0 %v5607
    %6412 = vmatpush.bf16.msra.mxu0 %v5600
    %6413 = vmatpush.bf16.msra.mxu0 %v5593
    %6414 = vmatpush.bf16.msra.mxu0 %v5586
    %6415 = vmatpush.bf16.msra.mxu0 %v5579
    %6416 = vmatpush.bf16.msra.mxu0 %v5572
    %6417 = vmatpush.bf16.msra.mxu0 %v5565
    %6418 = vmatpush.bf16.msra.mxu0 %v5558
    %6419 = vmatmul.bf16.gmra.mxu0 %v3559
    %v6420 = vpop.f32.mrf.mxu0
    %v6421 = vadd.f32 %v6408, %v6420
    %v6422 = vpop.f32.mrf.mxu0
    %6423 = vdwg.mxu0
    %6424 = vmatpush.bf16.msra.mxu0 %v5663
    %6425 = vmatpush.bf16.msra.mxu0 %v5656
    %6426 = vmatpush.bf16.msra.mxu0 %v5649
    %6427 = vmatpush.bf16.msra.mxu0 %v5642
    %6428 = vmatpush.bf16.msra.mxu0 %v5635
    %6429 = vmatpush.bf16.msra.mxu0 %v5628
    %6430 = vmatpush.bf16.msra.mxu0 %v5621
    %6431 = vmatpush.bf16.msra.mxu0 %v5614
    %6432 = vmatmul.bf16.gmra.mxu0 %v3560
    %v6433 = vpop.f32.mrf.mxu0
    %v6434 = vadd.f32 %v6421, %v6433
    %v6435 = vpop.f32.mrf.mxu0
    %6436 = vdwg.mxu0
    %6437 = vmatpush.bf16.msra.mxu0 %v5719
    %6438 = vmatpush.bf16.msra.mxu0 %v5712
    %6439 = vmatpush.bf16.msra.mxu0 %v5705
    %6440 = vmatpush.bf16.msra.mxu0 %v5698
    %6441 = vmatpush.bf16.msra.mxu0 %v5691
    %6442 = vmatpush.bf16.msra.mxu0 %v5684
    %6443 = vmatpush.bf16.msra.mxu0 %v5677
    %6444 = vmatpush.bf16.msra.mxu0 %v5670
    %6445 = vmatmul.bf16.gmra.mxu0 %v3561
    %v6446 = vpop.f32.mrf.mxu0
    %v6447 = vadd.f32 %v6434, %v6446
    %v6448 = vpop.f32.mrf.mxu0
    %6449 = vdwg.mxu0
    %6450 = vmatpush.bf16.msra.mxu0 %v5775
    %6451 = vmatpush.bf16.msra.mxu0 %v5768
    %6452 = vmatpush.bf16.msra.mxu0 %v5761
    %6453 = vmatpush.bf16.msra.mxu0 %v5754
    %6454 = vmatpush.bf16.msra.mxu0 %v5747
    %6455 = vmatpush.bf16.msra.mxu0 %v5740
    %6456 = vmatpush.bf16.msra.mxu0 %v5733
    %6457 = vmatpush.bf16.msra.mxu0 %v5726
    %6458 = vmatmul.bf16.gmra.mxu0 %v3562
    %v6459 = vpop.f32.mrf.mxu0
    %v6460 = vadd.f32 %v6447, %v6459
    %v6461 = vpop.f32.mrf.mxu0
    %6462 = vdwg.mxu0
    %6463 = vmatpush.bf16.msra.mxu0 %v5831
    %6464 = vmatpush.bf16.msra.mxu0 %v5824
    %6465 = vmatpush.bf16.msra.mxu0 %v5817
    %6466 = vmatpush.bf16.msra.mxu0 %v5810
    %6467 = vmatpush.bf16.msra.mxu0 %v5803
    %6468 = vmatpush.bf16.msra.mxu0 %v5796
    %6469 = vmatpush.bf16.msra.mxu0 %v5789
    %6470 = vmatpush.bf16.msra.mxu0 %v5782
    %6471 = vmatmul.bf16.gmra.mxu0 %v3563
    %v6472 = vpop.f32.mrf.mxu0
    %v6473 = vadd.f32 %v6460, %v6472
    %v6474 = vpop.f32.mrf.mxu0
    %6475 = vdwg.mxu0
    %6476 = vmatpush.bf16.msra.mxu0 %v5887
    %6477 = vmatpush.bf16.msra.mxu0 %v5880
    %6478 = vmatpush.bf16.msra.mxu0 %v5873
    %6479 = vmatpush.bf16.msra.mxu0 %v5866
    %6480 = vmatpush.bf16.msra.mxu0 %v5859
    %6481 = vmatpush.bf16.msra.mxu0 %v5852
    %6482 = vmatpush.bf16.msra.mxu0 %v5845
    %6483 = vmatpush.bf16.msra.mxu0 %v5838
    %6484 = vmatmul.bf16.gmra.mxu0 %v3564
    %v6485 = vpop.f32.mrf.mxu0
    %v6486 = vadd.f32 %v6473, %v6485
    %v6487 = vpop.f32.mrf.mxu0
    %6488 = vdwg.mxu0
    %6489 = vmatpush.bf16.msra.mxu0 %v5943
    %6490 = vmatpush.bf16.msra.mxu0 %v5936
    %6491 = vmatpush.bf16.msra.mxu0 %v5929
    %6492 = vmatpush.bf16.msra.mxu0 %v5922
    %6493 = vmatpush.bf16.msra.mxu0 %v5915
    %6494 = vmatpush.bf16.msra.mxu0 %v5908
    %6495 = vmatpush.bf16.msra.mxu0 %v5901
    %6496 = vmatpush.bf16.msra.mxu0 %v5894
    %6497 = vmatmul.bf16.gmra.mxu0 %v3565
    %v6498 = vpop.f32.mrf.mxu0
    %v6499 = vadd.f32 %v6486, %v6498
    %v6500 = vpop.f32.mrf.mxu0
    %6501 = vdwg.mxu0
    %6502 = vmatpush.bf16.msra.mxu0 %v5552
    %6503 = vmatpush.bf16.msra.mxu0 %v5545
    %6504 = vmatpush.bf16.msra.mxu0 %v5538
    %6505 = vmatpush.bf16.msra.mxu0 %v5531
    %6506 = vmatpush.bf16.msra.mxu0 %v5524
    %6507 = vmatpush.bf16.msra.mxu0 %v5517
    %6508 = vmatpush.bf16.msra.mxu0 %v5510
    %6509 = vmatpush.bf16.msra.mxu0 %v5503
    %6510 = vmatmul.bf16.gmra.mxu0 %v3558
    %v6511 = vpop.f32.mrf.mxu0
    %v6512 = vadd.f32 %v4081, %v6511
    %v6513 = vpop.f32.mrf.mxu0
    %6514 = vdwg.mxu0
    %6515 = vmatpush.bf16.msra.mxu0 %v5608
    %6516 = vmatpush.bf16.msra.mxu0 %v5601
    %6517 = vmatpush.bf16.msra.mxu0 %v5594
    %6518 = vmatpush.bf16.msra.mxu0 %v5587
    %6519 = vmatpush.bf16.msra.mxu0 %v5580
    %6520 = vmatpush.bf16.msra.mxu0 %v5573
    %6521 = vmatpush.bf16.msra.mxu0 %v5566
    %6522 = vmatpush.bf16.msra.mxu0 %v5559
    %6523 = vmatmul.bf16.gmra.mxu0 %v3559
    %v6524 = vpop.f32.mrf.mxu0
    %v6525 = vadd.f32 %v6512, %v6524
    %v6526 = vpop.f32.mrf.mxu0
    %6527 = vdwg.mxu0
    %6528 = vmatpush.bf16.msra.mxu0 %v5664
    %6529 = vmatpush.bf16.msra.mxu0 %v5657
    %6530 = vmatpush.bf16.msra.mxu0 %v5650
    %6531 = vmatpush.bf16.msra.mxu0 %v5643
    %6532 = vmatpush.bf16.msra.mxu0 %v5636
    %6533 = vmatpush.bf16.msra.mxu0 %v5629
    %6534 = vmatpush.bf16.msra.mxu0 %v5622
    %6535 = vmatpush.bf16.msra.mxu0 %v5615
    %6536 = vmatmul.bf16.gmra.mxu0 %v3560
    %v6537 = vpop.f32.mrf.mxu0
    %v6538 = vadd.f32 %v6525, %v6537
    %v6539 = vpop.f32.mrf.mxu0
    %6540 = vdwg.mxu0
    %6541 = vmatpush.bf16.msra.mxu0 %v5720
    %6542 = vmatpush.bf16.msra.mxu0 %v5713
    %6543 = vmatpush.bf16.msra.mxu0 %v5706
    %6544 = vmatpush.bf16.msra.mxu0 %v5699
    %6545 = vmatpush.bf16.msra.mxu0 %v5692
    %6546 = vmatpush.bf16.msra.mxu0 %v5685
    %6547 = vmatpush.bf16.msra.mxu0 %v5678
    %6548 = vmatpush.bf16.msra.mxu0 %v5671
    %6549 = vmatmul.bf16.gmra.mxu0 %v3561
    %v6550 = vpop.f32.mrf.mxu0
    %v6551 = vadd.f32 %v6538, %v6550
    %v6552 = vpop.f32.mrf.mxu0
    %6553 = vdwg.mxu0
    %6554 = vmatpush.bf16.msra.mxu0 %v5776
    %6555 = vmatpush.bf16.msra.mxu0 %v5769
    %6556 = vmatpush.bf16.msra.mxu0 %v5762
    %6557 = vmatpush.bf16.msra.mxu0 %v5755
    %6558 = vmatpush.bf16.msra.mxu0 %v5748
    %6559 = vmatpush.bf16.msra.mxu0 %v5741
    %6560 = vmatpush.bf16.msra.mxu0 %v5734
    %6561 = vmatpush.bf16.msra.mxu0 %v5727
    %6562 = vmatmul.bf16.gmra.mxu0 %v3562
    %v6563 = vpop.f32.mrf.mxu0
    %v6564 = vadd.f32 %v6551, %v6563
    %v6565 = vpop.f32.mrf.mxu0
    %6566 = vdwg.mxu0
    %6567 = vmatpush.bf16.msra.mxu0 %v5832
    %6568 = vmatpush.bf16.msra.mxu0 %v5825
    %6569 = vmatpush.bf16.msra.mxu0 %v5818
    %6570 = vmatpush.bf16.msra.mxu0 %v5811
    %6571 = vmatpush.bf16.msra.mxu0 %v5804
    %6572 = vmatpush.bf16.msra.mxu0 %v5797
    %6573 = vmatpush.bf16.msra.mxu0 %v5790
    %6574 = vmatpush.bf16.msra.mxu0 %v5783
    %6575 = vmatmul.bf16.gmra.mxu0 %v3563
    %v6576 = vpop.f32.mrf.mxu0
    %v6577 = vadd.f32 %v6564, %v6576
    %v6578 = vpop.f32.mrf.mxu0
    %6579 = vdwg.mxu0
    %6580 = vmatpush.bf16.msra.mxu0 %v5888
    %6581 = vmatpush.bf16.msra.mxu0 %v5881
    %6582 = vmatpush.bf16.msra.mxu0 %v5874
    %6583 = vmatpush.bf16.msra.mxu0 %v5867
    %6584 = vmatpush.bf16.msra.mxu0 %v5860
    %6585 = vmatpush.bf16.msra.mxu0 %v5853
    %6586 = vmatpush.bf16.msra.mxu0 %v5846
    %6587 = vmatpush.bf16.msra.mxu0 %v5839
    %6588 = vmatmul.bf16.gmra.mxu0 %v3564
    %v6589 = vpop.f32.mrf.mxu0
    %v6590 = vadd.f32 %v6577, %v6589
    %v6591 = vpop.f32.mrf.mxu0
    %6592 = vdwg.mxu0
    %6593 = vmatpush.bf16.msra.mxu0 %v5944
    %6594 = vmatpush.bf16.msra.mxu0 %v5937
    %6595 = vmatpush.bf16.msra.mxu0 %v5930
    %6596 = vmatpush.bf16.msra.mxu0 %v5923
    %6597 = vmatpush.bf16.msra.mxu0 %v5916
    %6598 = vmatpush.bf16.msra.mxu0 %v5909
    %6599 = vmatpush.bf16.msra.mxu0 %v5902
    %6600 = vmatpush.bf16.msra.mxu0 %v5895
    %6601 = vmatmul.bf16.gmra.mxu0 %v3565
    %v6602 = vpop.f32.mrf.mxu0
    %v6603 = vadd.f32 %v6590, %v6602
    %v6604 = vpop.f32.mrf.mxu0
    %6605 = vdwg.mxu0
    %6606 = vmatpush.bf16.msra.mxu0 %v5553
    %6607 = vmatpush.bf16.msra.mxu0 %v5546
    %6608 = vmatpush.bf16.msra.mxu0 %v5539
    %6609 = vmatpush.bf16.msra.mxu0 %v5532
    %6610 = vmatpush.bf16.msra.mxu0 %v5525
    %6611 = vmatpush.bf16.msra.mxu0 %v5518
    %6612 = vmatpush.bf16.msra.mxu0 %v5511
    %6613 = vmatpush.bf16.msra.mxu0 %v5504
    %6614 = vmatmul.bf16.gmra.mxu0 %v3558
    %v6615 = vpop.f32.mrf.mxu0
    %v6616 = vadd.f32 %v4082, %v6615
    %v6617 = vpop.f32.mrf.mxu0
    %6618 = vdwg.mxu0
    %6619 = vmatpush.bf16.msra.mxu0 %v5609
    %6620 = vmatpush.bf16.msra.mxu0 %v5602
    %6621 = vmatpush.bf16.msra.mxu0 %v5595
    %6622 = vmatpush.bf16.msra.mxu0 %v5588
    %6623 = vmatpush.bf16.msra.mxu0 %v5581
    %6624 = vmatpush.bf16.msra.mxu0 %v5574
    %6625 = vmatpush.bf16.msra.mxu0 %v5567
    %6626 = vmatpush.bf16.msra.mxu0 %v5560
    %6627 = vmatmul.bf16.gmra.mxu0 %v3559
    %v6628 = vpop.f32.mrf.mxu0
    %v6629 = vadd.f32 %v6616, %v6628
    %v6630 = vpop.f32.mrf.mxu0
    %6631 = vdwg.mxu0
    %6632 = vmatpush.bf16.msra.mxu0 %v5665
    %6633 = vmatpush.bf16.msra.mxu0 %v5658
    %6634 = vmatpush.bf16.msra.mxu0 %v5651
    %6635 = vmatpush.bf16.msra.mxu0 %v5644
    %6636 = vmatpush.bf16.msra.mxu0 %v5637
    %6637 = vmatpush.bf16.msra.mxu0 %v5630
    %6638 = vmatpush.bf16.msra.mxu0 %v5623
    %6639 = vmatpush.bf16.msra.mxu0 %v5616
    %6640 = vmatmul.bf16.gmra.mxu0 %v3560
    %v6641 = vpop.f32.mrf.mxu0
    %v6642 = vadd.f32 %v6629, %v6641
    %v6643 = vpop.f32.mrf.mxu0
    %6644 = vdwg.mxu0
    %6645 = vmatpush.bf16.msra.mxu0 %v5721
    %6646 = vmatpush.bf16.msra.mxu0 %v5714
    %6647 = vmatpush.bf16.msra.mxu0 %v5707
    %6648 = vmatpush.bf16.msra.mxu0 %v5700
    %6649 = vmatpush.bf16.msra.mxu0 %v5693
    %6650 = vmatpush.bf16.msra.mxu0 %v5686
    %6651 = vmatpush.bf16.msra.mxu0 %v5679
    %6652 = vmatpush.bf16.msra.mxu0 %v5672
    %6653 = vmatmul.bf16.gmra.mxu0 %v3561
    %v6654 = vpop.f32.mrf.mxu0
    %v6655 = vadd.f32 %v6642, %v6654
    %v6656 = vpop.f32.mrf.mxu0
    %6657 = vdwg.mxu0
    %6658 = vmatpush.bf16.msra.mxu0 %v5777
    %6659 = vmatpush.bf16.msra.mxu0 %v5770
    %6660 = vmatpush.bf16.msra.mxu0 %v5763
    %6661 = vmatpush.bf16.msra.mxu0 %v5756
    %6662 = vmatpush.bf16.msra.mxu0 %v5749
    %6663 = vmatpush.bf16.msra.mxu0 %v5742
    %6664 = vmatpush.bf16.msra.mxu0 %v5735
    %6665 = vmatpush.bf16.msra.mxu0 %v5728
    %6666 = vmatmul.bf16.gmra.mxu0 %v3562
    %v6667 = vpop.f32.mrf.mxu0
    %v6668 = vadd.f32 %v6655, %v6667
    %v6669 = vpop.f32.mrf.mxu0
    %6670 = vdwg.mxu0
    %6671 = vmatpush.bf16.msra.mxu0 %v5833
    %6672 = vmatpush.bf16.msra.mxu0 %v5826
    %6673 = vmatpush.bf16.msra.mxu0 %v5819
    %6674 = vmatpush.bf16.msra.mxu0 %v5812
    %6675 = vmatpush.bf16.msra.mxu0 %v5805
    %6676 = vmatpush.bf16.msra.mxu0 %v5798
    %6677 = vmatpush.bf16.msra.mxu0 %v5791
    %6678 = vmatpush.bf16.msra.mxu0 %v5784
    %6679 = vmatmul.bf16.gmra.mxu0 %v3563
    %v6680 = vpop.f32.mrf.mxu0
    %v6681 = vadd.f32 %v6668, %v6680
    %v6682 = vpop.f32.mrf.mxu0
    %6683 = vdwg.mxu0
    %6684 = vmatpush.bf16.msra.mxu0 %v5889
    %6685 = vmatpush.bf16.msra.mxu0 %v5882
    %6686 = vmatpush.bf16.msra.mxu0 %v5875
    %6687 = vmatpush.bf16.msra.mxu0 %v5868
    %6688 = vmatpush.bf16.msra.mxu0 %v5861
    %6689 = vmatpush.bf16.msra.mxu0 %v5854
    %6690 = vmatpush.bf16.msra.mxu0 %v5847
    %6691 = vmatpush.bf16.msra.mxu0 %v5840
    %6692 = vmatmul.bf16.gmra.mxu0 %v3564
    %v6693 = vpop.f32.mrf.mxu0
    %v6694 = vadd.f32 %v6681, %v6693
    %v6695 = vpop.f32.mrf.mxu0
    %6696 = vdwg.mxu0
    %6697 = vmatpush.bf16.msra.mxu0 %v5945
    %6698 = vmatpush.bf16.msra.mxu0 %v5938
    %6699 = vmatpush.bf16.msra.mxu0 %v5931
    %6700 = vmatpush.bf16.msra.mxu0 %v5924
    %6701 = vmatpush.bf16.msra.mxu0 %v5917
    %6702 = vmatpush.bf16.msra.mxu0 %v5910
    %6703 = vmatpush.bf16.msra.mxu0 %v5903
    %6704 = vmatpush.bf16.msra.mxu0 %v5896
    %6705 = vmatmul.bf16.gmra.mxu0 %v3565
    %v6706 = vpop.f32.mrf.mxu0
    %v6707 = vadd.f32 %v6694, %v6706
    %v6708 = vpop.f32.mrf.mxu0
    %6709 = vdwg.mxu0
    %6710 = vmatpush.bf16.msra.mxu0 %v5554
    %6711 = vmatpush.bf16.msra.mxu0 %v5547
    %6712 = vmatpush.bf16.msra.mxu0 %v5540
    %6713 = vmatpush.bf16.msra.mxu0 %v5533
    %6714 = vmatpush.bf16.msra.mxu0 %v5526
    %6715 = vmatpush.bf16.msra.mxu0 %v5519
    %6716 = vmatpush.bf16.msra.mxu0 %v5512
    %6717 = vmatpush.bf16.msra.mxu0 %v5505
    %6718 = vmatmul.bf16.gmra.mxu0 %v3558
    %v6719 = vpop.f32.mrf.mxu0
    %v6720 = vadd.f32 %v4083, %v6719
    %v6721 = vpop.f32.mrf.mxu0
    %6722 = vdwg.mxu0
    %6723 = vmatpush.bf16.msra.mxu0 %v5610
    %6724 = vmatpush.bf16.msra.mxu0 %v5603
    %6725 = vmatpush.bf16.msra.mxu0 %v5596
    %6726 = vmatpush.bf16.msra.mxu0 %v5589
    %6727 = vmatpush.bf16.msra.mxu0 %v5582
    %6728 = vmatpush.bf16.msra.mxu0 %v5575
    %6729 = vmatpush.bf16.msra.mxu0 %v5568
    %6730 = vmatpush.bf16.msra.mxu0 %v5561
    %6731 = vmatmul.bf16.gmra.mxu0 %v3559
    %v6732 = vpop.f32.mrf.mxu0
    %v6733 = vadd.f32 %v6720, %v6732
    %v6734 = vpop.f32.mrf.mxu0
    %6735 = vdwg.mxu0
    %6736 = vmatpush.bf16.msra.mxu0 %v5666
    %6737 = vmatpush.bf16.msra.mxu0 %v5659
    %6738 = vmatpush.bf16.msra.mxu0 %v5652
    %6739 = vmatpush.bf16.msra.mxu0 %v5645
    %6740 = vmatpush.bf16.msra.mxu0 %v5638
    %6741 = vmatpush.bf16.msra.mxu0 %v5631
    %6742 = vmatpush.bf16.msra.mxu0 %v5624
    %6743 = vmatpush.bf16.msra.mxu0 %v5617
    %6744 = vmatmul.bf16.gmra.mxu0 %v3560
    %v6745 = vpop.f32.mrf.mxu0
    %v6746 = vadd.f32 %v6733, %v6745
    %v6747 = vpop.f32.mrf.mxu0
    %6748 = vdwg.mxu0
    %6749 = vmatpush.bf16.msra.mxu0 %v5722
    %6750 = vmatpush.bf16.msra.mxu0 %v5715
    %6751 = vmatpush.bf16.msra.mxu0 %v5708
    %6752 = vmatpush.bf16.msra.mxu0 %v5701
    %6753 = vmatpush.bf16.msra.mxu0 %v5694
    %6754 = vmatpush.bf16.msra.mxu0 %v5687
    %6755 = vmatpush.bf16.msra.mxu0 %v5680
    %6756 = vmatpush.bf16.msra.mxu0 %v5673
    %6757 = vmatmul.bf16.gmra.mxu0 %v3561
    %v6758 = vpop.f32.mrf.mxu0
    %v6759 = vadd.f32 %v6746, %v6758
    %v6760 = vpop.f32.mrf.mxu0
    %6761 = vdwg.mxu0
    %6762 = vmatpush.bf16.msra.mxu0 %v5778
    %6763 = vmatpush.bf16.msra.mxu0 %v5771
    %6764 = vmatpush.bf16.msra.mxu0 %v5764
    %6765 = vmatpush.bf16.msra.mxu0 %v5757
    %6766 = vmatpush.bf16.msra.mxu0 %v5750
    %6767 = vmatpush.bf16.msra.mxu0 %v5743
    %6768 = vmatpush.bf16.msra.mxu0 %v5736
    %6769 = vmatpush.bf16.msra.mxu0 %v5729
    %6770 = vmatmul.bf16.gmra.mxu0 %v3562
    %v6771 = vpop.f32.mrf.mxu0
    %v6772 = vadd.f32 %v6759, %v6771
    %v6773 = vpop.f32.mrf.mxu0
    %6774 = vdwg.mxu0
    %6775 = vmatpush.bf16.msra.mxu0 %v5834
    %6776 = vmatpush.bf16.msra.mxu0 %v5827
    %6777 = vmatpush.bf16.msra.mxu0 %v5820
    %6778 = vmatpush.bf16.msra.mxu0 %v5813
    %6779 = vmatpush.bf16.msra.mxu0 %v5806
    %6780 = vmatpush.bf16.msra.mxu0 %v5799
    %6781 = vmatpush.bf16.msra.mxu0 %v5792
    %6782 = vmatpush.bf16.msra.mxu0 %v5785
    %6783 = vmatmul.bf16.gmra.mxu0 %v3563
    %v6784 = vpop.f32.mrf.mxu0
    %v6785 = vadd.f32 %v6772, %v6784
    %v6786 = vpop.f32.mrf.mxu0
    %6787 = vdwg.mxu0
    %6788 = vmatpush.bf16.msra.mxu0 %v5890
    %6789 = vmatpush.bf16.msra.mxu0 %v5883
    %6790 = vmatpush.bf16.msra.mxu0 %v5876
    %6791 = vmatpush.bf16.msra.mxu0 %v5869
    %6792 = vmatpush.bf16.msra.mxu0 %v5862
    %6793 = vmatpush.bf16.msra.mxu0 %v5855
    %6794 = vmatpush.bf16.msra.mxu0 %v5848
    %6795 = vmatpush.bf16.msra.mxu0 %v5841
    %6796 = vmatmul.bf16.gmra.mxu0 %v3564
    %v6797 = vpop.f32.mrf.mxu0
    %v6798 = vadd.f32 %v6785, %v6797
    %v6799 = vpop.f32.mrf.mxu0
    %6800 = vdwg.mxu0
    %6801 = vmatpush.bf16.msra.mxu0 %v5946
    %6802 = vmatpush.bf16.msra.mxu0 %v5939
    %6803 = vmatpush.bf16.msra.mxu0 %v5932
    %6804 = vmatpush.bf16.msra.mxu0 %v5925
    %6805 = vmatpush.bf16.msra.mxu0 %v5918
    %6806 = vmatpush.bf16.msra.mxu0 %v5911
    %6807 = vmatpush.bf16.msra.mxu0 %v5904
    %6808 = vmatpush.bf16.msra.mxu0 %v5897
    %6809 = vmatmul.bf16.gmra.mxu0 %v3565
    %v6810 = vpop.f32.mrf.mxu0
    %v6811 = vadd.f32 %v6798, %v6810
    %v6812 = vpop.f32.mrf.mxu0
    %6813 = vdwg.mxu0
    %6814 = vmatpush.bf16.msra.mxu0 %v5555
    %6815 = vmatpush.bf16.msra.mxu0 %v5548
    %6816 = vmatpush.bf16.msra.mxu0 %v5541
    %6817 = vmatpush.bf16.msra.mxu0 %v5534
    %6818 = vmatpush.bf16.msra.mxu0 %v5527
    %6819 = vmatpush.bf16.msra.mxu0 %v5520
    %6820 = vmatpush.bf16.msra.mxu0 %v5513
    %6821 = vmatpush.bf16.msra.mxu0 %v5506
    %6822 = vmatmul.bf16.gmra.mxu0 %v3558
    %v6823 = vpop.f32.mrf.mxu0
    %v6824 = vadd.f32 %v4084, %v6823
    %v6825 = vpop.f32.mrf.mxu0
    %6826 = vdwg.mxu0
    %6827 = vmatpush.bf16.msra.mxu0 %v5611
    %6828 = vmatpush.bf16.msra.mxu0 %v5604
    %6829 = vmatpush.bf16.msra.mxu0 %v5597
    %6830 = vmatpush.bf16.msra.mxu0 %v5590
    %6831 = vmatpush.bf16.msra.mxu0 %v5583
    %6832 = vmatpush.bf16.msra.mxu0 %v5576
    %6833 = vmatpush.bf16.msra.mxu0 %v5569
    %6834 = vmatpush.bf16.msra.mxu0 %v5562
    %6835 = vmatmul.bf16.gmra.mxu0 %v3559
    %v6836 = vpop.f32.mrf.mxu0
    %v6837 = vadd.f32 %v6824, %v6836
    %v6838 = vpop.f32.mrf.mxu0
    %6839 = vdwg.mxu0
    %6840 = vmatpush.bf16.msra.mxu0 %v5667
    %6841 = vmatpush.bf16.msra.mxu0 %v5660
    %6842 = vmatpush.bf16.msra.mxu0 %v5653
    %6843 = vmatpush.bf16.msra.mxu0 %v5646
    %6844 = vmatpush.bf16.msra.mxu0 %v5639
    %6845 = vmatpush.bf16.msra.mxu0 %v5632
    %6846 = vmatpush.bf16.msra.mxu0 %v5625
    %6847 = vmatpush.bf16.msra.mxu0 %v5618
    %6848 = vmatmul.bf16.gmra.mxu0 %v3560
    %v6849 = vpop.f32.mrf.mxu0
    %v6850 = vadd.f32 %v6837, %v6849
    %v6851 = vpop.f32.mrf.mxu0
    %6852 = vdwg.mxu0
    %6853 = vmatpush.bf16.msra.mxu0 %v5723
    %6854 = vmatpush.bf16.msra.mxu0 %v5716
    %6855 = vmatpush.bf16.msra.mxu0 %v5709
    %6856 = vmatpush.bf16.msra.mxu0 %v5702
    %6857 = vmatpush.bf16.msra.mxu0 %v5695
    %6858 = vmatpush.bf16.msra.mxu0 %v5688
    %6859 = vmatpush.bf16.msra.mxu0 %v5681
    %6860 = vmatpush.bf16.msra.mxu0 %v5674
    %6861 = vmatmul.bf16.gmra.mxu0 %v3561
    %v6862 = vpop.f32.mrf.mxu0
    %v6863 = vadd.f32 %v6850, %v6862
    %v6864 = vpop.f32.mrf.mxu0
    %6865 = vdwg.mxu0
    %6866 = vmatpush.bf16.msra.mxu0 %v5779
    %6867 = vmatpush.bf16.msra.mxu0 %v5772
    %6868 = vmatpush.bf16.msra.mxu0 %v5765
    %6869 = vmatpush.bf16.msra.mxu0 %v5758
    %6870 = vmatpush.bf16.msra.mxu0 %v5751
    %6871 = vmatpush.bf16.msra.mxu0 %v5744
    %6872 = vmatpush.bf16.msra.mxu0 %v5737
    %6873 = vmatpush.bf16.msra.mxu0 %v5730
    %6874 = vmatmul.bf16.gmra.mxu0 %v3562
    %v6875 = vpop.f32.mrf.mxu0
    %v6876 = vadd.f32 %v6863, %v6875
    %v6877 = vpop.f32.mrf.mxu0
    %6878 = vdwg.mxu0
    %6879 = vmatpush.bf16.msra.mxu0 %v5835
    %6880 = vmatpush.bf16.msra.mxu0 %v5828
    %6881 = vmatpush.bf16.msra.mxu0 %v5821
    %6882 = vmatpush.bf16.msra.mxu0 %v5814
    %6883 = vmatpush.bf16.msra.mxu0 %v5807
    %6884 = vmatpush.bf16.msra.mxu0 %v5800
    %6885 = vmatpush.bf16.msra.mxu0 %v5793
    %6886 = vmatpush.bf16.msra.mxu0 %v5786
    %6887 = vmatmul.bf16.gmra.mxu0 %v3563
    %v6888 = vpop.f32.mrf.mxu0
    %v6889 = vadd.f32 %v6876, %v6888
    %v6890 = vpop.f32.mrf.mxu0
    %6891 = vdwg.mxu0
    %6892 = vmatpush.bf16.msra.mxu0 %v5891
    %6893 = vmatpush.bf16.msra.mxu0 %v5884
    %6894 = vmatpush.bf16.msra.mxu0 %v5877
    %6895 = vmatpush.bf16.msra.mxu0 %v5870
    %6896 = vmatpush.bf16.msra.mxu0 %v5863
    %6897 = vmatpush.bf16.msra.mxu0 %v5856
    %6898 = vmatpush.bf16.msra.mxu0 %v5849
    %6899 = vmatpush.bf16.msra.mxu0 %v5842
    %6900 = vmatmul.bf16.gmra.mxu0 %v3564
    %v6901 = vpop.f32.mrf.mxu0
    %v6902 = vadd.f32 %v6889, %v6901
    %v6903 = vpop.f32.mrf.mxu0
    %6904 = vdwg.mxu0
    %6905 = vmatpush.bf16.msra.mxu0 %v5947
    %6906 = vmatpush.bf16.msra.mxu0 %v5940
    %6907 = vmatpush.bf16.msra.mxu0 %v5933
    %6908 = vmatpush.bf16.msra.mxu0 %v5926
    %6909 = vmatpush.bf16.msra.mxu0 %v5919
    %6910 = vmatpush.bf16.msra.mxu0 %v5912
    %6911 = vmatpush.bf16.msra.mxu0 %v5905
    %6912 = vmatpush.bf16.msra.mxu0 %v5898
    %6913 = vmatmul.bf16.gmra.mxu0 %v3565
    %v6914 = vpop.f32.mrf.mxu0
    %v6915 = vadd.f32 %v6902, %v6914
    %v6916 = vpop.f32.mrf.mxu0
    %6917 = vdwg.mxu0
    %6918 = vmatpush.bf16.msra.mxu0 %v5556
    %6919 = vmatpush.bf16.msra.mxu0 %v5549
    %6920 = vmatpush.bf16.msra.mxu0 %v5542
    %6921 = vmatpush.bf16.msra.mxu0 %v5535
    %6922 = vmatpush.bf16.msra.mxu0 %v5528
    %6923 = vmatpush.bf16.msra.mxu0 %v5521
    %6924 = vmatpush.bf16.msra.mxu0 %v5514
    %6925 = vmatpush.bf16.msra.mxu0 %v5507
    %6926 = vmatmul.bf16.gmra.mxu0 %v3558
    %v6927 = vpop.f32.mrf.mxu0
    %v6928 = vadd.f32 %v4085, %v6927
    %v6929 = vpop.f32.mrf.mxu0
    %6930 = vdwg.mxu0
    %6931 = vmatpush.bf16.msra.mxu0 %v5612
    %6932 = vmatpush.bf16.msra.mxu0 %v5605
    %6933 = vmatpush.bf16.msra.mxu0 %v5598
    %6934 = vmatpush.bf16.msra.mxu0 %v5591
    %6935 = vmatpush.bf16.msra.mxu0 %v5584
    %6936 = vmatpush.bf16.msra.mxu0 %v5577
    %6937 = vmatpush.bf16.msra.mxu0 %v5570
    %6938 = vmatpush.bf16.msra.mxu0 %v5563
    %6939 = vmatmul.bf16.gmra.mxu0 %v3559
    %v6940 = vpop.f32.mrf.mxu0
    %v6941 = vadd.f32 %v6928, %v6940
    %v6942 = vpop.f32.mrf.mxu0
    %6943 = vdwg.mxu0
    %6944 = vmatpush.bf16.msra.mxu0 %v5668
    %6945 = vmatpush.bf16.msra.mxu0 %v5661
    %6946 = vmatpush.bf16.msra.mxu0 %v5654
    %6947 = vmatpush.bf16.msra.mxu0 %v5647
    %6948 = vmatpush.bf16.msra.mxu0 %v5640
    %6949 = vmatpush.bf16.msra.mxu0 %v5633
    %6950 = vmatpush.bf16.msra.mxu0 %v5626
    %6951 = vmatpush.bf16.msra.mxu0 %v5619
    %6952 = vmatmul.bf16.gmra.mxu0 %v3560
    %v6953 = vpop.f32.mrf.mxu0
    %v6954 = vadd.f32 %v6941, %v6953
    %v6955 = vpop.f32.mrf.mxu0
    %6956 = vdwg.mxu0
    %6957 = vmatpush.bf16.msra.mxu0 %v5724
    %6958 = vmatpush.bf16.msra.mxu0 %v5717
    %6959 = vmatpush.bf16.msra.mxu0 %v5710
    %6960 = vmatpush.bf16.msra.mxu0 %v5703
    %6961 = vmatpush.bf16.msra.mxu0 %v5696
    %6962 = vmatpush.bf16.msra.mxu0 %v5689
    %6963 = vmatpush.bf16.msra.mxu0 %v5682
    %6964 = vmatpush.bf16.msra.mxu0 %v5675
    %6965 = vmatmul.bf16.gmra.mxu0 %v3561
    %v6966 = vpop.f32.mrf.mxu0
    %v6967 = vadd.f32 %v6954, %v6966
    %v6968 = vpop.f32.mrf.mxu0
    %6969 = vdwg.mxu0
    %6970 = vmatpush.bf16.msra.mxu0 %v5780
    %6971 = vmatpush.bf16.msra.mxu0 %v5773
    %6972 = vmatpush.bf16.msra.mxu0 %v5766
    %6973 = vmatpush.bf16.msra.mxu0 %v5759
    %6974 = vmatpush.bf16.msra.mxu0 %v5752
    %6975 = vmatpush.bf16.msra.mxu0 %v5745
    %6976 = vmatpush.bf16.msra.mxu0 %v5738
    %6977 = vmatpush.bf16.msra.mxu0 %v5731
    %6978 = vmatmul.bf16.gmra.mxu0 %v3562
    %v6979 = vpop.f32.mrf.mxu0
    %v6980 = vadd.f32 %v6967, %v6979
    %v6981 = vpop.f32.mrf.mxu0
    %6982 = vdwg.mxu0
    %6983 = vmatpush.bf16.msra.mxu0 %v5836
    %6984 = vmatpush.bf16.msra.mxu0 %v5829
    %6985 = vmatpush.bf16.msra.mxu0 %v5822
    %6986 = vmatpush.bf16.msra.mxu0 %v5815
    %6987 = vmatpush.bf16.msra.mxu0 %v5808
    %6988 = vmatpush.bf16.msra.mxu0 %v5801
    %6989 = vmatpush.bf16.msra.mxu0 %v5794
    %6990 = vmatpush.bf16.msra.mxu0 %v5787
    %6991 = vmatmul.bf16.gmra.mxu0 %v3563
    %v6992 = vpop.f32.mrf.mxu0
    %v6993 = vadd.f32 %v6980, %v6992
    %v6994 = vpop.f32.mrf.mxu0
    %6995 = vdwg.mxu0
    %6996 = vmatpush.bf16.msra.mxu0 %v5892
    %6997 = vmatpush.bf16.msra.mxu0 %v5885
    %6998 = vmatpush.bf16.msra.mxu0 %v5878
    %6999 = vmatpush.bf16.msra.mxu0 %v5871
    %7000 = vmatpush.bf16.msra.mxu0 %v5864
    %7001 = vmatpush.bf16.msra.mxu0 %v5857
    %7002 = vmatpush.bf16.msra.mxu0 %v5850
    %7003 = vmatpush.bf16.msra.mxu0 %v5843
    %7004 = vmatmul.bf16.gmra.mxu0 %v3564
    %v7005 = vpop.f32.mrf.mxu0
    %v7006 = vadd.f32 %v6993, %v7005
    %v7007 = vpop.f32.mrf.mxu0
    %7008 = vdwg.mxu0
    %7009 = vmatpush.bf16.msra.mxu0 %v5948
    %7010 = vmatpush.bf16.msra.mxu0 %v5941
    %7011 = vmatpush.bf16.msra.mxu0 %v5934
    %7012 = vmatpush.bf16.msra.mxu0 %v5927
    %7013 = vmatpush.bf16.msra.mxu0 %v5920
    %7014 = vmatpush.bf16.msra.mxu0 %v5913
    %7015 = vmatpush.bf16.msra.mxu0 %v5906
    %7016 = vmatpush.bf16.msra.mxu0 %v5899
    %7017 = vmatmul.bf16.gmra.mxu0 %v3565
    %v7018 = vpop.f32.mrf.mxu0
    %v7019 = vadd.f32 %v7006, %v7018
    %v7020 = vpop.f32.mrf.mxu0
    %7021 = vdwg.mxu0
    %7022 = vmatpush.bf16.msra.mxu0 %v5557
    %7023 = vmatpush.bf16.msra.mxu0 %v5550
    %7024 = vmatpush.bf16.msra.mxu0 %v5543
    %7025 = vmatpush.bf16.msra.mxu0 %v5536
    %7026 = vmatpush.bf16.msra.mxu0 %v5529
    %7027 = vmatpush.bf16.msra.mxu0 %v5522
    %7028 = vmatpush.bf16.msra.mxu0 %v5515
    %7029 = vmatpush.bf16.msra.mxu0 %v5508
    %7030 = vmatmul.bf16.gmra.mxu0 %v3558
    %v7031 = vpop.f32.mrf.mxu0
    %v7032 = vadd.f32 %v4086, %v7031
    %v7033 = vpop.f32.mrf.mxu0
    %7034 = vdwg.mxu0
    %7035 = vmatpush.bf16.msra.mxu0 %v5613
    %7036 = vmatpush.bf16.msra.mxu0 %v5606
    %7037 = vmatpush.bf16.msra.mxu0 %v5599
    %7038 = vmatpush.bf16.msra.mxu0 %v5592
    %7039 = vmatpush.bf16.msra.mxu0 %v5585
    %7040 = vmatpush.bf16.msra.mxu0 %v5578
    %7041 = vmatpush.bf16.msra.mxu0 %v5571
    %7042 = vmatpush.bf16.msra.mxu0 %v5564
    %7043 = vmatmul.bf16.gmra.mxu0 %v3559
    %v7044 = vpop.f32.mrf.mxu0
    %v7045 = vadd.f32 %v7032, %v7044
    %v7046 = vpop.f32.mrf.mxu0
    %7047 = vdwg.mxu0
    %7048 = vmatpush.bf16.msra.mxu0 %v5669
    %7049 = vmatpush.bf16.msra.mxu0 %v5662
    %7050 = vmatpush.bf16.msra.mxu0 %v5655
    %7051 = vmatpush.bf16.msra.mxu0 %v5648
    %7052 = vmatpush.bf16.msra.mxu0 %v5641
    %7053 = vmatpush.bf16.msra.mxu0 %v5634
    %7054 = vmatpush.bf16.msra.mxu0 %v5627
    %7055 = vmatpush.bf16.msra.mxu0 %v5620
    %7056 = vmatmul.bf16.gmra.mxu0 %v3560
    %v7057 = vpop.f32.mrf.mxu0
    %v7058 = vadd.f32 %v7045, %v7057
    %v7059 = vpop.f32.mrf.mxu0
    %7060 = vdwg.mxu0
    %7061 = vmatpush.bf16.msra.mxu0 %v5725
    %7062 = vmatpush.bf16.msra.mxu0 %v5718
    %7063 = vmatpush.bf16.msra.mxu0 %v5711
    %7064 = vmatpush.bf16.msra.mxu0 %v5704
    %7065 = vmatpush.bf16.msra.mxu0 %v5697
    %7066 = vmatpush.bf16.msra.mxu0 %v5690
    %7067 = vmatpush.bf16.msra.mxu0 %v5683
    %7068 = vmatpush.bf16.msra.mxu0 %v5676
    %7069 = vmatmul.bf16.gmra.mxu0 %v3561
    %v7070 = vpop.f32.mrf.mxu0
    %v7071 = vadd.f32 %v7058, %v7070
    %v7072 = vpop.f32.mrf.mxu0
    %7073 = vdwg.mxu0
    %7074 = vmatpush.bf16.msra.mxu0 %v5781
    %7075 = vmatpush.bf16.msra.mxu0 %v5774
    %7076 = vmatpush.bf16.msra.mxu0 %v5767
    %7077 = vmatpush.bf16.msra.mxu0 %v5760
    %7078 = vmatpush.bf16.msra.mxu0 %v5753
    %7079 = vmatpush.bf16.msra.mxu0 %v5746
    %7080 = vmatpush.bf16.msra.mxu0 %v5739
    %7081 = vmatpush.bf16.msra.mxu0 %v5732
    %7082 = vmatmul.bf16.gmra.mxu0 %v3562
    %v7083 = vpop.f32.mrf.mxu0
    %v7084 = vadd.f32 %v7071, %v7083
    %v7085 = vpop.f32.mrf.mxu0
    %7086 = vdwg.mxu0
    %7087 = vmatpush.bf16.msra.mxu0 %v5837
    %7088 = vmatpush.bf16.msra.mxu0 %v5830
    %7089 = vmatpush.bf16.msra.mxu0 %v5823
    %7090 = vmatpush.bf16.msra.mxu0 %v5816
    %7091 = vmatpush.bf16.msra.mxu0 %v5809
    %7092 = vmatpush.bf16.msra.mxu0 %v5802
    %7093 = vmatpush.bf16.msra.mxu0 %v5795
    %7094 = vmatpush.bf16.msra.mxu0 %v5788
    %7095 = vmatmul.bf16.gmra.mxu0 %v3563
    %v7096 = vpop.f32.mrf.mxu0
    %v7097 = vadd.f32 %v7084, %v7096
    %v7098 = vpop.f32.mrf.mxu0
    %7099 = vdwg.mxu0
    %7100 = vmatpush.bf16.msra.mxu0 %v5893
    %7101 = vmatpush.bf16.msra.mxu0 %v5886
    %7102 = vmatpush.bf16.msra.mxu0 %v5879
    %7103 = vmatpush.bf16.msra.mxu0 %v5872
    %7104 = vmatpush.bf16.msra.mxu0 %v5865
    %7105 = vmatpush.bf16.msra.mxu0 %v5858
    %7106 = vmatpush.bf16.msra.mxu0 %v5851
    %7107 = vmatpush.bf16.msra.mxu0 %v5844
    %7108 = vmatmul.bf16.gmra.mxu0 %v3564
    %v7109 = vpop.f32.mrf.mxu0
    %v7110 = vadd.f32 %v7097, %v7109
    %v7111 = vpop.f32.mrf.mxu0
    %7112 = vdwg.mxu0
    %7113 = vmatpush.bf16.msra.mxu0 %v5949
    %7114 = vmatpush.bf16.msra.mxu0 %v5942
    %7115 = vmatpush.bf16.msra.mxu0 %v5935
    %7116 = vmatpush.bf16.msra.mxu0 %v5928
    %7117 = vmatpush.bf16.msra.mxu0 %v5921
    %7118 = vmatpush.bf16.msra.mxu0 %v5914
    %7119 = vmatpush.bf16.msra.mxu0 %v5907
    %7120 = vmatpush.bf16.msra.mxu0 %v5900
    %7121 = vmatmul.bf16.gmra.mxu0 %v3565
    %v7122 = vpop.f32.mrf.mxu0
    %v7123 = vadd.f32 %v7110, %v7122
    %v7124 = vpop.f32.mrf.mxu0
    %7125 = vdwg.mxu0
    %v7126 = vtanh.pop %v6499
    %v7127 = vtanh.pop %v6603
    %v7128 = vtanh.pop %v6707
    %v7129 = vtanh.pop %v6811
    %v7130 = vtanh.pop %v6915
    %v7131 = vtanh.pop %v7019
    %v7132 = vtanh.pop %v7123
    %7133 = vst [vmem:[#allocation25] sm:$0xff] %v7126
    %7134 = vst [vmem:[#allocation25 + $0x8] sm:$0xff] %v7127
    %7135 = vst [vmem:[#allocation25 + $0x10] sm:$0xff] %v7128
    %7136 = vst [vmem:[#allocation25 + $0x18] sm:$0xff] %v7129
    %7137 = vst [vmem:[#allocation25 + $0x20] sm:$0xff] %v7130
    %7138 = vst [vmem:[#allocation25 + $0x28] sm:$0xff] %v7131
    %7139 = vst [vmem:[#allocation25 + $0x30] sm:$0xff] %v7132
    // Predicated region
    $region114: #{tpu_custom_call.1} parent=1 // pred_check
      _
    $region115: #{tpu_custom_call.1} parent=1 // pred_check_branch
      %7141 = sbr.rel (0) target = $region117
    $region116: #{tpu_custom_call.1} parent=1 // pred_region
      %7143 = vsyncadd [#allocation4], 0
      %s7145 = sshll.u32 [#allocation25], 4
      %s7146 = int_to_ptr.vmem [resolvable:$true] %s7145
      %s7147 = sshll.u32 %s14, 4
      %s7148 = int_to_ptr.hbm [resolvable:$true] %s7147
      %7150 = dma.vmem_to_hbm [thread:$0]  %s7146, 896, %s7148, [#allocation4]
    $region117: #{tpu_custom_call.1} parent=1 // pred_fallthru
      _
    // Predicated region
    $region118: #{tpu_custom_call.1} parent=1 // pred_check
      _
    $region119: #{tpu_custom_call.1} parent=1 // pred_check_branch
      %7152 = sbr.rel (0) target = $region121
    $region120: #{tpu_custom_call.1} parent=1 // pred_region
      %7154 = dma.done [#allocation4], 896
    $region121: #{tpu_custom_call.1} parent=1 // pred_fallthru
      _
    %7155 = vsyncpa [#allocation3], 1
    %7156 = vsyncpa [#allocation6], 1
    %7157 = vsyncpa [#allocation9], 1
    %7158 = vsyncpa [#allocation12], 1
    %7159 = vsyncpa [#allocation15], 1
    %7160 = vsyncpa [#allocation18], 1
    %7161 = vsyncpa [#allocation21], 1
    %7162 = vsyncpa [#allocation24], 1
    %7163 = vsyncpa [#allocation4], 1

</llo_original>
